<compile_context>
chip_gen: v7x
topology: tpu7x:2x2x1
jax: 0.10.0
libtpu: 0.0.40
codegen_flags: <defaults>
</compile_context>

<pallas_src>
import functools

import numpy as np

import jax
import jax.numpy as jnp
from jax import lax
from jax.experimental import pallas as pl
from jax.experimental.pallas import tpu as pltpu

NEG_SLOPE = 0.01     # F.leaky_relu default
BN_EPS = 1e-5
NEG_BIG = -1e30      # identity for the running max

LANE = 128           # channel padding (lane width)
NTILE = 32           # node rows per output tile (raised from 8 per review)


def _tpu_generation():
    try:
        kind = jax.devices()[0].device_kind.lower()
    except Exception:
        return 0
    for g in (7, 6, 5, 4):
        if f"v{g}" in kind:
            return g
    return 0


_GEN = _tpu_generation()
# ETILE=256 fills the 256-wide MXU on v6e/v7x; v5e keeps the native 128 (tighter vregs).
ETILE = 256 if _GEN in (6, 7) else 128
if _GEN == 7:
    VMEM_LIMIT_BYTES = 48 * 1024 * 1024       # 64 MiB physical on v7x -> keep headroom
elif _GEN in (5, 6):
    VMEM_LIMIT_BYTES = 96 * 1024 * 1024       # 128 MiB physical -> raise well past default
else:
    VMEM_LIMIT_BYTES = 32 * 1024 * 1024       # conservative cross-generation floor


def _round_up(x, m):
    return ((x + m - 1) // m) * m


def _leaky_relu(x):
    return jnp.where(x > 0, x, NEG_SLOPE * x)


def _pad2d(a, shape, fill=0.0):
    out = jnp.full(shape, fill, a.dtype)
    return out.at[:a.shape[0], :a.shape[1]].set(a)


# ----------------------------------------------------------------------------
# Kernel: EdgeConv (per-edge 2-layer MLP) + segment-max aggregation
#         + inference BatchNorm + leaky_relu, fused.
# Grid: (node tiles [parallel], edge-block steps [arbitrary]).
# ----------------------------------------------------------------------------
def edgeconv_bn_kernel(eblk_ref, valid_ref,            # SMEM scalar-prefetch tables
                       edge_ref,                       # [ETILE, 2] int32: col0=dst, col1=src (sorted by dst)
                       x_ref,                          # [Npad, Cpad] resident node features (f32)
                       w1_ref, b1_ref,                 # fused Linear(2*Cin, H): [2*Cpad, Hpad] bf16, [1, Hpad] f32
                       w2_ref, b2_ref,                 # Linear(H, H): [Hpad, Hpad] bf16, [1, Hpad] f32
                       indeg_ref,                      # [NTILE, 1] in-degree of this node tile
                       gamma_ref, beta_ref, mean_ref, var_ref,   # BatchNorm params, each [1, Hpad]
                       out_ref,                        # [NTILE, Hpad]
                       acc_ref,                        # VMEM scratch [NTILE, Hpad] running max
                       *, ntile, npad):
    del eblk_ref                                       # consumed only by the index_maps
    i = pl.program_id(0)
    step = pl.program_id(1)

    @pl.when(step == 0)
    def _init():
        acc_ref[...] = jnp.full(acc_ref.shape, NEG_BIG, acc_ref.dtype)

    # Padded / duplicated edge-block steps are skipped entirely (no wasted matmuls).
    @pl.when(valid_ref[i, step] != 0)
    def _body():
        etile = edge_ref.shape[0]
        cpad = x_ref.shape[1]

        edge = edge_ref[...]                           # [ETILE, 2] int32
        dst = edge[:, 0:1]                             # [ETILE, 1]
        src = edge[:, 1:2]                             # [ETILE, 1]

        # dst one-hot restricted to this node tile; reused below as the scatter mask.
        local_ids = lax.broadcasted_iota(jnp.int32, (etile, ntile), 1) + i * ntile
        in_tile = (local_ids == dst)                   # [ETILE, NTILE] bool
        oh_i = in_tile.astype(jnp.float32)

        # x_i gathered from just this tile's rows of the resident feature table.
        tile_start = pl.multiple_of(i * ntile, ntile)
        x_tile = x_ref[pl.ds(tile_start, ntile), :]    # [NTILE, Cpad]
        x_i = jnp.dot(oh_i, x_tile, preferred_element_type=jnp.float32)      # [ETILE, Cpad]

        # x_j gathered from the full table (src may live in any tile); gather stays f32.
        # TODO(synk): for node tables that approach the VMEM budget, switch this to a
        #             DMA/take gather against a prefetched neighborhood slab.
        node_iota = lax.broadcasted_iota(jnp.int32, (etile, npad), 1)
        oh_j = (node_iota == src).astype(jnp.float32)  # [ETILE, Npad]
        x_j = jnp.dot(oh_j, x_ref[...], preferred_element_type=jnp.float32)  # [ETILE, Cpad]
        x_d = x_j - x_i                                # x_j - x_i (VPU)

        # Per-edge MLP. cat([x_i, x_d]) @ W1 realized as two accumulating dots against the
        # halves of the fused bf16 weight; activations cast to bf16 right before the MXU.
        x_i16 = x_i.astype(w1_ref.dtype)
        x_d16 = x_d.astype(w1_ref.dtype)
        h = (jnp.dot(x_i16, w1_ref[0:cpad, :], preferred_element_type=jnp.float32)
             + jnp.dot(x_d16, w1_ref[cpad:2 * cpad, :], preferred_element_type=jnp.float32)
             + b1_ref[...])
        h = jnp.maximum(h, 0.0)
        msg = (jnp.dot(h.astype(w2_ref.dtype), w2_ref[...],
                       preferred_element_type=jnp.float32)
               + b2_ref[...])                          # [ETILE, Hpad]

        # 2D segment max: unrolled over the NTILE node rows; only [ETILE, Hpad]
        # intermediates ever live (no 3D masked tensor, no vreg spills).
        rows = []
        for n in range(ntile):
            masked = jnp.where(in_tile[:, n:n + 1], msg, NEG_BIG)     # [ETILE, Hpad]
            rows.append(jnp.max(masked, axis=0, keepdims=True))       # [1, Hpad]
        blk_max = jnp.concatenate(rows, axis=0)                       # [NTILE, Hpad]
        acc_ref[...] = jnp.maximum(acc_ref[...], blk_max)

    @pl.when(step == pl.num_programs(1) - 1)
    def _finalize():
        agg = acc_ref[...]
        # Isolated nodes aggregate to 0 — masked by in-degree, not by a sentinel value.
        agg = jnp.where(indeg_ref[...] > 0.0, agg, 0.0)
        inv_std = lax.rsqrt(var_ref[...] + BN_EPS)
        y = (agg - mean_ref[...]) * inv_std * gamma_ref[...] + beta_ref[...]
        out_ref[...] = _leaky_relu(y)


def edgeconv_bn(xp, edge, eblk, valid, indeg, params):
    """xp: [Npad, Cpad] padded node features.  Returns [Npad, Hpad] (128-lane padded)."""
    npad, cpad = xp.shape
    hpad = params["w2"].shape[1]
    n_node_tiles, n_steps = eblk.shape
    assert params["w1"].shape[0] == 2 * cpad
    assert npad % NTILE == 0 and n_node_tiles == npad // NTILE

    full = lambda i, s, eblk, valid: (0, 0)
    by_edge_block = lambda i, s, eblk, valid: (eblk[i, s], 0)
    by_node_tile = lambda i, s, eblk, valid: (i, 0)

    kernel = functools.partial(edgeconv_bn_kernel, ntile=NTILE, npad=npad)
    return pl.pallas_call(
        kernel,
        out_shape=jax.ShapeDtypeStruct((npad, hpad), jnp.float32),
        grid_spec=pltpu.PrefetchScalarGridSpec(
            num_scalar_prefetch=2,
            grid=(n_node_tiles, n_steps),
            in_specs=[
                pl.BlockSpec((ETILE, 2), by_edge_block),     # packed (dst, src), sorted by dst
                pl.BlockSpec((npad, cpad), full),            # node features (resident)
                pl.BlockSpec((2 * cpad, hpad), full),        # fused W1 (bf16)
                pl.BlockSpec((1, hpad), full),               # b1
                pl.BlockSpec((hpad, hpad), full),            # W2 (bf16)
                pl.BlockSpec((1, hpad), full),               # b2
                pl.BlockSpec((NTILE, 1), by_node_tile),      # in-degree
                pl.BlockSpec((1, hpad), full),               # bn gamma
                pl.BlockSpec((1, hpad), full),               # bn beta
                pl.BlockSpec((1, hpad), full),               # bn mean
                pl.BlockSpec((1, hpad), full),               # bn var
            ],
            out_specs=pl.BlockSpec((NTILE, hpad), by_node_tile),
            scratch_shapes=[pltpu.VMEM((NTILE, hpad), jnp.float32)],
        ),
        compiler_params=pltpu.CompilerParams(
            # node tiles are independent (v7x megacore splits them); edge steps reduce into
            # the resident accumulator.
            dimension_semantics=("parallel", "arbitrary"),
            vmem_limit_bytes=VMEM_LIMIT_BYTES,
        ),
    )(eblk, valid, edge, xp,
      params["w1"], params["b1"], params["w2"], params["b2"],
      indeg,
      params["bn_gamma"], params["bn_beta"], params["bn_mean"], params["bn_var"])


# ----------------------------------------------------------------------------
# One-time graph preprocessing (NumPy, shared by all layers): sort edges by dst so each node
# tile's incoming edges occupy a contiguous range of ETILE-sized blocks, and build the
# per-(node-tile, step) edge-block table + validity mask consumed via scalar prefetch.
# ----------------------------------------------------------------------------
def preprocess_graph(src, dst, num_nodes):
    src = np.asarray(src, np.int32)
    dst = np.asarray(dst, np.int32)
    n_edges = int(src.shape[0])
    # >= 2 node tiles so v7x's two TensorCores both get work on the parallel axis.
    npad = max(2 * NTILE, _round_up(num_nodes, NTILE))
    e_pad = max(ETILE, _round_up(max(n_edges, 1), ETILE))
    n_node_tiles = npad // NTILE
    n_edge_blocks = e_pad // ETILE

    order = np.argsort(dst, kind="stable")
    dst_sorted = dst[order]
    src_sorted = src[order]

    edge_p = np.full((e_pad, 2), -1, np.int32)   # sentinel: matches no node
    edge_p[:n_edges, 0] = dst_sorted
    edge_p[:n_edges, 1] = src_sorted

    tile_starts = np.arange(n_node_tiles, dtype=np.int64) * NTILE
    lo = np.searchsorted(dst_sorted, tile_starts, side="left")
    hi = np.searchsorted(dst_sorted, tile_starts + NTILE, side="left")
    first_blk = lo // ETILE
    last_blk = np.maximum(hi - 1, lo) // ETILE
    steps_per_tile = np.where(hi > lo, last_blk - first_blk + 1, 0)
    n_steps = int(max(1, int(steps_per_tile.max())))

    eblk = np.zeros((n_node_tiles, n_steps), np.int32)
    valid = np.zeros((n_node_tiles, n_steps), np.int32)
    for i in range(n_node_tiles):
        for s in range(n_steps):
            if s < int(steps_per_tile[i]):
                eblk[i, s] = min(int(first_blk[i]) + s, n_edge_blocks - 1)
                valid[i, s] = 1
            # else: eblk stays 0, valid stays 0 -> body skipped via pl.when

    indeg = np.bincount(dst, minlength=npad).astype(np.float32).reshape(npad, 1)

    return {
        "edge": jnp.asarray(edge_p),      # [e_pad, 2]  (dst, src)
        "eblk": jnp.asarray(eblk),        # [n_node_tiles, n_steps]
        "valid": jnp.asarray(valid),      # [n_node_tiles, n_steps]
        "indeg": jnp.asarray(indeg),      # [npad, 1]
    }


# ----------------------------------------------------------------------------
# SortAggregation (global_sort_pool) — data-dependent per-graph sort kept in JAX glue.
# ----------------------------------------------------------------------------
def sort_aggregation(x, batch, num_graphs, k):
    # TODO(synk): per-graph top-k argsort has no clean Pallas equivalent; kept in JAX.
    def per_graph(b):
        mask = (batch == b)
        key = jnp.where(mask, x[:, -1], -jnp.inf)
        order = jnp.argsort(-key)              # graph members (desc by last channel) first
        topk = order[:k]
        rows = x[topk] * mask[topk][:, None].astype(x.dtype)
        return rows.reshape(-1)
    return jax.vmap(per_graph)(jnp.arange(num_graphs))


# ----------------------------------------------------------------------------
# Parameter construction (deterministic, synthetic), padded to 128 lanes.
# W1/W2 stored in bf16 for the MXU; biases / BN params stay f32.
# ----------------------------------------------------------------------------
def make_conv_params(key, c_in, h):
    ks = jax.random.split(key, 8)
    cpad = _round_up(c_in, LANE)
    hpad = _round_up(h, LANE)
    s1 = 1.0 / jnp.sqrt(2.0 * c_in)
    s2 = 1.0 / jnp.sqrt(float(h))
    w1a = jax.random.normal(ks[0], (c_in, h), jnp.float32) * s1   # acts on x_i
    w1b = jax.random.normal(ks[1], (c_in, h), jnp.float32) * s1   # acts on x_j - x_i
    w1 = jnp.zeros((2 * cpad, hpad), jnp.float32)
    w1 = w1.at[:c_in, :h].set(w1a).at[cpad:cpad + c_in, :h].set(w1b)
    w2 = _pad2d(jax.random.normal(ks[3], (h, h), jnp.float32) * s2, (hpad, hpad))
    return {
        "w1": w1.astype(jnp.bfloat16),
        "b1": _pad2d(jax.random.normal(ks[2], (1, h), jnp.float32) * 0.01, (1, hpad)),
        "w2": w2.astype(jnp.bfloat16),
        "b2": _pad2d(jax.random.normal(ks[4], (1, h), jnp.float32) * 0.01, (1, hpad)),
        "bn_gamma": _pad2d(1.0 + 0.1 * jax.random.normal(ks[5], (1, h), jnp.float32),
                           (1, hpad), fill=1.0),
        "bn_beta": _pad2d(0.1 * jax.random.normal(ks[6], (1, h), jnp.float32), (1, hpad)),
        "bn_mean": _pad2d(0.1 * jax.random.normal(ks[7], (1, h), jnp.float32), (1, hpad)),
        "bn_var": _pad2d(jnp.ones((1, h), jnp.float32), (1, hpad), fill=1.0),
    }


def make_head_params(key, in_dim, hid, n_out):
    ks = jax.random.split(key, 4)
    return {
        "w_lin": jax.random.normal(ks[0], (in_dim, hid), jnp.float32) / jnp.sqrt(float(in_dim)),
        "b_lin": jax.random.normal(ks[1], (1, hid), jnp.float32) * 0.01,
        "w_out": jax.random.normal(ks[2], (hid, n_out), jnp.float32) / jnp.sqrt(float(hid)),
        "b_out": jax.random.normal(ks[3], (1, n_out), jnp.float32) * 0.01,
    }


# ----------------------------------------------------------------------------
# Full MPGNN forward (eval mode)
# ----------------------------------------------------------------------------
@functools.partial(jax.jit, static_argnames=("num_nodes", "num_graphs", "k", "num_neurons"))
def mpgnn_forward(x, graph, batch, conv_params_list, head_params,
                  *, num_nodes, num_graphs, k, num_neurons):
    npad = graph["indeg"].shape[0]
    cpad = _round_up(x.shape[1], LANE)
    xp = _pad2d(x.astype(jnp.float32), (npad, cpad))

    # EdgeConv + BatchNorm + leaky_relu fused per layer; graph structure tensors are tiny and
    # shared by every layer.
    # TODO(synk): fusing all layers into a single pallas_call (features resident in VMEM)
    #             needs a cross-node-tile sync between layers; kept one call per layer.
    for p in conv_params_list:
        xp = edgeconv_bn(xp, graph["edge"], graph["eblk"], graph["valid"], graph["indeg"], p)

    x_logical = xp[:num_nodes, :num_neurons]                     # strip lane padding
    pooled = sort_aggregation(x_logical, batch, num_graphs, k)   # [num_graphs, k*num_neurons]

    # Dropout is identity in eval mode.  The readout head is tiny; it is left to XLA and
    # fuses with the sort-pool consumer (no separate pallas_call).
    hidden = _leaky_relu(jnp.dot(pooled, head_params["w_lin"]) + head_params["b_lin"])
    return jnp.dot(hidden, head_params["w_out"]) + head_params["b_out"]


if __name__ == "__main__":
    # Module hyper-parameters (small, consistent with __init__)
    num_features = 4      # dataset.num_features
    num_classes = 3       # dataset.num_classes
    num_neurons = 32
    num_layers = 2
    k = 4                 # sort-aggregation k -> first_linear_size = k * num_neurons

    # Graph data: 8 nodes, 2 graphs of 4 nodes each, bidirectional ring within each graph.
    num_nodes = 8
    num_graphs = 2
    key = jax.random.PRNGKey(0)
    k_x, k_p = jax.random.split(key)
    x = jax.random.normal(k_x, (num_nodes, num_features), jnp.float32)
    batch = jnp.array([0, 0, 0, 0, 1, 1, 1, 1], dtype=jnp.int32)

    def ring_edges(offset):
        s, d = [], []
        for i in range(4):
            s += [offset + i, offset + (i + 1) % 4]
            d += [offset + (i + 1) % 4, offset + i]
        return s, d

    s0, d0 = ring_edges(0)
    s1, d1 = ring_edges(4)
    src = np.array(s0 + s1, dtype=np.int32)   # edge_index[0]  (source, x_j)
    dst = np.array(d0 + d1, dtype=np.int32)   # edge_index[1]  (target, x_i; aggregation index)

    graph = preprocess_graph(src, dst, num_nodes)

    # Parameters
    pkeys = jax.random.split(k_p, num_layers + 1)
    conv_params_list = [make_conv_params(pkeys[0], num_features, num_neurons)]
    for i in range(num_layers - 1):
        conv_params_list.append(make_conv_params(pkeys[1 + i], num_neurons, num_neurons))
    head_params = make_head_params(pkeys[-1], k * num_neurons, num_neurons // 2, num_classes)

    out = mpgnn_forward(x, graph, batch, conv_params_list, head_params,
                        num_nodes=num_nodes, num_graphs=num_graphs,
                        k=k, num_neurons=num_neurons)
    out = jax.block_until_ready(out)
    assert out.shape == (num_graphs, num_classes), out.shape
    assert bool(jnp.all(jnp.isfinite(out)))
    print("KERNEL_OK")
</pallas_src>

<mosaic_0001>
module attributes {stable_mosaic.version = 11 : i64} {
  func.func @edgeconv_bn_kernel(%arg0: i32, %arg1: i32, %arg2: memref<2x1xi32, #tpu.memory_space<smem>>, %arg3: memref<2x1xi32, #tpu.memory_space<smem>>, %arg4: memref<128x2xi32, #tpu.memory_space<vmem>>, %arg5: memref<64x128xf32, #tpu.memory_space<vmem>>, %arg6: memref<256x128xbf16, #tpu.memory_space<vmem>>, %arg7: memref<1x128xf32, #tpu.memory_space<vmem>>, %arg8: memref<128x128xbf16, #tpu.memory_space<vmem>>, %arg9: memref<1x128xf32, #tpu.memory_space<vmem>>, %arg10: memref<32x1xf32, #tpu.memory_space<vmem>>, %arg11: memref<1x128xf32, #tpu.memory_space<vmem>>, %arg12: memref<1x128xf32, #tpu.memory_space<vmem>>, %arg13: memref<1x128xf32, #tpu.memory_space<vmem>>, %arg14: memref<1x128xf32, #tpu.memory_space<vmem>>, %arg15: memref<32x128xf32, #tpu.memory_space<vmem>>, %arg16: memref<32x128xf32, #tpu.memory_space<vmem>>) attributes {dimension_semantics = [#tpu.dimension_semantics<parallel>, #tpu.dimension_semantics<arbitrary>], iteration_bounds = array<i64: 2, 1>, scalar_prefetch = 2 : i64, scratch_operands = 1 : i64, tpu.core_type = #tpu.core_type<tc>, window_params = [{transform_indices = @transform_0, window_bounds = array<i64: 128, 2>}, {pipeline_mode = #tpu.pipeline_mode<synchronous>, transform_indices = @transform_1, window_bounds = array<i64: 64, 128>}, {pipeline_mode = #tpu.pipeline_mode<synchronous>, transform_indices = @transform_2, window_bounds = array<i64: 256, 128>}, {pipeline_mode = #tpu.pipeline_mode<synchronous>, transform_indices = @transform_3, window_bounds = array<i64: 1, 128>}, {pipeline_mode = #tpu.pipeline_mode<synchronous>, transform_indices = @transform_4, window_bounds = array<i64: 128, 128>}, {pipeline_mode = #tpu.pipeline_mode<synchronous>, transform_indices = @transform_5, window_bounds = array<i64: 1, 128>}, {transform_indices = @transform_6, window_bounds = array<i64: 32, 1>}, {pipeline_mode = #tpu.pipeline_mode<synchronous>, transform_indices = @transform_7, window_bounds = array<i64: 1, 128>}, {pipeline_mode = #tpu.pipeline_mode<synchronous>, transform_indices = @transform_8, window_bounds = array<i64: 1, 128>}, {pipeline_mode = #tpu.pipeline_mode<synchronous>, transform_indices = @transform_9, window_bounds = array<i64: 1, 128>}, {pipeline_mode = #tpu.pipeline_mode<synchronous>, transform_indices = @transform_10, window_bounds = array<i64: 1, 128>}, {transform_indices = @transform_11, window_bounds = array<i64: 32, 128>}]} {
    %c0_i32 = arith.constant 0 : i32
    %0 = arith.cmpi eq, %arg1, %c0_i32 : i32
    %1 = arith.extui %0 : i1 to i32
    %c0_i32_0 = arith.constant 0 : i32
    %2 = arith.cmpi ne, %1, %c0_i32_0 : i32
    scf.if %2 {
      %cst = arith.constant -1.000000e+30 : f32
      %12 = vector.broadcast %cst : f32 to vector<32x128xf32>
      %c0 = arith.constant 0 : index
      %c0_5 = arith.constant 0 : index
      %13 = vector.load %arg16[%c0, %c0_5] : memref<32x128xf32, #tpu.memory_space<vmem>>, vector<32x128xf32>
      tpu.vector_store %arg16[%c0, %c0_5], %12 {strides = array<i32>} : memref<32x128xf32, #tpu.memory_space<vmem>>, vector<32x128xf32>,
    } else {
    }
    %3 = arith.index_cast %arg0 : i32 to index
    %4 = arith.index_cast %arg1 : i32 to index
    %5 = memref.load %arg3[%3, %4] : memref<2x1xi32, #tpu.memory_space<smem>>
    %c0_i32_1 = arith.constant 0 : i32
    %6 = arith.cmpi ne, %5, %c0_i32_1 : i32
    %7 = arith.extui %6 : i1 to i32
    %c0_i32_2 = arith.constant 0 : i32
    %8 = arith.cmpi ne, %7, %c0_i32_2 : i32
    scf.if %8 {
      %c0 = arith.constant 0 : index
      %c0_5 = arith.constant 0 : index
      %12 = vector.load %arg4[%c0, %c0_5] : memref<128x2xi32, #tpu.memory_space<vmem>>, vector<128x2xi32>
      %13 = vector.extract_strided_slice %12 {offsets = [0, 0], sizes = [128, 1], strides = [1, 1]} : vector<128x2xi32> to vector<128x1xi32>
      %14 = vector.extract_strided_slice %12 {offsets = [0, 1], sizes = [128, 1], strides = [1, 1]} : vector<128x2xi32> to vector<128x1xi32>
      %15 = tpu.iota {dimensions = array<i32: 1>} : vector<128x32xi32>
      %c32_i32 = arith.constant 32 : i32
      %16 = arith.muli %arg0, %c32_i32 : i32
      %17 = vector.broadcast %16 : i32 to vector<128x32xi32>
      %18 = arith.addi %15, %17 : vector<128x32xi32>
      %19 = vector.broadcast %13 : vector<128x1xi32> to vector<128x32xi32>
      %20 = arith.cmpi eq, %18, %19 : vector<128x32xi32>
      %21 = arith.extui %20 : vector<128x32xi1> to vector<128x32xi32>
      %22 = arith.sitofp %21 : vector<128x32xi32> to vector<128x32xf32>
      %c32_i32_6 = arith.constant 32 : i32
      %23 = arith.muli %arg0, %c32_i32_6 : i32
      %24 = tpu.assume_multiple %23, 32 : i32
      %25 = arith.index_cast %24 : i32 to index
      %c0_7 = arith.constant 0 : index
      %26 = vector.load %arg5[%25, %c0_7] : memref<64x128xf32, #tpu.memory_space<vmem>>, vector<32x128xf32>
      %cst = arith.constant dense<0.000000e+00> : vector<128x128xf32>
      %27 = tpu.matmul %22, %26, %cst {dimension_numbers = #tpu.dot_dimension_numbers<[1], [0], [0], [1], [0, 0, 1, 1], [], []>} : vector<128x32xf32>, vector<32x128xf32>, vector<128x128xf32> -> vector<128x128xf32>
      %28 = tpu.iota {dimensions = array<i32: 1>} : vector<128x64xi32>
      %29 = vector.broadcast %14 : vector<128x1xi32> to vector<128x64xi32>
      %30 = arith.cmpi eq, %28, %29 : vector<128x64xi32>
      %31 = arith.extui %30 : vector<128x64xi1> to vector<128x64xi32>
      %32 = arith.sitofp %31 : vector<128x64xi32> to vector<128x64xf32>
      %c0_8 = arith.constant 0 : index
      %c0_9 = arith.constant 0 : index
      %33 = vector.load %arg5[%c0_8, %c0_9] : memref<64x128xf32, #tpu.memory_space<vmem>>, vector<64x128xf32>
      %cst_10 = arith.constant dense<0.000000e+00> : vector<128x128xf32>
      %34 = tpu.matmul %32, %33, %cst_10 {dimension_numbers = #tpu.dot_dimension_numbers<[1], [0], [0], [1], [0, 0, 1, 1], [], []>} : vector<128x64xf32>, vector<64x128xf32>, vector<128x128xf32> -> vector<128x128xf32>
      %35 = arith.subf %34, %27 : vector<128x128xf32>
      %36 = arith.truncf %27 : vector<128x128xf32> to vector<128x128xbf16>
      %37 = arith.truncf %35 : vector<128x128xf32> to vector<128x128xbf16>
      %c0_11 = arith.constant 0 : index
      %c0_12 = arith.constant 0 : index
      %38 = vector.load %arg6[%c0_11, %c0_12] : memref<256x128xbf16, #tpu.memory_space<vmem>>, vector<128x128xbf16>
      %cst_13 = arith.constant dense<0.000000e+00> : vector<128x128xf32>
      %39 = tpu.matmul %36, %38, %cst_13 {dimension_numbers = #tpu.dot_dimension_numbers<[1], [0], [0], [1], [0, 0, 1, 1], [], []>} : vector<128x128xbf16>, vector<128x128xbf16>, vector<128x128xf32> -> vector<128x128xf32>
      %c128 = arith.constant 128 : index
      %c0_14 = arith.constant 0 : index
      %40 = vector.load %arg6[%c128, %c0_14] : memref<256x128xbf16, #tpu.memory_space<vmem>>, vector<128x128xbf16>
      %cst_15 = arith.constant dense<0.000000e+00> : vector<128x128xf32>
      %41 = tpu.matmul %37, %40, %cst_15 {dimension_numbers = #tpu.dot_dimension_numbers<[1], [0], [0], [1], [0, 0, 1, 1], [], []>} : vector<128x128xbf16>, vector<128x128xbf16>, vector<128x128xf32> -> vector<128x128xf32>
      %42 = arith.addf %39, %41 : vector<128x128xf32>
      %c0_16 = arith.constant 0 : index
      %c0_17 = arith.constant 0 : index
      %43 = vector.load %arg7[%c0_16, %c0_17] : memref<1x128xf32, #tpu.memory_space<vmem>>, vector<1x128xf32>
      %44 = vector.broadcast %43 : vector<1x128xf32> to vector<128x128xf32>
      %45 = arith.addf %42, %44 : vector<128x128xf32>
      %cst_18 = arith.constant 0.000000e+00 : f32
      %46 = vector.broadcast %cst_18 : f32 to vector<128x128xf32>
      %47 = arith.maximumf %45, %46 : vector<128x128xf32>
      %48 = arith.truncf %47 : vector<128x128xf32> to vector<128x128xbf16>
      %c0_19 = arith.constant 0 : index
      %c0_20 = arith.constant 0 : index
      %49 = vector.load %arg8[%c0_19, %c0_20] : memref<128x128xbf16, #tpu.memory_space<vmem>>, vector<128x128xbf16>
      %cst_21 = arith.constant dense<0.000000e+00> : vector<128x128xf32>
      %50 = tpu.matmul %48, %49, %cst_21 {dimension_numbers = #tpu.dot_dimension_numbers<[1], [0], [0], [1], [0, 0, 1, 1], [], []>} : vector<128x128xbf16>, vector<128x128xbf16>, vector<128x128xf32> -> vector<128x128xf32>
      %c0_22 = arith.constant 0 : index
      %c0_23 = arith.constant 0 : index
      %51 = vector.load %arg9[%c0_22, %c0_23] : memref<1x128xf32, #tpu.memory_space<vmem>>, vector<1x128xf32>
      %52 = vector.broadcast %51 : vector<1x128xf32> to vector<128x128xf32>
      %53 = arith.addf %50, %52 : vector<128x128xf32>
      %54 = vector.extract_strided_slice %20 {offsets = [0, 0], sizes = [128, 1], strides = [1, 1]} : vector<128x32xi1> to vector<128x1xi1>
      %cst_24 = arith.constant -1.000000e+30 : f32
      %55 = vector.shape_cast %54 : vector<128x1xi1> to vector<128x1xi1>
      %56 = vector.broadcast %55 : vector<128x1xi1> to vector<128x128xi1>
      %57 = vector.broadcast %cst_24 : f32 to vector<128x128xf32>
      %58 = arith.select %56, %53, %57 : vector<128x128xi1>, vector<128x128xf32>
      %cst_25 = arith.constant dense<0xFF800000> : vector<128xf32>
      %59 = vector.multi_reduction <maximumf>, %58, %cst_25 [0] : vector<128x128xf32> to vector<128xf32>
      %60 = vector.shape_cast %59 : vector<128xf32> to vector<1x128xf32>
      %61 = vector.extract_strided_slice %20 {offsets = [0, 1], sizes = [128, 1], strides = [1, 1]} : vector<128x32xi1> to vector<128x1xi1>
      %cst_26 = arith.constant -1.000000e+30 : f32
      %62 = vector.shape_cast %61 : vector<128x1xi1> to vector<128x1xi1>
      %63 = vector.broadcast %62 : vector<128x1xi1> to vector<128x128xi1>
      %64 = vector.broadcast %cst_26 : f32 to vector<128x128xf32>
      %65 = arith.select %63, %53, %64 : vector<128x128xi1>, vector<128x128xf32>
      %cst_27 = arith.constant dense<0xFF800000> : vector<128xf32>
      %66 = vector.multi_reduction <maximumf>, %65, %cst_27 [0] : vector<128x128xf32> to vector<128xf32>
      %67 = vector.shape_cast %66 : vector<128xf32> to vector<1x128xf32>
      %68 = vector.extract_strided_slice %20 {offsets = [0, 2], sizes = [128, 1], strides = [1, 1]} : vector<128x32xi1> to vector<128x1xi1>
      %cst_28 = arith.constant -1.000000e+30 : f32
      %69 = vector.shape_cast %68 : vector<128x1xi1> to vector<128x1xi1>
      %70 = vector.broadcast %69 : vector<128x1xi1> to vector<128x128xi1>
      %71 = vector.broadcast %cst_28 : f32 to vector<128x128xf32>
      %72 = arith.select %70, %53, %71 : vector<128x128xi1>, vector<128x128xf32>
      %cst_29 = arith.constant dense<0xFF800000> : vector<128xf32>
      %73 = vector.multi_reduction <maximumf>, %72, %cst_29 [0] : vector<128x128xf32> to vector<128xf32>
      %74 = vector.shape_cast %73 : vector<128xf32> to vector<1x128xf32>
      %75 = vector.extract_strided_slice %20 {offsets = [0, 3], sizes = [128, 1], strides = [1, 1]} : vector<128x32xi1> to vector<128x1xi1>
      %cst_30 = arith.constant -1.000000e+30 : f32
      %76 = vector.shape_cast %75 : vector<128x1xi1> to vector<128x1xi1>
      %77 = vector.broadcast %76 : vector<128x1xi1> to vector<128x128xi1>
      %78 = vector.broadcast %cst_30 : f32 to vector<128x128xf32>
      %79 = arith.select %77, %53, %78 : vector<128x128xi1>, vector<128x128xf32>
      %cst_31 = arith.constant dense<0xFF800000> : vector<128xf32>
      %80 = vector.multi_reduction <maximumf>, %79, %cst_31 [0] : vector<128x128xf32> to vector<128xf32>
      %81 = vector.shape_cast %80 : vector<128xf32> to vector<1x128xf32>
      %82 = vector.extract_strided_slice %20 {offsets = [0, 4], sizes = [128, 1], strides = [1, 1]} : vector<128x32xi1> to vector<128x1xi1>
      %cst_32 = arith.constant -1.000000e+30 : f32
      %83 = vector.shape_cast %82 : vector<128x1xi1> to vector<128x1xi1>
      %84 = vector.broadcast %83 : vector<128x1xi1> to vector<128x128xi1>
      %85 = vector.broadcast %cst_32 : f32 to vector<128x128xf32>
      %86 = arith.select %84, %53, %85 : vector<128x128xi1>, vector<128x128xf32>
      %cst_33 = arith.constant dense<0xFF800000> : vector<128xf32>
      %87 = vector.multi_reduction <maximumf>, %86, %cst_33 [0] : vector<128x128xf32> to vector<128xf32>
      %88 = vector.shape_cast %87 : vector<128xf32> to vector<1x128xf32>
      %89 = vector.extract_strided_slice %20 {offsets = [0, 5], sizes = [128, 1], strides = [1, 1]} : vector<128x32xi1> to vector<128x1xi1>
      %cst_34 = arith.constant -1.000000e+30 : f32
      %90 = vector.shape_cast %89 : vector<128x1xi1> to vector<128x1xi1>
      %91 = vector.broadcast %90 : vector<128x1xi1> to vector<128x128xi1>
      %92 = vector.broadcast %cst_34 : f32 to vector<128x128xf32>
      %93 = arith.select %91, %53, %92 : vector<128x128xi1>, vector<128x128xf32>
      %cst_35 = arith.constant dense<0xFF800000> : vector<128xf32>
      %94 = vector.multi_reduction <maximumf>, %93, %cst_35 [0] : vector<128x128xf32> to vector<128xf32>
      %95 = vector.shape_cast %94 : vector<128xf32> to vector<1x128xf32>
      %96 = vector.extract_strided_slice %20 {offsets = [0, 6], sizes = [128, 1], strides = [1, 1]} : vector<128x32xi1> to vector<128x1xi1>
      %cst_36 = arith.constant -1.000000e+30 : f32
      %97 = vector.shape_cast %96 : vector<128x1xi1> to vector<128x1xi1>
      %98 = vector.broadcast %97 : vector<128x1xi1> to vector<128x128xi1>
      %99 = vector.broadcast %cst_36 : f32 to vector<128x128xf32>
      %100 = arith.select %98, %53, %99 : vector<128x128xi1>, vector<128x128xf32>
      %cst_37 = arith.constant dense<0xFF800000> : vector<128xf32>
      %101 = vector.multi_reduction <maximumf>, %100, %cst_37 [0] : vector<128x128xf32> to vector<128xf32>
      %102 = vector.shape_cast %101 : vector<128xf32> to vector<1x128xf32>
      %103 = vector.extract_strided_slice %20 {offsets = [0, 7], sizes = [128, 1], strides = [1, 1]} : vector<128x32xi1> to vector<128x1xi1>
      %cst_38 = arith.constant -1.000000e+30 : f32
      %104 = vector.shape_cast %103 : vector<128x1xi1> to vector<128x1xi1>
      %105 = vector.broadcast %104 : vector<128x1xi1> to vector<128x128xi1>
      %106 = vector.broadcast %cst_38 : f32 to vector<128x128xf32>
      %107 = arith.select %105, %53, %106 : vector<128x128xi1>, vector<128x128xf32>
      %cst_39 = arith.constant dense<0xFF800000> : vector<128xf32>
      %108 = vector.multi_reduction <maximumf>, %107, %cst_39 [0] : vector<128x128xf32> to vector<128xf32>
      %109 = vector.shape_cast %108 : vector<128xf32> to vector<1x128xf32>
      %110 = vector.extract_strided_slice %20 {offsets = [0, 8], sizes = [128, 1], strides = [1, 1]} : vector<128x32xi1> to vector<128x1xi1>
      %cst_40 = arith.constant -1.000000e+30 : f32
      %111 = vector.shape_cast %110 : vector<128x1xi1> to vector<128x1xi1>
      %112 = vector.broadcast %111 : vector<128x1xi1> to vector<128x128xi1>
      %113 = vector.broadcast %cst_40 : f32 to vector<128x128xf32>
      %114 = arith.select %112, %53, %113 : vector<128x128xi1>, vector<128x128xf32>
      %cst_41 = arith.constant dense<0xFF800000> : vector<128xf32>
      %115 = vector.multi_reduction <maximumf>, %114, %cst_41 [0] : vector<128x128xf32> to vector<128xf32>
      %116 = vector.shape_cast %115 : vector<128xf32> to vector<1x128xf32>
      %117 = vector.extract_strided_slice %20 {offsets = [0, 9], sizes = [128, 1], strides = [1, 1]} : vector<128x32xi1> to vector<128x1xi1>
      %cst_42 = arith.constant -1.000000e+30 : f32
      %118 = vector.shape_cast %117 : vector<128x1xi1> to vector<128x1xi1>
      %119 = vector.broadcast %118 : vector<128x1xi1> to vector<128x128xi1>
      %120 = vector.broadcast %cst_42 : f32 to vector<128x128xf32>
      %121 = arith.select %119, %53, %120 : vector<128x128xi1>, vector<128x128xf32>
      %cst_43 = arith.constant dense<0xFF800000> : vector<128xf32>
      %122 = vector.multi_reduction <maximumf>, %121, %cst_43 [0] : vector<128x128xf32> to vector<128xf32>
      %123 = vector.shape_cast %122 : vector<128xf32> to vector<1x128xf32>
      %124 = vector.extract_strided_slice %20 {offsets = [0, 10], sizes = [128, 1], strides = [1, 1]} : vector<128x32xi1> to vector<128x1xi1>
      %cst_44 = arith.constant -1.000000e+30 : f32
      %125 = vector.shape_cast %124 : vector<128x1xi1> to vector<128x1xi1>
      %126 = vector.broadcast %125 : vector<128x1xi1> to vector<128x128xi1>
      %127 = vector.broadcast %cst_44 : f32 to vector<128x128xf32>
      %128 = arith.select %126, %53, %127 : vector<128x128xi1>, vector<128x128xf32>
      %cst_45 = arith.constant dense<0xFF800000> : vector<128xf32>
      %129 = vector.multi_reduction <maximumf>, %128, %cst_45 [0] : vector<128x128xf32> to vector<128xf32>
      %130 = vector.shape_cast %129 : vector<128xf32> to vector<1x128xf32>
      %131 = vector.extract_strided_slice %20 {offsets = [0, 11], sizes = [128, 1], strides = [1, 1]} : vector<128x32xi1> to vector<128x1xi1>
      %cst_46 = arith.constant -1.000000e+30 : f32
      %132 = vector.shape_cast %131 : vector<128x1xi1> to vector<128x1xi1>
      %133 = vector.broadcast %132 : vector<128x1xi1> to vector<128x128xi1>
      %134 = vector.broadcast %cst_46 : f32 to vector<128x128xf32>
      %135 = arith.select %133, %53, %134 : vector<128x128xi1>, vector<128x128xf32>
      %cst_47 = arith.constant dense<0xFF800000> : vector<128xf32>
      %136 = vector.multi_reduction <maximumf>, %135, %cst_47 [0] : vector<128x128xf32> to vector<128xf32>
      %137 = vector.shape_cast %136 : vector<128xf32> to vector<1x128xf32>
      %138 = vector.extract_strided_slice %20 {offsets = [0, 12], sizes = [128, 1], strides = [1, 1]} : vector<128x32xi1> to vector<128x1xi1>
      %cst_48 = arith.constant -1.000000e+30 : f32
      %139 = vector.shape_cast %138 : vector<128x1xi1> to vector<128x1xi1>
      %140 = vector.broadcast %139 : vector<128x1xi1> to vector<128x128xi1>
      %141 = vector.broadcast %cst_48 : f32 to vector<128x128xf32>
      %142 = arith.select %140, %53, %141 : vector<128x128xi1>, vector<128x128xf32>
      %cst_49 = arith.constant dense<0xFF800000> : vector<128xf32>
      %143 = vector.multi_reduction <maximumf>, %142, %cst_49 [0] : vector<128x128xf32> to vector<128xf32>
      %144 = vector.shape_cast %143 : vector<128xf32> to vector<1x128xf32>
      %145 = vector.extract_strided_slice %20 {offsets = [0, 13], sizes = [128, 1], strides = [1, 1]} : vector<128x32xi1> to vector<128x1xi1>
      %cst_50 = arith.constant -1.000000e+30 : f32
      %146 = vector.shape_cast %145 : vector<128x1xi1> to vector<128x1xi1>
      %147 = vector.broadcast %146 : vector<128x1xi1> to vector<128x128xi1>
      %148 = vector.broadcast %cst_50 : f32 to vector<128x128xf32>
      %149 = arith.select %147, %53, %148 : vector<128x128xi1>, vector<128x128xf32>
      %cst_51 = arith.constant dense<0xFF800000> : vector<128xf32>
      %150 = vector.multi_reduction <maximumf>, %149, %cst_51 [0] : vector<128x128xf32> to vector<128xf32>
      %151 = vector.shape_cast %150 : vector<128xf32> to vector<1x128xf32>
      %152 = vector.extract_strided_slice %20 {offsets = [0, 14], sizes = [128, 1], strides = [1, 1]} : vector<128x32xi1> to vector<128x1xi1>
      %cst_52 = arith.constant -1.000000e+30 : f32
      %153 = vector.shape_cast %152 : vector<128x1xi1> to vector<128x1xi1>
      %154 = vector.broadcast %153 : vector<128x1xi1> to vector<128x128xi1>
      %155 = vector.broadcast %cst_52 : f32 to vector<128x128xf32>
      %156 = arith.select %154, %53, %155 : vector<128x128xi1>, vector<128x128xf32>
      %cst_53 = arith.constant dense<0xFF800000> : vector<128xf32>
      %157 = vector.multi_reduction <maximumf>, %156, %cst_53 [0] : vector<128x128xf32> to vector<128xf32>
      %158 = vector.shape_cast %157 : vector<128xf32> to vector<1x128xf32>
      %159 = vector.extract_strided_slice %20 {offsets = [0, 15], sizes = [128, 1], strides = [1, 1]} : vector<128x32xi1> to vector<128x1xi1>
      %cst_54 = arith.constant -1.000000e+30 : f32
      %160 = vector.shape_cast %159 : vector<128x1xi1> to vector<128x1xi1>
      %161 = vector.broadcast %160 : vector<128x1xi1> to vector<128x128xi1>
      %162 = vector.broadcast %cst_54 : f32 to vector<128x128xf32>
      %163 = arith.select %161, %53, %162 : vector<128x128xi1>, vector<128x128xf32>
      %cst_55 = arith.constant dense<0xFF800000> : vector<128xf32>
      %164 = vector.multi_reduction <maximumf>, %163, %cst_55 [0] : vector<128x128xf32> to vector<128xf32>
      %165 = vector.shape_cast %164 : vector<128xf32> to vector<1x128xf32>
      %166 = vector.extract_strided_slice %20 {offsets = [0, 16], sizes = [128, 1], strides = [1, 1]} : vector<128x32xi1> to vector<128x1xi1>
      %cst_56 = arith.constant -1.000000e+30 : f32
      %167 = vector.shape_cast %166 : vector<128x1xi1> to vector<128x1xi1>
      %168 = vector.broadcast %167 : vector<128x1xi1> to vector<128x128xi1>
      %169 = vector.broadcast %cst_56 : f32 to vector<128x128xf32>
      %170 = arith.select %168, %53, %169 : vector<128x128xi1>, vector<128x128xf32>
      %cst_57 = arith.constant dense<0xFF800000> : vector<128xf32>
      %171 = vector.multi_reduction <maximumf>, %170, %cst_57 [0] : vector<128x128xf32> to vector<128xf32>
      %172 = vector.shape_cast %171 : vector<128xf32> to vector<1x128xf32>
      %173 = vector.extract_strided_slice %20 {offsets = [0, 17], sizes = [128, 1], strides = [1, 1]} : vector<128x32xi1> to vector<128x1xi1>
      %cst_58 = arith.constant -1.000000e+30 : f32
      %174 = vector.shape_cast %173 : vector<128x1xi1> to vector<128x1xi1>
      %175 = vector.broadcast %174 : vector<128x1xi1> to vector<128x128xi1>
      %176 = vector.broadcast %cst_58 : f32 to vector<128x128xf32>
      %177 = arith.select %175, %53, %176 : vector<128x128xi1>, vector<128x128xf32>
      %cst_59 = arith.constant dense<0xFF800000> : vector<128xf32>
      %178 = vector.multi_reduction <maximumf>, %177, %cst_59 [0] : vector<128x128xf32> to vector<128xf32>
      %179 = vector.shape_cast %178 : vector<128xf32> to vector<1x128xf32>
      %180 = vector.extract_strided_slice %20 {offsets = [0, 18], sizes = [128, 1], strides = [1, 1]} : vector<128x32xi1> to vector<128x1xi1>
      %cst_60 = arith.constant -1.000000e+30 : f32
      %181 = vector.shape_cast %180 : vector<128x1xi1> to vector<128x1xi1>
      %182 = vector.broadcast %181 : vector<128x1xi1> to vector<128x128xi1>
      %183 = vector.broadcast %cst_60 : f32 to vector<128x128xf32>
      %184 = arith.select %182, %53, %183 : vector<128x128xi1>, vector<128x128xf32>
      %cst_61 = arith.constant dense<0xFF800000> : vector<128xf32>
      %185 = vector.multi_reduction <maximumf>, %184, %cst_61 [0] : vector<128x128xf32> to vector<128xf32>
      %186 = vector.shape_cast %185 : vector<128xf32> to vector<1x128xf32>
      %187 = vector.extract_strided_slice %20 {offsets = [0, 19], sizes = [128, 1], strides = [1, 1]} : vector<128x32xi1> to vector<128x1xi1>
      %cst_62 = arith.constant -1.000000e+30 : f32
      %188 = vector.shape_cast %187 : vector<128x1xi1> to vector<128x1xi1>
      %189 = vector.broadcast %188 : vector<128x1xi1> to vector<128x128xi1>
      %190 = vector.broadcast %cst_62 : f32 to vector<128x128xf32>
      %191 = arith.select %189, %53, %190 : vector<128x128xi1>, vector<128x128xf32>
      %cst_63 = arith.constant dense<0xFF800000> : vector<128xf32>
      %192 = vector.multi_reduction <maximumf>, %191, %cst_63 [0] : vector<128x128xf32> to vector<128xf32>
      %193 = vector.shape_cast %192 : vector<128xf32> to vector<1x128xf32>
      %194 = vector.extract_strided_slice %20 {offsets = [0, 20], sizes = [128, 1], strides = [1, 1]} : vector<128x32xi1> to vector<128x1xi1>
      %cst_64 = arith.constant -1.000000e+30 : f32
      %195 = vector.shape_cast %194 : vector<128x1xi1> to vector<128x1xi1>
      %196 = vector.broadcast %195 : vector<128x1xi1> to vector<128x128xi1>
      %197 = vector.broadcast %cst_64 : f32 to vector<128x128xf32>
      %198 = arith.select %196, %53, %197 : vector<128x128xi1>, vector<128x128xf32>
      %cst_65 = arith.constant dense<0xFF800000> : vector<128xf32>
      %199 = vector.multi_reduction <maximumf>, %198, %cst_65 [0] : vector<128x128xf32> to vector<128xf32>
      %200 = vector.shape_cast %199 : vector<128xf32> to vector<1x128xf32>
      %201 = vector.extract_strided_slice %20 {offsets = [0, 21], sizes = [128, 1], strides = [1, 1]} : vector<128x32xi1> to vector<128x1xi1>
      %cst_66 = arith.constant -1.000000e+30 : f32
      %202 = vector.shape_cast %201 : vector<128x1xi1> to vector<128x1xi1>
      %203 = vector.broadcast %202 : vector<128x1xi1> to vector<128x128xi1>
      %204 = vector.broadcast %cst_66 : f32 to vector<128x128xf32>
      %205 = arith.select %203, %53, %204 : vector<128x128xi1>, vector<128x128xf32>
      %cst_67 = arith.constant dense<0xFF800000> : vector<128xf32>
      %206 = vector.multi_reduction <maximumf>, %205, %cst_67 [0] : vector<128x128xf32> to vector<128xf32>
      %207 = vector.shape_cast %206 : vector<128xf32> to vector<1x128xf32>
      %208 = vector.extract_strided_slice %20 {offsets = [0, 22], sizes = [128, 1], strides = [1, 1]} : vector<128x32xi1> to vector<128x1xi1>
      %cst_68 = arith.constant -1.000000e+30 : f32
      %209 = vector.shape_cast %208 : vector<128x1xi1> to vector<128x1xi1>
      %210 = vector.broadcast %209 : vector<128x1xi1> to vector<128x128xi1>
      %211 = vector.broadcast %cst_68 : f32 to vector<128x128xf32>
      %212 = arith.select %210, %53, %211 : vector<128x128xi1>, vector<128x128xf32>
      %cst_69 = arith.constant dense<0xFF800000> : vector<128xf32>
      %213 = vector.multi_reduction <maximumf>, %212, %cst_69 [0] : vector<128x128xf32> to vector<128xf32>
      %214 = vector.shape_cast %213 : vector<128xf32> to vector<1x128xf32>
      %215 = vector.extract_strided_slice %20 {offsets = [0, 23], sizes = [128, 1], strides = [1, 1]} : vector<128x32xi1> to vector<128x1xi1>
      %cst_70 = arith.constant -1.000000e+30 : f32
      %216 = vector.shape_cast %215 : vector<128x1xi1> to vector<128x1xi1>
      %217 = vector.broadcast %216 : vector<128x1xi1> to vector<128x128xi1>
      %218 = vector.broadcast %cst_70 : f32 to vector<128x128xf32>
      %219 = arith.select %217, %53, %218 : vector<128x128xi1>, vector<128x128xf32>
      %cst_71 = arith.constant dense<0xFF800000> : vector<128xf32>
      %220 = vector.multi_reduction <maximumf>, %219, %cst_71 [0] : vector<128x128xf32> to vector<128xf32>
      %221 = vector.shape_cast %220 : vector<128xf32> to vector<1x128xf32>
      %222 = vector.extract_strided_slice %20 {offsets = [0, 24], sizes = [128, 1], strides = [1, 1]} : vector<128x32xi1> to vector<128x1xi1>
      %cst_72 = arith.constant -1.000000e+30 : f32
      %223 = vector.shape_cast %222 : vector<128x1xi1> to vector<128x1xi1>
      %224 = vector.broadcast %223 : vector<128x1xi1> to vector<128x128xi1>
      %225 = vector.broadcast %cst_72 : f32 to vector<128x128xf32>
      %226 = arith.select %224, %53, %225 : vector<128x128xi1>, vector<128x128xf32>
      %cst_73 = arith.constant dense<0xFF800000> : vector<128xf32>
      %227 = vector.multi_reduction <maximumf>, %226, %cst_73 [0] : vector<128x128xf32> to vector<128xf32>
      %228 = vector.shape_cast %227 : vector<128xf32> to vector<1x128xf32>
      %229 = vector.extract_strided_slice %20 {offsets = [0, 25], sizes = [128, 1], strides = [1, 1]} : vector<128x32xi1> to vector<128x1xi1>
      %cst_74 = arith.constant -1.000000e+30 : f32
      %230 = vector.shape_cast %229 : vector<128x1xi1> to vector<128x1xi1>
      %231 = vector.broadcast %230 : vector<128x1xi1> to vector<128x128xi1>
      %232 = vector.broadcast %cst_74 : f32 to vector<128x128xf32>
      %233 = arith.select %231, %53, %232 : vector<128x128xi1>, vector<128x128xf32>
      %cst_75 = arith.constant dense<0xFF800000> : vector<128xf32>
      %234 = vector.multi_reduction <maximumf>, %233, %cst_75 [0] : vector<128x128xf32> to vector<128xf32>
      %235 = vector.shape_cast %234 : vector<128xf32> to vector<1x128xf32>
      %236 = vector.extract_strided_slice %20 {offsets = [0, 26], sizes = [128, 1], strides = [1, 1]} : vector<128x32xi1> to vector<128x1xi1>
      %cst_76 = arith.constant -1.000000e+30 : f32
      %237 = vector.shape_cast %236 : vector<128x1xi1> to vector<128x1xi1>
      %238 = vector.broadcast %237 : vector<128x1xi1> to vector<128x128xi1>
      %239 = vector.broadcast %cst_76 : f32 to vector<128x128xf32>
      %240 = arith.select %238, %53, %239 : vector<128x128xi1>, vector<128x128xf32>
      %cst_77 = arith.constant dense<0xFF800000> : vector<128xf32>
      %241 = vector.multi_reduction <maximumf>, %240, %cst_77 [0] : vector<128x128xf32> to vector<128xf32>
      %242 = vector.shape_cast %241 : vector<128xf32> to vector<1x128xf32>
      %243 = vector.extract_strided_slice %20 {offsets = [0, 27], sizes = [128, 1], strides = [1, 1]} : vector<128x32xi1> to vector<128x1xi1>
      %cst_78 = arith.constant -1.000000e+30 : f32
      %244 = vector.shape_cast %243 : vector<128x1xi1> to vector<128x1xi1>
      %245 = vector.broadcast %244 : vector<128x1xi1> to vector<128x128xi1>
      %246 = vector.broadcast %cst_78 : f32 to vector<128x128xf32>
      %247 = arith.select %245, %53, %246 : vector<128x128xi1>, vector<128x128xf32>
      %cst_79 = arith.constant dense<0xFF800000> : vector<128xf32>
      %248 = vector.multi_reduction <maximumf>, %247, %cst_79 [0] : vector<128x128xf32> to vector<128xf32>
      %249 = vector.shape_cast %248 : vector<128xf32> to vector<1x128xf32>
      %250 = vector.extract_strided_slice %20 {offsets = [0, 28], sizes = [128, 1], strides = [1, 1]} : vector<128x32xi1> to vector<128x1xi1>
      %cst_80 = arith.constant -1.000000e+30 : f32
      %251 = vector.shape_cast %250 : vector<128x1xi1> to vector<128x1xi1>
      %252 = vector.broadcast %251 : vector<128x1xi1> to vector<128x128xi1>
      %253 = vector.broadcast %cst_80 : f32 to vector<128x128xf32>
      %254 = arith.select %252, %53, %253 : vector<128x128xi1>, vector<128x128xf32>
      %cst_81 = arith.constant dense<0xFF800000> : vector<128xf32>
      %255 = vector.multi_reduction <maximumf>, %254, %cst_81 [0] : vector<128x128xf32> to vector<128xf32>
      %256 = vector.shape_cast %255 : vector<128xf32> to vector<1x128xf32>
      %257 = vector.extract_strided_slice %20 {offsets = [0, 29], sizes = [128, 1], strides = [1, 1]} : vector<128x32xi1> to vector<128x1xi1>
      %cst_82 = arith.constant -1.000000e+30 : f32
      %258 = vector.shape_cast %257 : vector<128x1xi1> to vector<128x1xi1>
      %259 = vector.broadcast %258 : vector<128x1xi1> to vector<128x128xi1>
      %260 = vector.broadcast %cst_82 : f32 to vector<128x128xf32>
      %261 = arith.select %259, %53, %260 : vector<128x128xi1>, vector<128x128xf32>
      %cst_83 = arith.constant dense<0xFF800000> : vector<128xf32>
      %262 = vector.multi_reduction <maximumf>, %261, %cst_83 [0] : vector<128x128xf32> to vector<128xf32>
      %263 = vector.shape_cast %262 : vector<128xf32> to vector<1x128xf32>
      %264 = vector.extract_strided_slice %20 {offsets = [0, 30], sizes = [128, 1], strides = [1, 1]} : vector<128x32xi1> to vector<128x1xi1>
      %cst_84 = arith.constant -1.000000e+30 : f32
      %265 = vector.shape_cast %264 : vector<128x1xi1> to vector<128x1xi1>
      %266 = vector.broadcast %265 : vector<128x1xi1> to vector<128x128xi1>
      %267 = vector.broadcast %cst_84 : f32 to vector<128x128xf32>
      %268 = arith.select %266, %53, %267 : vector<128x128xi1>, vector<128x128xf32>
      %cst_85 = arith.constant dense<0xFF800000> : vector<128xf32>
      %269 = vector.multi_reduction <maximumf>, %268, %cst_85 [0] : vector<128x128xf32> to vector<128xf32>
      %270 = vector.shape_cast %269 : vector<128xf32> to vector<1x128xf32>
      %271 = vector.extract_strided_slice %20 {offsets = [0, 31], sizes = [128, 1], strides = [1, 1]} : vector<128x32xi1> to vector<128x1xi1>
      %cst_86 = arith.constant -1.000000e+30 : f32
      %272 = vector.shape_cast %271 : vector<128x1xi1> to vector<128x1xi1>
      %273 = vector.broadcast %272 : vector<128x1xi1> to vector<128x128xi1>
      %274 = vector.broadcast %cst_86 : f32 to vector<128x128xf32>
      %275 = arith.select %273, %53, %274 : vector<128x128xi1>, vector<128x128xf32>
      %cst_87 = arith.constant dense<0xFF800000> : vector<128xf32>
      %276 = vector.multi_reduction <maximumf>, %275, %cst_87 [0] : vector<128x128xf32> to vector<128xf32>
      %277 = vector.shape_cast %276 : vector<128xf32> to vector<1x128xf32>
      %278 = tpu.concatenate %60, %67, %74, %81, %88, %95, %102, %109, %116, %123, %130, %137, %144, %151, %158, %165 in 0 : vector<1x128xf32>, vector<1x128xf32>, vector<1x128xf32>, vector<1x128xf32>, vector<1x128xf32>, vector<1x128xf32>, vector<1x128xf32>, vector<1x128xf32>, vector<1x128xf32>, vector<1x128xf32>, vector<1x128xf32>, vector<1x128xf32>, vector<1x128xf32>, vector<1x128xf32>, vector<1x128xf32>, vector<1x128xf32> -> vector<16x128xf32>
      %279 = tpu.concatenate %172, %179, %186, %193, %200, %207, %214, %221, %228, %235, %242, %249, %256, %263, %270, %277 in 0 : vector<1x128xf32>, vector<1x128xf32>, vector<1x128xf32>, vector<1x128xf32>, vector<1x128xf32>, vector<1x128xf32>, vector<1x128xf32>, vector<1x128xf32>, vector<1x128xf32>, vector<1x128xf32>, vector<1x128xf32>, vector<1x128xf32>, vector<1x128xf32>, vector<1x128xf32>, vector<1x128xf32>, vector<1x128xf32> -> vector<16x128xf32>
      %280 = tpu.concatenate %278, %279 in 0 : vector<16x128xf32>, vector<16x128xf32> -> vector<32x128xf32>
      %c0_88 = arith.constant 0 : index
      %c0_89 = arith.constant 0 : index
      %281 = vector.load %arg16[%c0_88, %c0_89] : memref<32x128xf32, #tpu.memory_space<vmem>>, vector<32x128xf32>
      %282 = arith.maximumf %281, %280 : vector<32x128xf32>
      %c0_90 = arith.constant 0 : index
      %c0_91 = arith.constant 0 : index
      %283 = vector.load %arg16[%c0_90, %c0_91] : memref<32x128xf32, #tpu.memory_space<vmem>>, vector<32x128xf32>
      tpu.vector_store %arg16[%c0_90, %c0_91], %282 {strides = array<i32>} : memref<32x128xf32, #tpu.memory_space<vmem>>, vector<32x128xf32>,
    } else {
    }
    %c0_i32_3 = arith.constant 0 : i32
    %9 = arith.cmpi eq, %arg1, %c0_i32_3 : i32
    %10 = arith.extui %9 : i1 to i32
    %c0_i32_4 = arith.constant 0 : i32
    %11 = arith.cmpi ne, %10, %c0_i32_4 : i32
    scf.if %11 {
      %c0 = arith.constant 0 : index
      %c0_5 = arith.constant 0 : index
      %12 = vector.load %arg16[%c0, %c0_5] : memref<32x128xf32, #tpu.memory_space<vmem>>, vector<32x128xf32>
      %c0_6 = arith.constant 0 : index
      %c0_7 = arith.constant 0 : index
      %13 = vector.load %arg10[%c0_6, %c0_7] : memref<32x1xf32, #tpu.memory_space<vmem>>, vector<32x1xf32>
      %cst = arith.constant 0.000000e+00 : f32
      %14 = vector.broadcast %cst : f32 to vector<32x1xf32>
      %15 = arith.cmpf ogt, %13, %14 : vector<32x1xf32>
      %cst_8 = arith.constant 0.000000e+00 : f32
      %16 = vector.shape_cast %15 : vector<32x1xi1> to vector<32x1xi1>
      %17 = vector.broadcast %16 : vector<32x1xi1> to vector<32x128xi1>
      %18 = vector.broadcast %cst_8 : f32 to vector<32x128xf32>
      %19 = arith.select %17, %12, %18 : vector<32x128xi1>, vector<32x128xf32>
      %c0_9 = arith.constant 0 : index
      %c0_10 = arith.constant 0 : index
      %20 = vector.load %arg14[%c0_9, %c0_10] : memref<1x128xf32, #tpu.memory_space<vmem>>, vector<1x128xf32>
      %cst_11 = arith.constant 9.99999974E-6 : f32
      %21 = vector.broadcast %cst_11 : f32 to vector<1x128xf32>
      %22 = arith.addf %20, %21 : vector<1x128xf32>
      %23 = math.rsqrt %22 : vector<1x128xf32>
      %c0_12 = arith.constant 0 : index
      %c0_13 = arith.constant 0 : index
      %24 = vector.load %arg13[%c0_12, %c0_13] : memref<1x128xf32, #tpu.memory_space<vmem>>, vector<1x128xf32>
      %25 = vector.broadcast %24 : vector<1x128xf32> to vector<32x128xf32>
      %26 = arith.subf %19, %25 : vector<32x128xf32>
      %27 = vector.broadcast %23 : vector<1x128xf32> to vector<32x128xf32>
      %28 = arith.mulf %26, %27 : vector<32x128xf32>
      %c0_14 = arith.constant 0 : index
      %c0_15 = arith.constant 0 : index
      %29 = vector.load %arg11[%c0_14, %c0_15] : memref<1x128xf32, #tpu.memory_space<vmem>>, vector<1x128xf32>
      %30 = vector.broadcast %29 : vector<1x128xf32> to vector<32x128xf32>
      %31 = arith.mulf %28, %30 : vector<32x128xf32>
      %c0_16 = arith.constant 0 : index
      %c0_17 = arith.constant 0 : index
      %32 = vector.load %arg12[%c0_16, %c0_17] : memref<1x128xf32, #tpu.memory_space<vmem>>, vector<1x128xf32>
      %33 = vector.broadcast %32 : vector<1x128xf32> to vector<32x128xf32>
      %34 = arith.addf %31, %33 : vector<32x128xf32>
      %cst_18 = arith.constant 0.000000e+00 : f32
      %35 = vector.broadcast %cst_18 : f32 to vector<32x128xf32>
      %36 = arith.cmpf ogt, %34, %35 : vector<32x128xf32>
      %cst_19 = arith.constant 0.00999999977 : f32
      %37 = vector.broadcast %cst_19 : f32 to vector<32x128xf32>
      %38 = arith.mulf %37, %34 : vector<32x128xf32>
      %39 = arith.select %36, %34, %38 : vector<32x128xi1>, vector<32x128xf32>
      %c0_20 = arith.constant 0 : index
      %c0_21 = arith.constant 0 : index
      %40 = vector.load %arg15[%c0_20, %c0_21] : memref<32x128xf32, #tpu.memory_space<vmem>>, vector<32x128xf32>
      tpu.vector_store %arg15[%c0_20, %c0_21], %39 {strides = array<i32>} : memref<32x128xf32, #tpu.memory_space<vmem>>, vector<32x128xf32>,
    } else {
    }
    return
  }
  func.func @transform_0(%arg0: i32, %arg1: i32, %arg2: memref<2x1xi32, #tpu.memory_space<smem>>, %arg3: memref<2x1xi32, #tpu.memory_space<smem>>) -> (i32, i32) {
    %0 = arith.index_cast %arg0 : i32 to index
    %1 = arith.index_cast %arg1 : i32 to index
    %2 = memref.load %arg2[%0, %1] : memref<2x1xi32, #tpu.memory_space<smem>>
    %c0_i32 = arith.constant 0 : i32
    %c0_i32_0 = arith.constant 0 : i32
    return %2, %c0_i32 : i32, i32
  }
  func.func @transform_1(%arg0: i32, %arg1: i32, %arg2: memref<2x1xi32, #tpu.memory_space<smem>>, %arg3: memref<2x1xi32, #tpu.memory_space<smem>>) -> (i32, i32) {
    %c0_i32 = arith.constant 0 : i32
    %c0_i32_0 = arith.constant 0 : i32
    %c0_i32_1 = arith.constant 0 : i32
    return %c0_i32, %c0_i32_0 : i32, i32
  }
  func.func @transform_2(%arg0: i32, %arg1: i32, %arg2: memref<2x1xi32, #tpu.memory_space<smem>>, %arg3: memref<2x1xi32, #tpu.memory_space<smem>>) -> (i32, i32) {
    %c0_i32 = arith.constant 0 : i32
    %c0_i32_0 = arith.constant 0 : i32
    %c0_i32_1 = arith.constant 0 : i32
    return %c0_i32, %c0_i32_0 : i32, i32
  }
  func.func @transform_3(%arg0: i32, %arg1: i32, %arg2: memref<2x1xi32, #tpu.memory_space<smem>>, %arg3: memref<2x1xi32, #tpu.memory_space<smem>>) -> (i32, i32) {
    %c0_i32 = arith.constant 0 : i32
    %c0_i32_0 = arith.constant 0 : i32
    %c0_i32_1 = arith.constant 0 : i32
    return %c0_i32, %c0_i32_0 : i32, i32
  }
  func.func @transform_4(%arg0: i32, %arg1: i32, %arg2: memref<2x1xi32, #tpu.memory_space<smem>>, %arg3: memref<2x1xi32, #tpu.memory_space<smem>>) -> (i32, i32) {
    %c0_i32 = arith.constant 0 : i32
    %c0_i32_0 = arith.constant 0 : i32
    %c0_i32_1 = arith.constant 0 : i32
    return %c0_i32, %c0_i32_0 : i32, i32
  }
  func.func @transform_5(%arg0: i32, %arg1: i32, %arg2: memref<2x1xi32, #tpu.memory_space<smem>>, %arg3: memref<2x1xi32, #tpu.memory_space<smem>>) -> (i32, i32) {
    %c0_i32 = arith.constant 0 : i32
    %c0_i32_0 = arith.constant 0 : i32
    %c0_i32_1 = arith.constant 0 : i32
    return %c0_i32, %c0_i32_0 : i32, i32
  }
  func.func @transform_6(%arg0: i32, %arg1: i32, %arg2: memref<2x1xi32, #tpu.memory_space<smem>>, %arg3: memref<2x1xi32, #tpu.memory_space<smem>>) -> (i32, i32) {
    %c0_i32 = arith.constant 0 : i32
    %c0_i32_0 = arith.constant 0 : i32
    return %arg0, %c0_i32 : i32, i32
  }
  func.func @transform_7(%arg0: i32, %arg1: i32, %arg2: memref<2x1xi32, #tpu.memory_space<smem>>, %arg3: memref<2x1xi32, #tpu.memory_space<smem>>) -> (i32, i32) {
    %c0_i32 = arith.constant 0 : i32
    %c0_i32_0 = arith.constant 0 : i32
    %c0_i32_1 = arith.constant 0 : i32
    return %c0_i32, %c0_i32_0 : i32, i32
  }
  func.func @transform_8(%arg0: i32, %arg1: i32, %arg2: memref<2x1xi32, #tpu.memory_space<smem>>, %arg3: memref<2x1xi32, #tpu.memory_space<smem>>) -> (i32, i32) {
    %c0_i32 = arith.constant 0 : i32
    %c0_i32_0 = arith.constant 0 : i32
    %c0_i32_1 = arith.constant 0 : i32
    return %c0_i32, %c0_i32_0 : i32, i32
  }
  func.func @transform_9(%arg0: i32, %arg1: i32, %arg2: memref<2x1xi32, #tpu.memory_space<smem>>, %arg3: memref<2x1xi32, #tpu.memory_space<smem>>) -> (i32, i32) {
    %c0_i32 = arith.constant 0 : i32
    %c0_i32_0 = arith.constant 0 : i32
    %c0_i32_1 = arith.constant 0 : i32
    return %c0_i32, %c0_i32_0 : i32, i32
  }
  func.func @transform_10(%arg0: i32, %arg1: i32, %arg2: memref<2x1xi32, #tpu.memory_space<smem>>, %arg3: memref<2x1xi32, #tpu.memory_space<smem>>) -> (i32, i32) {
    %c0_i32 = arith.constant 0 : i32
    %c0_i32_0 = arith.constant 0 : i32
    %c0_i32_1 = arith.constant 0 : i32
    return %c0_i32, %c0_i32_0 : i32, i32
  }
  func.func @transform_11(%arg0: i32, %arg1: i32, %arg2: memref<2x1xi32, #tpu.memory_space<smem>>, %arg3: memref<2x1xi32, #tpu.memory_space<smem>>) -> (i32, i32) {
    %c0_i32 = arith.constant 0 : i32
    %c0_i32_0 = arith.constant 0 : i32
    return %arg0, %c0_i32 : i32, i32
  }
}

</mosaic_0001>

<llo_original>
// kernel: mpgnn_forward.2
$region0: #{mpgnn_forward.2}
  #allocation0 [shape = 'u32[]', space=smem, size = 0x4, offset = 0x4, fixed_abs, tag = 'smem constant byte address 0x4 - core index']
  #allocation1 [shape = 'u32[144,128]{1,0:T(1,128)}', space=vmem, size = 0x12000, scoped, tag = 'internal scratch']
  #allocation2 [shape = 'f32[32,128]{1,0:T(8,128)}', space=vmem, size = 0x4000, scoped, tag = 'scratch operand']
  #allocation3 [shape = 's32[1]{0}', space=sflag, size = 0x4, scoped, tag = 'scoped memory for mpgnn_forward.2']
  #allocation4 [shape = 'u8[1024]{0}', space=smem, size = 0x400, scoped, tag = 'prefetched SMEM operand 0']
  #allocation5 [shape = 'u8[1024]{0}', space=smem, size = 0x400, scoped, tag = 'prefetched SMEM operand 1']
  %s0 = inlined_call_operand.vmem [shape: s32[2,1], index: 0, kind: input, shape index: {}]
  %s1 = inlined_call_operand.vmem [shape: s32[2,1], index: 1, kind: input, shape index: {}]
  %s2 = inlined_call_operand.vmem [shape: s32[128,2], index: 2, kind: input, shape index: {}]
  %s3 = inlined_call_operand.vmem [shape: f32[64,128], index: 3, kind: input, shape index: {}]
  %s4 = inlined_call_operand.vmem [shape: bf16[256,128], index: 4, kind: input, shape index: {}]
  %s5 = inlined_call_operand.vmem [shape: f32[1,128], index: 5, kind: input, shape index: {}]
  %s6 = inlined_call_operand.vmem [shape: bf16[128,128], index: 6, kind: input, shape index: {}]
  %s7 = inlined_call_operand.vmem [shape: f32[1,128], index: 7, kind: input, shape index: {}]
  %s8 = inlined_call_operand.vmem [shape: f32[64,1], index: 8, kind: input, shape index: {}]
  %s9 = inlined_call_operand.vmem [shape: f32[1,128], index: 9, kind: input, shape index: {}]
  %s10 = inlined_call_operand.vmem [shape: f32[1,128], index: 10, kind: input, shape index: {}]
  %s11 = inlined_call_operand.vmem [shape: f32[1,128], index: 11, kind: input, shape index: {}]
  %s12 = inlined_call_operand.vmem [shape: f32[1,128], index: 12, kind: input, shape index: {}]
  %s13 = inlined_call_operand.vmem [shape: f32[64,128], index: 13, kind: output, shape index: {}]
  %s14 = sld [smem:[#allocation0]]
  $region89: #{mpgnn_forward.2} parent=0
    _
  %s16 = ssub.s32 1, %s14
  %s17 = scalar_select 0, %s16, %s14
  %s18 = sshll.u32 %s0, 4
  %s19 = int_to_ptr.vmem [resolvable:$true] %s18
  %21 = dma.vmem_to_smem %s19, 32, [#allocation4], [#allocation3]
  %s22 = sshll.u32 %s1, 4
  %s23 = int_to_ptr.vmem [resolvable:$true] %s22
  %25 = dma.vmem_to_smem %s23, 32, [#allocation5], [#allocation3]
  %26 = dma.done [#allocation3], 64
  %27 = sfence
  loop: start=0, step=1, limit=4
  $region2: #{mpgnn_forward.2} parent=0 // loop_pre_header
    _
  $region3: #{mpgnn_forward.2} parent=0 // loop_header
    %s29 = sphi 0, %s33
    %p30 = scmp.ge.s32.totalorder %s29, 4
    %s36 = sphi 0, %s48
    %s37 = sphi 0, %s44
    %s38 = sphi 0, %s36
    %s39 = sphi 0, %s37
    %s40 = sphi 0, %s38
    %s41 = sphi 0, %s39
    %s67 = sphi 0, %s69
    %s70 = sphi 0, %s67
    %s71 = sphi 0, %s70
    %s87 = sphi 0, %s71
    %s91 = sphi 0, %s91
    %s93 = sphi 0, %s91
    %s94 = sphi 0, %s93
    %s108 = sphi 0, %s94
    %s112 = sphi 0, %s112
    %s114 = sphi 0, %s112
    %s115 = sphi 0, %s114
    %s129 = sphi 0, %s115
    %s133 = sphi 0, %s133
    %s135 = sphi 0, %s133
    %s136 = sphi 0, %s135
    %s150 = sphi 0, %s136
    %s154 = sphi 0, %s154
    %s156 = sphi 0, %s154
    %s157 = sphi 0, %s156
    %s171 = sphi 0, %s157
    %s175 = sphi 0, %s175
    %s177 = sphi 0, %s175
    %s178 = sphi 0, %s177
    %s192 = sphi 0, %s178
    %s198 = sphi 0, %s200
    %s201 = sphi 0, %s198
    %s202 = sphi 0, %s201
    %s218 = sphi 0, %s202
    %s222 = sphi 0, %s222
    %s224 = sphi 0, %s222
    %s225 = sphi 0, %s224
    %s239 = sphi 0, %s225
    %s243 = sphi 0, %s243
    %s245 = sphi 0, %s243
    %s246 = sphi 0, %s245
    %s260 = sphi 0, %s246
    %s264 = sphi 0, %s264
    %s266 = sphi 0, %s264
    %s267 = sphi 0, %s266
    %s281 = sphi 0, %s267
    %s285 = sphi 0, %s285
    %s287 = sphi 0, %s285
    %s288 = sphi 0, %s287
    %s302 = sphi 0, %s288
    %s308 = sphi 0, %s310
    %s311 = sphi 0, %s308
    %s312 = sphi 0, %s311
    %s328 = sphi 0, %s312
  $region4: #{mpgnn_forward.2} parent=0 // loop_header_branch
    %32 = sbr.rel (%p30) target = $region8
  $region5: #{mpgnn_forward.2} parent=0 // loop_body
    %s34 = ssub.s32 %s29, 1
    %s35 = ssub.s32 %s29, 2
    %s42 = sadd.s32 1, %s37
    %p43 = scmp.ge.s32.totalorder %s42, 1
    %s44 = scalar_select %p43, 0, %s42
    %s45 = sadd.s32 1, %s36
    %s46 = scalar_select %p43, %s45, %s36
    %p47 = scmp.ge.s32.totalorder %s46, 2
    %s48 = scalar_select %p47, 0, %s46
    %s49 = sshra.s32 %s37, 7
    %s50 = sand.u32 %s37, 127
    %s51 = sadd.s32 %s49, %s36
    %s52 = smul.u32 %s51, 128
    %s53 = sshra.s32 %s37, 7
    %s54 = sand.u32 %s37, 127
    %s55 = sadd.s32 %s52, %s54
    %s56 = sld [smem:[#allocation4 + %s55]]
    %s57 = sshra.s32 %s44, 7
    %s58 = sand.u32 %s44, 127
    %s59 = sadd.s32 %s57, %s48
    %s60 = smul.u32 %s59, 128
    %s61 = sshra.s32 %s44, 7
    %s62 = sand.u32 %s44, 127
    %s63 = sadd.s32 %s60, %s62
    %s64 = sld [smem:[#allocation4 + %s63]]
    %s65 = ssub.s32 %s56, %s64
    %p66 = scmp.eq.s32.totalorder %s65, 0
    %s68 = sadd.s32 %s67, 1
    %s69 = scalar_select %p66, %s67, %s68
    %p72 = pneg %p66
    %p73 = scmp.eq.s32.totalorder %s29, 1
    %p74 = por %p72, %p73
    %p75 = scmp.ne.s32.totalorder %s67, %s70
    %p76 = scmp.eq.s32.totalorder %s29, 0
    %p77 = por %p75, %p76
    %p78 = scmp.ne.s32.totalorder %s67, %s70
    %p79 = scmp.eq.s32.totalorder %s34, 1
    %p80 = por %p78, %p79
    %p81 = scmp.ne.s32.totalorder %s70, %s71
    %p82 = scmp.eq.s32.totalorder %s34, 0
    %p83 = por %p81, %p82
    %p84 = scmp.ne.s32.totalorder %s70, %s71
    %p85 = scmp.eq.s32.totalorder %s35, 1
    %p86 = por %p84, %p85
    %p88 = scmp.ne.s32.totalorder %s71, %s87
    %p89 = scmp.eq.s32.totalorder %s35, 0
    %p90 = por %p88, %p89
    %s92 = sadd.s32 %s91, 1
    %p95 = scmp.eq.s32.totalorder %s29, 1
    %p96 = scmp.ne.s32.totalorder %s91, %s93
    %p97 = scmp.eq.s32.totalorder %s29, 0
    %p98 = por %p96, %p97
    %p99 = scmp.ne.s32.totalorder %s91, %s93
    %p100 = scmp.eq.s32.totalorder %s34, 1
    %p101 = por %p99, %p100
    %p102 = scmp.ne.s32.totalorder %s93, %s94
    %p103 = scmp.eq.s32.totalorder %s34, 0
    %p104 = por %p102, %p103
    %p105 = scmp.ne.s32.totalorder %s93, %s94
    %p106 = scmp.eq.s32.totalorder %s35, 1
    %p107 = por %p105, %p106
    %p109 = scmp.ne.s32.totalorder %s94, %s108
    %p110 = scmp.eq.s32.totalorder %s35, 0
    %p111 = por %p109, %p110
    %s113 = sadd.s32 %s112, 1
    %p116 = scmp.eq.s32.totalorder %s29, 1
    %p117 = scmp.ne.s32.totalorder %s112, %s114
    %p118 = scmp.eq.s32.totalorder %s29, 0
    %p119 = por %p117, %p118
    %p120 = scmp.ne.s32.totalorder %s112, %s114
    %p121 = scmp.eq.s32.totalorder %s34, 1
    %p122 = por %p120, %p121
    %p123 = scmp.ne.s32.totalorder %s114, %s115
    %p124 = scmp.eq.s32.totalorder %s34, 0
    %p125 = por %p123, %p124
    %p126 = scmp.ne.s32.totalorder %s114, %s115
    %p127 = scmp.eq.s32.totalorder %s35, 1
    %p128 = por %p126, %p127
    %p130 = scmp.ne.s32.totalorder %s115, %s129
    %p131 = scmp.eq.s32.totalorder %s35, 0
    %p132 = por %p130, %p131
    %s134 = sadd.s32 %s133, 1
    %p137 = scmp.eq.s32.totalorder %s29, 1
    %p138 = scmp.ne.s32.totalorder %s133, %s135
    %p139 = scmp.eq.s32.totalorder %s29, 0
    %p140 = por %p138, %p139
    %p141 = scmp.ne.s32.totalorder %s133, %s135
    %p142 = scmp.eq.s32.totalorder %s34, 1
    %p143 = por %p141, %p142
    %p144 = scmp.ne.s32.totalorder %s135, %s136
    %p145 = scmp.eq.s32.totalorder %s34, 0
    %p146 = por %p144, %p145
    %p147 = scmp.ne.s32.totalorder %s135, %s136
    %p148 = scmp.eq.s32.totalorder %s35, 1
    %p149 = por %p147, %p148
    %p151 = scmp.ne.s32.totalorder %s136, %s150
    %p152 = scmp.eq.s32.totalorder %s35, 0
    %p153 = por %p151, %p152
    %s155 = sadd.s32 %s154, 1
    %p158 = scmp.eq.s32.totalorder %s29, 1
    %p159 = scmp.ne.s32.totalorder %s154, %s156
    %p160 = scmp.eq.s32.totalorder %s29, 0
    %p161 = por %p159, %p160
    %p162 = scmp.ne.s32.totalorder %s154, %s156
    %p163 = scmp.eq.s32.totalorder %s34, 1
    %p164 = por %p162, %p163
    %p165 = scmp.ne.s32.totalorder %s156, %s157
    %p166 = scmp.eq.s32.totalorder %s34, 0
    %p167 = por %p165, %p166
    %p168 = scmp.ne.s32.totalorder %s156, %s157
    %p169 = scmp.eq.s32.totalorder %s35, 1
    %p170 = por %p168, %p169
    %p172 = scmp.ne.s32.totalorder %s157, %s171
    %p173 = scmp.eq.s32.totalorder %s35, 0
    %p174 = por %p172, %p173
    %s176 = sadd.s32 %s175, 1
    %p179 = scmp.eq.s32.totalorder %s29, 1
    %p180 = scmp.ne.s32.totalorder %s175, %s177
    %p181 = scmp.eq.s32.totalorder %s29, 0
    %p182 = por %p180, %p181
    %p183 = scmp.ne.s32.totalorder %s175, %s177
    %p184 = scmp.eq.s32.totalorder %s34, 1
    %p185 = por %p183, %p184
    %p186 = scmp.ne.s32.totalorder %s177, %s178
    %p187 = scmp.eq.s32.totalorder %s34, 0
    %p188 = por %p186, %p187
    %p189 = scmp.ne.s32.totalorder %s177, %s178
    %p190 = scmp.eq.s32.totalorder %s35, 1
    %p191 = por %p189, %p190
    %p193 = scmp.ne.s32.totalorder %s178, %s192
    %p194 = scmp.eq.s32.totalorder %s35, 0
    %p195 = por %p193, %p194
    %s196 = ssub.s32 %s36, %s48
    %p197 = scmp.eq.s32.totalorder %s196, 0
    %s199 = sadd.s32 %s198, 1
    %s200 = scalar_select %p197, %s198, %s199
    %p203 = pneg %p197
    %p204 = scmp.eq.s32.totalorder %s29, 1
    %p205 = por %p203, %p204
    %p206 = scmp.ne.s32.totalorder %s198, %s201
    %p207 = scmp.eq.s32.totalorder %s29, 0
    %p208 = por %p206, %p207
    %p209 = scmp.ne.s32.totalorder %s198, %s201
    %p210 = scmp.eq.s32.totalorder %s34, 1
    %p211 = por %p209, %p210
    %p212 = scmp.ne.s32.totalorder %s201, %s202
    %p213 = scmp.eq.s32.totalorder %s34, 0
    %p214 = por %p212, %p213
    %p215 = scmp.ne.s32.totalorder %s201, %s202
    %p216 = scmp.eq.s32.totalorder %s35, 1
    %p217 = por %p215, %p216
    %p219 = scmp.ne.s32.totalorder %s202, %s218
    %p220 = scmp.eq.s32.totalorder %s35, 0
    %p221 = por %p219, %p220
    %s223 = sadd.s32 %s222, 1
    %p226 = scmp.eq.s32.totalorder %s29, 1
    %p227 = scmp.ne.s32.totalorder %s222, %s224
    %p228 = scmp.eq.s32.totalorder %s29, 0
    %p229 = por %p227, %p228
    %p230 = scmp.ne.s32.totalorder %s222, %s224
    %p231 = scmp.eq.s32.totalorder %s34, 1
    %p232 = por %p230, %p231
    %p233 = scmp.ne.s32.totalorder %s224, %s225
    %p234 = scmp.eq.s32.totalorder %s34, 0
    %p235 = por %p233, %p234
    %p236 = scmp.ne.s32.totalorder %s224, %s225
    %p237 = scmp.eq.s32.totalorder %s35, 1
    %p238 = por %p236, %p237
    %p240 = scmp.ne.s32.totalorder %s225, %s239
    %p241 = scmp.eq.s32.totalorder %s35, 0
    %p242 = por %p240, %p241
    %s244 = sadd.s32 %s243, 1
    %p247 = scmp.eq.s32.totalorder %s29, 1
    %p248 = scmp.ne.s32.totalorder %s243, %s245
    %p249 = scmp.eq.s32.totalorder %s29, 0
    %p250 = por %p248, %p249
    %p251 = scmp.ne.s32.totalorder %s243, %s245
    %p252 = scmp.eq.s32.totalorder %s34, 1
    %p253 = por %p251, %p252
    %p254 = scmp.ne.s32.totalorder %s245, %s246
    %p255 = scmp.eq.s32.totalorder %s34, 0
    %p256 = por %p254, %p255
    %p257 = scmp.ne.s32.totalorder %s245, %s246
    %p258 = scmp.eq.s32.totalorder %s35, 1
    %p259 = por %p257, %p258
    %p261 = scmp.ne.s32.totalorder %s246, %s260
    %p262 = scmp.eq.s32.totalorder %s35, 0
    %p263 = por %p261, %p262
    %s265 = sadd.s32 %s264, 1
    %p268 = scmp.eq.s32.totalorder %s29, 1
    %p269 = scmp.ne.s32.totalorder %s264, %s266
    %p270 = scmp.eq.s32.totalorder %s29, 0
    %p271 = por %p269, %p270
    %p272 = scmp.ne.s32.totalorder %s264, %s266
    %p273 = scmp.eq.s32.totalorder %s34, 1
    %p274 = por %p272, %p273
    %p275 = scmp.ne.s32.totalorder %s266, %s267
    %p276 = scmp.eq.s32.totalorder %s34, 0
    %p277 = por %p275, %p276
    %p278 = scmp.ne.s32.totalorder %s266, %s267
    %p279 = scmp.eq.s32.totalorder %s35, 1
    %p280 = por %p278, %p279
    %p282 = scmp.ne.s32.totalorder %s267, %s281
    %p283 = scmp.eq.s32.totalorder %s35, 0
    %p284 = por %p282, %p283
    %s286 = sadd.s32 %s285, 1
    %p289 = scmp.eq.s32.totalorder %s29, 1
    %p290 = scmp.ne.s32.totalorder %s285, %s287
    %p291 = scmp.eq.s32.totalorder %s29, 0
    %p292 = por %p290, %p291
    %p293 = scmp.ne.s32.totalorder %s285, %s287
    %p294 = scmp.eq.s32.totalorder %s34, 1
    %p295 = por %p293, %p294
    %p296 = scmp.ne.s32.totalorder %s287, %s288
    %p297 = scmp.eq.s32.totalorder %s34, 0
    %p298 = por %p296, %p297
    %p299 = scmp.ne.s32.totalorder %s287, %s288
    %p300 = scmp.eq.s32.totalorder %s35, 1
    %p301 = por %p299, %p300
    %p303 = scmp.ne.s32.totalorder %s288, %s302
    %p304 = scmp.eq.s32.totalorder %s35, 0
    %p305 = por %p303, %p304
    %s306 = ssub.s32 %s36, %s48
    %p307 = scmp.eq.s32.totalorder %s306, 0
    %s309 = sadd.s32 %s308, 1
    %s310 = scalar_select %p307, %s308, %s309
    %p313 = pneg %p307
    %p314 = scmp.eq.s32.totalorder %s29, 1
    %p315 = por %p313, %p314
    %p316 = scmp.ne.s32.totalorder %s308, %s311
    %p317 = scmp.eq.s32.totalorder %s29, 0
    %p318 = por %p316, %p317
    %p319 = scmp.ne.s32.totalorder %s308, %s311
    %p320 = scmp.eq.s32.totalorder %s34, 1
    %p321 = por %p319, %p320
    %p322 = scmp.ne.s32.totalorder %s311, %s312
    %p323 = scmp.eq.s32.totalorder %s34, 0
    %p324 = por %p322, %p323
    %p325 = scmp.ne.s32.totalorder %s311, %s312
    %p326 = scmp.eq.s32.totalorder %s35, 1
    %p327 = por %p325, %p326
    %p329 = scmp.ne.s32.totalorder %s312, %s328
    %p330 = scmp.eq.s32.totalorder %s35, 0
    %p331 = por %p329, %p330
    %p332 = scmp.le.s32.totalorder 1, %s29
    %p333 = scmp.lt.s32.totalorder %s29, 3
    %p334 = pnand %p332, %p333
    %p335 = pneg %p334
    // Predicated region
    $region9: #{mpgnn_forward.2} parent=5 // pred_check
      _
    $region10: #{mpgnn_forward.2} parent=5 // pred_check_branch
      %337 = sbr.rel (%p334) target = $region12
    $region11: #{mpgnn_forward.2} parent=5 // pred_region
      %s338 = ssub.s32 %s29, 1
      // Predicated region
      $region13: #{mpgnn_forward.2} parent=11 // pred_check
        %p339 = pneg %p104
      $region14: #{mpgnn_forward.2} parent=11 // pred_check_branch
        %341 = sbr.rel (%p339) target = $region16
      $region15: #{mpgnn_forward.2} parent=11 // pred_region
        _
      $region16: #{mpgnn_forward.2} parent=11 // pred_fallthru
        _
      // Predicated region
      $region17: #{mpgnn_forward.2} parent=11 // pred_check
        %p342 = pneg %p125
      $region18: #{mpgnn_forward.2} parent=11 // pred_check_branch
        %344 = sbr.rel (%p342) target = $region20
      $region19: #{mpgnn_forward.2} parent=11 // pred_region
        _
      $region20: #{mpgnn_forward.2} parent=11 // pred_fallthru
        _
      // Predicated region
      $region21: #{mpgnn_forward.2} parent=11 // pred_check
        %p345 = pneg %p146
      $region22: #{mpgnn_forward.2} parent=11 // pred_check_branch
        %347 = sbr.rel (%p345) target = $region24
      $region23: #{mpgnn_forward.2} parent=11 // pred_region
        _
      $region24: #{mpgnn_forward.2} parent=11 // pred_fallthru
        _
      // Predicated region
      $region25: #{mpgnn_forward.2} parent=11 // pred_check
        %p348 = pneg %p167
      $region26: #{mpgnn_forward.2} parent=11 // pred_check_branch
        %350 = sbr.rel (%p348) target = $region28
      $region27: #{mpgnn_forward.2} parent=11 // pred_region
        _
      $region28: #{mpgnn_forward.2} parent=11 // pred_fallthru
        _
      // Predicated region
      $region29: #{mpgnn_forward.2} parent=11 // pred_check
        %p351 = pneg %p188
      $region30: #{mpgnn_forward.2} parent=11 // pred_check_branch
        %353 = sbr.rel (%p351) target = $region32
      $region31: #{mpgnn_forward.2} parent=11 // pred_region
        _
      $region32: #{mpgnn_forward.2} parent=11 // pred_fallthru
        _
      // Predicated region
      $region33: #{mpgnn_forward.2} parent=11 // pred_check
        %p354 = pneg %p235
      $region34: #{mpgnn_forward.2} parent=11 // pred_check_branch
        %356 = sbr.rel (%p354) target = $region36
      $region35: #{mpgnn_forward.2} parent=11 // pred_region
        _
      $region36: #{mpgnn_forward.2} parent=11 // pred_fallthru
        _
      // Predicated region
      $region37: #{mpgnn_forward.2} parent=11 // pred_check
        %p357 = pneg %p256
      $region38: #{mpgnn_forward.2} parent=11 // pred_check_branch
        %359 = sbr.rel (%p357) target = $region40
      $region39: #{mpgnn_forward.2} parent=11 // pred_region
        _
      $region40: #{mpgnn_forward.2} parent=11 // pred_fallthru
        _
      // Predicated region
      $region41: #{mpgnn_forward.2} parent=11 // pred_check
        %p360 = pneg %p277
      $region42: #{mpgnn_forward.2} parent=11 // pred_check_branch
        %362 = sbr.rel (%p360) target = $region44
      $region43: #{mpgnn_forward.2} parent=11 // pred_region
        _
      $region44: #{mpgnn_forward.2} parent=11 // pred_fallthru
        _
      // Predicated region
      $region45: #{mpgnn_forward.2} parent=11 // pred_check
        %p363 = pneg %p298
      $region46: #{mpgnn_forward.2} parent=11 // pred_check_branch
        %365 = sbr.rel (%p363) target = $region48
      $region47: #{mpgnn_forward.2} parent=11 // pred_region
        _
      $region48: #{mpgnn_forward.2} parent=11 // pred_fallthru
        _
    $region12: #{mpgnn_forward.2} parent=5 // pred_fallthru
      _
    %p366 = scmp.lt.s32.totalorder %s29, 2
    // Predicated region
    $region49: #{mpgnn_forward.2} parent=5 // pred_check
      %p367 = pneg %p366
    $region50: #{mpgnn_forward.2} parent=5 // pred_check_branch
      %369 = sbr.rel (%p367) target = $region52
    $region51: #{mpgnn_forward.2} parent=5 // pred_region
      // Predicated region
      $region53: #{mpgnn_forward.2} parent=51 // pred_check
        %p370 = pneg %p77
      $region54: #{mpgnn_forward.2} parent=51 // pred_check_branch
        %372 = sbr.rel (%p370) target = $region56
      $region55: #{mpgnn_forward.2} parent=51 // pred_region
        %s373 = sshra.s32 %s37, 7
        %s374 = sand.u32 %s37, 127
        %s375 = sadd.s32 %s373, %s36
        %s376 = smul.u32 %s375, 128
        %s377 = sshra.s32 %s37, 7
        %s378 = sand.u32 %s37, 127
        %s379 = sadd.s32 %s376, %s378
        %s380 = sld [smem:[#allocation4 + %s379]]
        %s381 = smul.u32 16, %s380
        %p382 = scmp.lt.s32.totalorder %s381, 15
        %s383 = scalar_select %p382, %s381, 15
        %s384 = smul.addr %s383, 8
        %s385 = scalar_lea.vmem %s2, %s384
        %s386 = sshra.s32 %s37, 7
        %s387 = sand.u32 %s37, 127
        %s388 = sadd.s32 %s386, %s36
        %s389 = smul.u32 %s388, 128
        %s390 = sshra.s32 %s37, 7
        %s391 = sand.u32 %s37, 127
        %s392 = sadd.s32 %s389, %s391
        %s393 = sld [smem:[#allocation4 + %s392]]
        %s394 = smul.u32 16, %s393
      $region56: #{mpgnn_forward.2} parent=51 // pred_fallthru
        _
      // Predicated region
      $region57: #{mpgnn_forward.2} parent=51 // pred_check
        %p395 = pneg %p208
      $region58: #{mpgnn_forward.2} parent=51 // pred_check_branch
        %397 = sbr.rel (%p395) target = $region60
      $region59: #{mpgnn_forward.2} parent=51 // pred_region
        %s398 = smul.u32 4, %s36
        %p399 = scmp.lt.s32.totalorder %s398, 7
        %s400 = scalar_select %p399, %s398, 7
        %s401 = smul.addr %s400, 8
        %s402 = scalar_lea.vmem %s8, %s401
        %s403 = smul.u32 4, %s36
      $region60: #{mpgnn_forward.2} parent=51 // pred_fallthru
        _
    $region52: #{mpgnn_forward.2} parent=5 // pred_fallthru
      _
    %p404 = scmp.le.s32.totalorder 1, %s29
    %p405 = scmp.lt.s32.totalorder %s29, 3
    %p406 = pnand %p404, %p405
    %p407 = pneg %p406
    // Predicated region
    $region61: #{mpgnn_forward.2} parent=5 // pred_check
      _
    $region62: #{mpgnn_forward.2} parent=5 // pred_check_branch
      %409 = sbr.rel (%p406) target = $region64
    $region63: #{mpgnn_forward.2} parent=5 // pred_region
      %s410 = ssub.s32 %s29, 1
      %s411 = sshra.s32 %s39, 7
      %s412 = sand.u32 %s39, 127
      %s413 = sadd.s32 %s411, %s38
      %s414 = smul.u32 %s413, 128
      %s415 = sshra.s32 %s39, 7
      %s416 = sand.u32 %s39, 127
      %s417 = sadd.s32 %s414, %s416
      %s418 = sld [smem:[#allocation4 + %s417]]
      %s419 = smul.u32 16, %s418
      %p420 = scmp.lt.s32.totalorder %s419, 15
      %s421 = scalar_select %p420, %s419, 15
      %s422 = smul.addr %s421, 8
      %s423 = scalar_lea.vmem %s2, %s422
      %p424 = pneg %p83
      %p425 = pneg %p80
      %p426 = pneg %p104
      %p427 = pneg %p101
      %p428 = pneg %p125
      %p429 = pneg %p122
      %p430 = pneg %p146
      %p431 = pneg %p143
      %p432 = pneg %p167
      %p433 = pneg %p164
      %p434 = pneg %p188
      %p435 = pneg %p185
      %s436 = smul.u32 4, %s38
      %p437 = scmp.lt.s32.totalorder %s436, 7
      %s438 = scalar_select %p437, %s436, 7
      %s439 = smul.addr %s438, 8
      %s440 = scalar_lea.vmem %s8, %s439
      %p441 = pneg %p214
      %p442 = pneg %p211
      %p443 = pneg %p235
      %p444 = pneg %p232
      %p445 = pneg %p256
      %p446 = pneg %p253
      %p447 = pneg %p277
      %p448 = pneg %p274
      %p449 = pneg %p298
      %p450 = pneg %p295
      %p451 = pneg %p324
      %p452 = pneg %p321
      %s453 = smul.u32 4, %s38
      %p454 = scmp.lt.s32.totalorder %s453, 7
      %s455 = scalar_select %p454, %s453, 7
      %s456 = smul.addr %s455, 8
      %s457 = scalar_lea.vmem %s13, %s456
      %s458 = sshra.s32 %s39, 7
      %s459 = sand.u32 %s39, 127
      %s460 = sadd.s32 %s458, %s38
      %s461 = smul.u32 %s460, 128
      %s462 = sshra.s32 %s39, 7
      %s463 = sand.u32 %s39, 127
      %s464 = sadd.s32 %s461, %s463
      %s465 = sld [smem:[#allocation4 + %s464]]
      %s466 = smul.u32 16, %s465
      %p467 = scmp.lt.s32.totalorder %s466, 15
      %s468 = scalar_select %p467, %s466, 15
      %s469 = smul.addr %s468, 8
      %s470 = scalar_lea.vmem %s2, %s469
      %s471 = sshra.s32 %s39, 7
      %s472 = sand.u32 %s39, 127
      %s473 = sadd.s32 %s471, %s38
      %s474 = smul.u32 %s473, 128
      %s475 = sshra.s32 %s39, 7
      %s476 = sand.u32 %s39, 127
      %s477 = sadd.s32 %s474, %s476
      %s478 = sld [smem:[#allocation4 + %s477]]
      %s479 = smul.u32 16, %s478
      %s480 = smul.u32 4, %s38
      %p481 = scmp.lt.s32.totalorder %s480, 7
      %s482 = scalar_select %p481, %s480, 7
      %s483 = smul.addr %s482, 8
      %s484 = scalar_lea.vmem %s8, %s483
      %s485 = smul.u32 4, %s38
      %s486 = smul.u32 4, %s38
      %p487 = scmp.lt.s32.totalorder %s486, 7
      %s488 = scalar_select %p487, %s486, 7
      %s489 = smul.addr %s488, 8
      %s490 = scalar_lea.vmem %s13, %s489
      %s491 = smul.u32 4, %s38
      %p493 = scmp.eq.s32.totalorder %s39, 0
      // Predicated region
      $region65: #{mpgnn_forward.2} parent=63 // pred_check
        %p494 = pneg %p493
      $region66: #{mpgnn_forward.2} parent=63 // pred_check_branch
        %496 = sbr.rel (%p494) target = $region68
      $region67: #{mpgnn_forward.2} parent=63 // pred_region
        %497 = vst [vmem:[#allocation2] sm:$0xff] -1e+30
        %498 = vst [vmem:[#allocation2 + $0x8] sm:$0xff] -1e+30
        %499 = vst [vmem:[#allocation2 + $0x10] sm:$0xff] -1e+30
        %500 = vst [vmem:[#allocation2 + $0x18] sm:$0xff] -1e+30
      $region68: #{mpgnn_forward.2} parent=63 // pred_fallthru
        _
      %s501 = sshra.s32 %s39, 7
      %s502 = sand.u32 %s39, 127
      %s503 = sadd.s32 %s501, %s38
      %s504 = smul.u32 %s503, 128
      %s505 = sshra.s32 %s39, 7
      %s506 = sand.u32 %s39, 127
      %s507 = sadd.s32 %s504, %s506
      %s508 = sld [smem:[#allocation5 + %s507]]
      %p509 = scmp.ne.s32.totalorder %s508, 0
      // Predicated region
      $region69: #{mpgnn_forward.2} parent=63 // pred_check
        %p510 = pneg %p509
      $region70: #{mpgnn_forward.2} parent=63 // pred_check_branch
        %512 = sbr.rel (%p510) target = $region72
      $region71: #{mpgnn_forward.2} parent=63 // pred_region
        %v513 = vld [vmem:[%s470] sm:$0xff]
        %v514 = vld [vmem:[%s470 + $0x8] sm:$0xff]
        %v515 = vld [vmem:[%s470 + $0x10] sm:$0xff]
        %v516 = vld [vmem:[%s470 + $0x18] sm:$0xff]
        %v517 = vld [vmem:[%s470 + $0x20] sm:$0xff]
        %v518 = vld [vmem:[%s470 + $0x28] sm:$0xff]
        %v519 = vld [vmem:[%s470 + $0x30] sm:$0xff]
        %v520 = vld [vmem:[%s470 + $0x38] sm:$0xff]
        %v521 = vld [vmem:[%s470 + $0x40] sm:$0xff]
        %v522 = vld [vmem:[%s470 + $0x48] sm:$0xff]
        %v523 = vld [vmem:[%s470 + $0x50] sm:$0xff]
        %v524 = vld [vmem:[%s470 + $0x58] sm:$0xff]
        %v525 = vld [vmem:[%s470 + $0x60] sm:$0xff]
        %v526 = vld [vmem:[%s470 + $0x68] sm:$0xff]
        %v527 = vld [vmem:[%s470 + $0x70] sm:$0xff]
        %v528 = vld [vmem:[%s470 + $0x78] sm:$0xff]
        %v529 = vlaneseq
        %v530 = vand.u32 %v529, 127
        %s531 = smul.u32 %s38, 32
        %v532 = vstv %s531
        %v533 = vadd.s32 %v530, %v532
        %534 = vset.pattern.permute.xlu0 0
        %535 = vperm.xlu0 %534, %v513
        %v536 = vpop.permute.xlu0 %535
        %537 = vset.pattern.permute.xlu0 0
        %538 = vperm.xlu0 %537, %v514
        %v539 = vpop.permute.xlu0 %538
        %540 = vset.pattern.permute.xlu0 0
        %541 = vperm.xlu0 %540, %v515
        %v542 = vpop.permute.xlu0 %541
        %543 = vset.pattern.permute.xlu0 0
        %544 = vperm.xlu0 %543, %v516
        %v545 = vpop.permute.xlu0 %544
        %546 = vset.pattern.permute.xlu0 0
        %547 = vperm.xlu0 %546, %v517
        %v548 = vpop.permute.xlu0 %547
        %549 = vset.pattern.permute.xlu0 0
        %550 = vperm.xlu0 %549, %v518
        %v551 = vpop.permute.xlu0 %550
        %552 = vset.pattern.permute.xlu0 0
        %553 = vperm.xlu0 %552, %v519
        %v554 = vpop.permute.xlu0 %553
        %555 = vset.pattern.permute.xlu0 0
        %556 = vperm.xlu0 %555, %v520
        %v557 = vpop.permute.xlu0 %556
        %558 = vset.pattern.permute.xlu0 0
        %559 = vperm.xlu0 %558, %v521
        %v560 = vpop.permute.xlu0 %559
        %561 = vset.pattern.permute.xlu0 0
        %562 = vperm.xlu0 %561, %v522
        %v563 = vpop.permute.xlu0 %562
        %564 = vset.pattern.permute.xlu0 0
        %565 = vperm.xlu0 %564, %v523
        %v566 = vpop.permute.xlu0 %565
        %567 = vset.pattern.permute.xlu0 0
        %568 = vperm.xlu0 %567, %v524
        %v569 = vpop.permute.xlu0 %568
        %570 = vset.pattern.permute.xlu0 0
        %571 = vperm.xlu0 %570, %v525
        %v572 = vpop.permute.xlu0 %571
        %573 = vset.pattern.permute.xlu0 0
        %574 = vperm.xlu0 %573, %v526
        %v575 = vpop.permute.xlu0 %574
        %576 = vset.pattern.permute.xlu0 0
        %577 = vperm.xlu0 %576, %v527
        %v578 = vpop.permute.xlu0 %577
        %579 = vset.pattern.permute.xlu0 0
        %580 = vperm.xlu0 %579, %v528
        %v581 = vpop.permute.xlu0 %580
        %vm582 = vcmp.eq.s32.totalorder %v533, %v536
        %vm583 = vcmp.eq.s32.totalorder %v533, %v539
        %vm584 = vcmp.eq.s32.totalorder %v533, %v542
        %vm585 = vcmp.eq.s32.totalorder %v533, %v545
        %vm586 = vcmp.eq.s32.totalorder %v533, %v548
        %vm587 = vcmp.eq.s32.totalorder %v533, %v551
        %vm588 = vcmp.eq.s32.totalorder %v533, %v554
        %vm589 = vcmp.eq.s32.totalorder %v533, %v557
        %vm590 = vcmp.eq.s32.totalorder %v533, %v560
        %vm591 = vcmp.eq.s32.totalorder %v533, %v563
        %vm592 = vcmp.eq.s32.totalorder %v533, %v566
        %vm593 = vcmp.eq.s32.totalorder %v533, %v569
        %vm594 = vcmp.eq.s32.totalorder %v533, %v572
        %vm595 = vcmp.eq.s32.totalorder %v533, %v575
        %vm596 = vcmp.eq.s32.totalorder %v533, %v578
        %vm597 = vcmp.eq.s32.totalorder %v533, %v581
        %v598 = vsel %vm582, 1, 0
        %v599 = vsel %vm583, 1, 0
        %v600 = vsel %vm584, 1, 0
        %v601 = vsel %vm585, 1, 0
        %v602 = vsel %vm586, 1, 0
        %v603 = vsel %vm587, 1, 0
        %v604 = vsel %vm588, 1, 0
        %v605 = vsel %vm589, 1, 0
        %v606 = vsel %vm590, 1, 0
        %v607 = vsel %vm591, 1, 0
        %v608 = vsel %vm592, 1, 0
        %v609 = vsel %vm593, 1, 0
        %v610 = vsel %vm594, 1, 0
        %v611 = vsel %vm595, 1, 0
        %v612 = vsel %vm596, 1, 0
        %v613 = vsel %vm597, 1, 0
        %v614 = vcvt.s32.f32 %v598
        %v615 = vcvt.s32.f32 %v599
        %v616 = vcvt.s32.f32 %v600
        %v617 = vcvt.s32.f32 %v601
        %v618 = vcvt.s32.f32 %v602
        %v619 = vcvt.s32.f32 %v603
        %v620 = vcvt.s32.f32 %v604
        %v621 = vcvt.s32.f32 %v605
        %v622 = vcvt.s32.f32 %v606
        %v623 = vcvt.s32.f32 %v607
        %v624 = vcvt.s32.f32 %v608
        %v625 = vcvt.s32.f32 %v609
        %v626 = vcvt.s32.f32 %v610
        %v627 = vcvt.s32.f32 %v611
        %v628 = vcvt.s32.f32 %v612
        %v629 = vcvt.s32.f32 %v613
        %s630 = scalar_lea.vmem %s3, %s531
        %v631 = vld [vmem:[%s630] sm:$0xff]
        %v632 = vld [vmem:[%s630 + $0x8] sm:$0xff]
        %v633 = vld [vmem:[%s630 + $0x10] sm:$0xff]
        %v634 = vld [vmem:[%s630 + $0x18] sm:$0xff]
        %vm635 = vcmask 261120
        %v637 = vsel %vm635, %v614, 0
        %v640 = vsel %vm635, %v615, 0
        %v643 = vsel %vm635, %v616, 0
        %v646 = vsel %vm635, %v617, 0
        %v649 = vsel %vm635, %v618, 0
        %v652 = vsel %vm635, %v619, 0
        %v655 = vsel %vm635, %v620, 0
        %v658 = vsel %vm635, %v621, 0
        %v661 = vsel %vm635, %v622, 0
        %v664 = vsel %vm635, %v623, 0
        %v667 = vsel %vm635, %v624, 0
        %v670 = vsel %vm635, %v625, 0
        %v673 = vsel %vm635, %v626, 0
        %v676 = vsel %vm635, %v627, 0
        %v679 = vsel %vm635, %v628, 0
        %v682 = vsel %vm635, %v629, 0
        %684 = vmatprep.subr.mxu0 0.0
        %685 = vmatpush1.msra.mxu0 %v631
        %686 = vmatprep.subr.mxu0 0.0
        %687 = vmatpush1.msra.mxu0 %v632
        %688 = vmatprep.subr.mxu0 0.0
        %689 = vmatpush1.msra.mxu0 %v633
        %690 = vmatprep.subr.mxu0 0.0
        %691 = vmatpush1.msra.mxu0 %v634
        %692 = vmatprep.subr.mxu0 0.0
        %693 = vmatpush1.msra.mxu0 0.0
        %694 = vmatprep.subr.mxu0 0.0
        %695 = vmatpush1.msra.mxu0 0.0
        %696 = vmatprep.subr.mxu0 0.0
        %697 = vmatpush1.msra.mxu0 0.0
        %698 = vmatprep.subr.mxu0 0.0
        %699 = vmatpush1.msra.mxu0 0.0
        %700 = vmatprep.subr.mxu0 0.0
        %701 = vmatpush1.msra.mxu0 0.0
        %702 = vmatprep.subr.mxu0 0.0
        %703 = vmatpush1.msra.mxu0 0.0
        %704 = vmatprep.subr.mxu0 0.0
        %705 = vmatpush1.msra.mxu0 0.0
        %706 = vmatprep.subr.mxu0 0.0
        %707 = vmatpush1.msra.mxu0 0.0
        %708 = vmatprep.subr.mxu0 0.0
        %709 = vmatpush1.msra.mxu0 0.0
        %710 = vmatprep.subr.mxu0 0.0
        %711 = vmatpush1.msra.mxu0 0.0
        %712 = vmatprep.subr.mxu0 0.0
        %713 = vmatpush1.msra.mxu0 0.0
        %714 = vmatprep.subr.mxu0 0.0
        %715 = vmatpush1.msra.mxu0 0.0
        %716 = vmatprep.subr.mxu0 0.0
        %717 = vmatpush1.msra.mxu0 0.0
        %718 = vmatprep.subr.mxu0 0.0
        %719 = vmatpush1.msra.mxu0 0.0
        %720 = vmatprep.subr.mxu0 0.0
        %721 = vmatpush1.msra.mxu0 0.0
        %722 = vmatprep.subr.mxu0 0.0
        %723 = vmatpush1.msra.mxu0 0.0
        %724 = vmatprep.subr.mxu0 0.0
        %725 = vmatpush1.msra.mxu0 0.0
        %726 = vmatprep.subr.mxu0 0.0
        %727 = vmatpush1.msra.mxu0 0.0
        %728 = vmatprep.subr.mxu0 0.0
        %729 = vmatpush1.msra.mxu0 0.0
        %730 = vmatprep.subr.mxu0 0.0
        %731 = vmatpush1.msra.mxu0 0.0
        %732 = vmatprep.subr.mxu0 0.0
        %733 = vmatpush1.msra.mxu0 0.0
        %734 = vmatprep.subr.mxu0 0.0
        %735 = vmatpush1.msra.mxu0 0.0
        %736 = vmatprep.subr.mxu0 0.0
        %737 = vmatpush1.msra.mxu0 0.0
        %738 = vmatprep.subr.mxu0 0.0
        %739 = vmatpush1.msra.mxu0 0.0
        %740 = vmatprep.subr.mxu0 0.0
        %741 = vmatpush1.msra.mxu0 0.0
        %742 = vmatprep.subr.mxu0 0.0
        %743 = vmatpush1.msra.mxu0 0.0
        %744 = vmatprep.subr.mxu0 0.0
        %745 = vmatpush1.msra.mxu0 0.0
        %746 = vmatprep.subr.mxu0 0.0
        %747 = vmatpush1.msra.mxu0 0.0
        %748 = vmatprep.mubr.f32.mxu0 0.0
        %749 = vmatmul.mubr.f32.gmra.mrb[0].mxu0 %v637
        %v750 = vpop.f32.mrb[0].mxu0
        %v751 = vadd.f32 0.0, %v750
        %v752 = vpop.f32.mrb[0].mxu0
        %753 = vmatprep.mubr.f32.mxu0 0.0
        %754 = vmatmul.mubr.f32.gmra.mrb[0].mxu0 %v640
        %v755 = vpop.f32.mrb[0].mxu0
        %v756 = vadd.f32 0.0, %v755
        %v757 = vpop.f32.mrb[0].mxu0
        %758 = vmatprep.mubr.f32.mxu0 0.0
        %759 = vmatmul.mubr.f32.gmra.mrb[0].mxu0 %v643
        %v760 = vpop.f32.mrb[0].mxu0
        %v761 = vadd.f32 0.0, %v760
        %v762 = vpop.f32.mrb[0].mxu0
        %763 = vmatprep.mubr.f32.mxu0 0.0
        %764 = vmatmul.mubr.f32.gmra.mrb[0].mxu0 %v646
        %v765 = vpop.f32.mrb[0].mxu0
        %v766 = vadd.f32 0.0, %v765
        %v767 = vpop.f32.mrb[0].mxu0
        %768 = vmatprep.mubr.f32.mxu0 0.0
        %769 = vmatmul.mubr.f32.gmra.mrb[0].mxu0 %v649
        %v770 = vpop.f32.mrb[0].mxu0
        %v771 = vadd.f32 0.0, %v770
        %v772 = vpop.f32.mrb[0].mxu0
        %773 = vmatprep.mubr.f32.mxu0 0.0
        %774 = vmatmul.mubr.f32.gmra.mrb[0].mxu0 %v652
        %v775 = vpop.f32.mrb[0].mxu0
        %v776 = vadd.f32 0.0, %v775
        %v777 = vpop.f32.mrb[0].mxu0
        %778 = vmatprep.mubr.f32.mxu0 0.0
        %779 = vmatmul.mubr.f32.gmra.mrb[0].mxu0 %v655
        %v780 = vpop.f32.mrb[0].mxu0
        %v781 = vadd.f32 0.0, %v780
        %v782 = vpop.f32.mrb[0].mxu0
        %783 = vmatprep.mubr.f32.mxu0 0.0
        %784 = vmatmul.mubr.f32.gmra.mrb[0].mxu0 %v658
        %v785 = vpop.f32.mrb[0].mxu0
        %v786 = vadd.f32 0.0, %v785
        %v787 = vpop.f32.mrb[0].mxu0
        %788 = vmatprep.mubr.f32.mxu0 0.0
        %789 = vmatmul.mubr.f32.gmra.mrb[0].mxu0 %v661
        %v790 = vpop.f32.mrb[0].mxu0
        %v791 = vadd.f32 0.0, %v790
        %v792 = vpop.f32.mrb[0].mxu0
        %793 = vmatprep.mubr.f32.mxu0 0.0
        %794 = vmatmul.mubr.f32.gmra.mrb[0].mxu0 %v664
        %v795 = vpop.f32.mrb[0].mxu0
        %v796 = vadd.f32 0.0, %v795
        %v797 = vpop.f32.mrb[0].mxu0
        %798 = vmatprep.mubr.f32.mxu0 0.0
        %799 = vmatmul.mubr.f32.gmra.mrb[0].mxu0 %v667
        %v800 = vpop.f32.mrb[0].mxu0
        %v801 = vadd.f32 0.0, %v800
        %v802 = vpop.f32.mrb[0].mxu0
        %803 = vmatprep.mubr.f32.mxu0 0.0
        %804 = vmatmul.mubr.f32.gmra.mrb[0].mxu0 %v670
        %v805 = vpop.f32.mrb[0].mxu0
        %v806 = vadd.f32 0.0, %v805
        %v807 = vpop.f32.mrb[0].mxu0
        %808 = vmatprep.mubr.f32.mxu0 0.0
        %809 = vmatmul.mubr.f32.gmra.mrb[0].mxu0 %v673
        %v810 = vpop.f32.mrb[0].mxu0
        %v811 = vadd.f32 0.0, %v810
        %v812 = vpop.f32.mrb[0].mxu0
        %813 = vmatprep.mubr.f32.mxu0 0.0
        %814 = vmatmul.mubr.f32.gmra.mrb[0].mxu0 %v676
        %v815 = vpop.f32.mrb[0].mxu0
        %v816 = vadd.f32 0.0, %v815
        %v817 = vpop.f32.mrb[0].mxu0
        %818 = vmatprep.mubr.f32.mxu0 0.0
        %819 = vmatmul.mubr.f32.gmra.mrb[0].mxu0 %v679
        %v820 = vpop.f32.mrb[0].mxu0
        %v821 = vadd.f32 0.0, %v820
        %v822 = vpop.f32.mrb[0].mxu0
        %823 = vmatprep.mubr.f32.mxu0 0.0
        %824 = vmatmul.mubr.f32.gmra.mrb[0].mxu0 %v682
        %v825 = vpop.f32.mrb[0].mxu0
        %v826 = vadd.f32 0.0, %v825
        %v827 = vpop.f32.mrb[0].mxu0
        %828 = vdwg.mxu0
        %829 = vset.pattern.permute.xlu0 1
        %830 = vperm.xlu0 %829, %v513
        %v831 = vpop.permute.xlu0 %830
        %832 = vset.pattern.permute.xlu0 1
        %833 = vperm.xlu0 %832, %v514
        %v834 = vpop.permute.xlu0 %833
        %835 = vset.pattern.permute.xlu0 1
        %836 = vperm.xlu0 %835, %v515
        %v837 = vpop.permute.xlu0 %836
        %838 = vset.pattern.permute.xlu0 1
        %839 = vperm.xlu0 %838, %v516
        %v840 = vpop.permute.xlu0 %839
        %841 = vset.pattern.permute.xlu0 1
        %842 = vperm.xlu0 %841, %v517
        %v843 = vpop.permute.xlu0 %842
        %844 = vset.pattern.permute.xlu0 1
        %845 = vperm.xlu0 %844, %v518
        %v846 = vpop.permute.xlu0 %845
        %847 = vset.pattern.permute.xlu0 1
        %848 = vperm.xlu0 %847, %v519
        %v849 = vpop.permute.xlu0 %848
        %850 = vset.pattern.permute.xlu0 1
        %851 = vperm.xlu0 %850, %v520
        %v852 = vpop.permute.xlu0 %851
        %853 = vset.pattern.permute.xlu0 1
        %854 = vperm.xlu0 %853, %v521
        %v855 = vpop.permute.xlu0 %854
        %856 = vset.pattern.permute.xlu0 1
        %857 = vperm.xlu0 %856, %v522
        %v858 = vpop.permute.xlu0 %857
        %859 = vset.pattern.permute.xlu0 1
        %860 = vperm.xlu0 %859, %v523
        %v861 = vpop.permute.xlu0 %860
        %862 = vset.pattern.permute.xlu0 1
        %863 = vperm.xlu0 %862, %v524
        %v864 = vpop.permute.xlu0 %863
        %865 = vset.pattern.permute.xlu0 1
        %866 = vperm.xlu0 %865, %v525
        %v867 = vpop.permute.xlu0 %866
        %868 = vset.pattern.permute.xlu0 1
        %869 = vperm.xlu0 %868, %v526
        %v870 = vpop.permute.xlu0 %869
        %871 = vset.pattern.permute.xlu0 1
        %872 = vperm.xlu0 %871, %v527
        %v873 = vpop.permute.xlu0 %872
        %874 = vset.pattern.permute.xlu0 1
        %875 = vperm.xlu0 %874, %v528
        %v876 = vpop.permute.xlu0 %875
        %vm877 = vcmp.eq.s32.totalorder %v530, %v831
        %vm878 = vcmp.eq.s32.totalorder %v530, %v834
        %vm879 = vcmp.eq.s32.totalorder %v530, %v837
        %vm880 = vcmp.eq.s32.totalorder %v530, %v840
        %vm881 = vcmp.eq.s32.totalorder %v530, %v843
        %vm882 = vcmp.eq.s32.totalorder %v530, %v846
        %vm883 = vcmp.eq.s32.totalorder %v530, %v849
        %vm884 = vcmp.eq.s32.totalorder %v530, %v852
        %vm885 = vcmp.eq.s32.totalorder %v530, %v855
        %vm886 = vcmp.eq.s32.totalorder %v530, %v858
        %vm887 = vcmp.eq.s32.totalorder %v530, %v861
        %vm888 = vcmp.eq.s32.totalorder %v530, %v864
        %vm889 = vcmp.eq.s32.totalorder %v530, %v867
        %vm890 = vcmp.eq.s32.totalorder %v530, %v870
        %vm891 = vcmp.eq.s32.totalorder %v530, %v873
        %vm892 = vcmp.eq.s32.totalorder %v530, %v876
        %v893 = vsel %vm877, 1, 0
        %v894 = vsel %vm878, 1, 0
        %v895 = vsel %vm879, 1, 0
        %v896 = vsel %vm880, 1, 0
        %v897 = vsel %vm881, 1, 0
        %v898 = vsel %vm882, 1, 0
        %v899 = vsel %vm883, 1, 0
        %v900 = vsel %vm884, 1, 0
        %v901 = vsel %vm885, 1, 0
        %v902 = vsel %vm886, 1, 0
        %v903 = vsel %vm887, 1, 0
        %v904 = vsel %vm888, 1, 0
        %v905 = vsel %vm889, 1, 0
        %v906 = vsel %vm890, 1, 0
        %v907 = vsel %vm891, 1, 0
        %v908 = vsel %vm892, 1, 0
        %v909 = vcvt.s32.f32 %v893
        %v910 = vcvt.s32.f32 %v894
        %v911 = vcvt.s32.f32 %v895
        %v912 = vcvt.s32.f32 %v896
        %v913 = vcvt.s32.f32 %v897
        %v914 = vcvt.s32.f32 %v898
        %v915 = vcvt.s32.f32 %v899
        %v916 = vcvt.s32.f32 %v900
        %v917 = vcvt.s32.f32 %v901
        %v918 = vcvt.s32.f32 %v902
        %v919 = vcvt.s32.f32 %v903
        %v920 = vcvt.s32.f32 %v904
        %v921 = vcvt.s32.f32 %v905
        %v922 = vcvt.s32.f32 %v906
        %v923 = vcvt.s32.f32 %v907
        %v924 = vcvt.s32.f32 %v908
        %v925 = vld [vmem:[%s3] sm:$0xff]
        %v926 = vld [vmem:[%s3 + $0x8] sm:$0xff]
        %v927 = vld [vmem:[%s3 + $0x10] sm:$0xff]
        %v928 = vld [vmem:[%s3 + $0x18] sm:$0xff]
        %v929 = vld [vmem:[%s3 + $0x20] sm:$0xff]
        %v930 = vld [vmem:[%s3 + $0x28] sm:$0xff]
        %v931 = vld [vmem:[%s3 + $0x30] sm:$0xff]
        %v932 = vld [vmem:[%s3 + $0x38] sm:$0xff]
        %vm933 = vcmask 523264
        %v935 = vsel %vm933, %v909, 0
        %v938 = vsel %vm933, %v910, 0
        %v941 = vsel %vm933, %v911, 0
        %v944 = vsel %vm933, %v912, 0
        %v947 = vsel %vm933, %v913, 0
        %v950 = vsel %vm933, %v914, 0
        %v953 = vsel %vm933, %v915, 0
        %v956 = vsel %vm933, %v916, 0
        %v959 = vsel %vm933, %v917, 0
        %v962 = vsel %vm933, %v918, 0
        %v965 = vsel %vm933, %v919, 0
        %v968 = vsel %vm933, %v920, 0
        %v971 = vsel %vm933, %v921, 0
        %v974 = vsel %vm933, %v922, 0
        %v977 = vsel %vm933, %v923, 0
        %v980 = vsel %vm933, %v924, 0
        %982 = vmatprep.subr.mxu0 0.0
        %983 = vmatpush1.msra.mxu0 %v925
        %984 = vmatprep.subr.mxu0 0.0
        %985 = vmatpush1.msra.mxu0 %v926
        %986 = vmatprep.subr.mxu0 0.0
        %987 = vmatpush1.msra.mxu0 %v927
        %988 = vmatprep.subr.mxu0 0.0
        %989 = vmatpush1.msra.mxu0 %v928
        %990 = vmatprep.subr.mxu0 0.0
        %991 = vmatpush1.msra.mxu0 %v929
        %992 = vmatprep.subr.mxu0 0.0
        %993 = vmatpush1.msra.mxu0 %v930
        %994 = vmatprep.subr.mxu0 0.0
        %995 = vmatpush1.msra.mxu0 %v931
        %996 = vmatprep.subr.mxu0 0.0
        %997 = vmatpush1.msra.mxu0 %v932
        %998 = vmatprep.subr.mxu0 0.0
        %999 = vmatpush1.msra.mxu0 0.0
        %1000 = vmatprep.subr.mxu0 0.0
        %1001 = vmatpush1.msra.mxu0 0.0
        %1002 = vmatprep.subr.mxu0 0.0
        %1003 = vmatpush1.msra.mxu0 0.0
        %1004 = vmatprep.subr.mxu0 0.0
        %1005 = vmatpush1.msra.mxu0 0.0
        %1006 = vmatprep.subr.mxu0 0.0
        %1007 = vmatpush1.msra.mxu0 0.0
        %1008 = vmatprep.subr.mxu0 0.0
        %1009 = vmatpush1.msra.mxu0 0.0
        %1010 = vmatprep.subr.mxu0 0.0
        %1011 = vmatpush1.msra.mxu0 0.0
        %1012 = vmatprep.subr.mxu0 0.0
        %1013 = vmatpush1.msra.mxu0 0.0
        %1014 = vmatprep.subr.mxu0 0.0
        %1015 = vmatpush1.msra.mxu0 0.0
        %1016 = vmatprep.subr.mxu0 0.0
        %1017 = vmatpush1.msra.mxu0 0.0
        %1018 = vmatprep.subr.mxu0 0.0
        %1019 = vmatpush1.msra.mxu0 0.0
        %1020 = vmatprep.subr.mxu0 0.0
        %1021 = vmatpush1.msra.mxu0 0.0
        %1022 = vmatprep.subr.mxu0 0.0
        %1023 = vmatpush1.msra.mxu0 0.0
        %1024 = vmatprep.subr.mxu0 0.0
        %1025 = vmatpush1.msra.mxu0 0.0
        %1026 = vmatprep.subr.mxu0 0.0
        %1027 = vmatpush1.msra.mxu0 0.0
        %1028 = vmatprep.subr.mxu0 0.0
        %1029 = vmatpush1.msra.mxu0 0.0
        %1030 = vmatprep.subr.mxu0 0.0
        %1031 = vmatpush1.msra.mxu0 0.0
        %1032 = vmatprep.subr.mxu0 0.0
        %1033 = vmatpush1.msra.mxu0 0.0
        %1034 = vmatprep.subr.mxu0 0.0
        %1035 = vmatpush1.msra.mxu0 0.0
        %1036 = vmatprep.subr.mxu0 0.0
        %1037 = vmatpush1.msra.mxu0 0.0
        %1038 = vmatprep.subr.mxu0 0.0
        %1039 = vmatpush1.msra.mxu0 0.0
        %1040 = vmatprep.subr.mxu0 0.0
        %1041 = vmatpush1.msra.mxu0 0.0
        %1042 = vmatprep.subr.mxu0 0.0
        %1043 = vmatpush1.msra.mxu0 0.0
        %1044 = vmatprep.subr.mxu0 0.0
        %1045 = vmatpush1.msra.mxu0 0.0
        %1046 = vmatprep.mubr.f32.mxu0 0.0
        %1047 = vmatmul.mubr.f32.gmra.mrb[0].mxu0 %v935
        %v1048 = vpop.f32.mrb[0].mxu0
        %v1049 = vadd.f32 0.0, %v1048
        %v1050 = vpop.f32.mrb[0].mxu0
        %1051 = vmatprep.mubr.f32.mxu0 0.0
        %1052 = vmatmul.mubr.f32.gmra.mrb[0].mxu0 %v938
        %v1053 = vpop.f32.mrb[0].mxu0
        %v1054 = vadd.f32 0.0, %v1053
        %v1055 = vpop.f32.mrb[0].mxu0
        %1056 = vmatprep.mubr.f32.mxu0 0.0
        %1057 = vmatmul.mubr.f32.gmra.mrb[0].mxu0 %v941
        %v1058 = vpop.f32.mrb[0].mxu0
        %v1059 = vadd.f32 0.0, %v1058
        %v1060 = vpop.f32.mrb[0].mxu0
        %1061 = vmatprep.mubr.f32.mxu0 0.0
        %1062 = vmatmul.mubr.f32.gmra.mrb[0].mxu0 %v944
        %v1063 = vpop.f32.mrb[0].mxu0
        %v1064 = vadd.f32 0.0, %v1063
        %v1065 = vpop.f32.mrb[0].mxu0
        %1066 = vmatprep.mubr.f32.mxu0 0.0
        %1067 = vmatmul.mubr.f32.gmra.mrb[0].mxu0 %v947
        %v1068 = vpop.f32.mrb[0].mxu0
        %v1069 = vadd.f32 0.0, %v1068
        %v1070 = vpop.f32.mrb[0].mxu0
        %1071 = vmatprep.mubr.f32.mxu0 0.0
        %1072 = vmatmul.mubr.f32.gmra.mrb[0].mxu0 %v950
        %v1073 = vpop.f32.mrb[0].mxu0
        %v1074 = vadd.f32 0.0, %v1073
        %v1075 = vpop.f32.mrb[0].mxu0
        %1076 = vmatprep.mubr.f32.mxu0 0.0
        %1077 = vmatmul.mubr.f32.gmra.mrb[0].mxu0 %v953
        %v1078 = vpop.f32.mrb[0].mxu0
        %v1079 = vadd.f32 0.0, %v1078
        %v1080 = vpop.f32.mrb[0].mxu0
        %1081 = vmatprep.mubr.f32.mxu0 0.0
        %1082 = vmatmul.mubr.f32.gmra.mrb[0].mxu0 %v956
        %v1083 = vpop.f32.mrb[0].mxu0
        %v1084 = vadd.f32 0.0, %v1083
        %v1085 = vpop.f32.mrb[0].mxu0
        %1086 = vmatprep.mubr.f32.mxu0 0.0
        %1087 = vmatmul.mubr.f32.gmra.mrb[0].mxu0 %v959
        %v1088 = vpop.f32.mrb[0].mxu0
        %v1089 = vadd.f32 0.0, %v1088
        %v1090 = vpop.f32.mrb[0].mxu0
        %1091 = vmatprep.mubr.f32.mxu0 0.0
        %1092 = vmatmul.mubr.f32.gmra.mrb[0].mxu0 %v962
        %v1093 = vpop.f32.mrb[0].mxu0
        %v1094 = vadd.f32 0.0, %v1093
        %v1095 = vpop.f32.mrb[0].mxu0
        %1096 = vmatprep.mubr.f32.mxu0 0.0
        %1097 = vmatmul.mubr.f32.gmra.mrb[0].mxu0 %v965
        %v1098 = vpop.f32.mrb[0].mxu0
        %v1099 = vadd.f32 0.0, %v1098
        %v1100 = vpop.f32.mrb[0].mxu0
        %1101 = vmatprep.mubr.f32.mxu0 0.0
        %1102 = vmatmul.mubr.f32.gmra.mrb[0].mxu0 %v968
        %v1103 = vpop.f32.mrb[0].mxu0
        %v1104 = vadd.f32 0.0, %v1103
        %v1105 = vpop.f32.mrb[0].mxu0
        %1106 = vmatprep.mubr.f32.mxu0 0.0
        %1107 = vmatmul.mubr.f32.gmra.mrb[0].mxu0 %v971
        %v1108 = vpop.f32.mrb[0].mxu0
        %v1109 = vadd.f32 0.0, %v1108
        %v1110 = vpop.f32.mrb[0].mxu0
        %1111 = vmatprep.mubr.f32.mxu0 0.0
        %1112 = vmatmul.mubr.f32.gmra.mrb[0].mxu0 %v974
        %v1113 = vpop.f32.mrb[0].mxu0
        %v1114 = vadd.f32 0.0, %v1113
        %v1115 = vpop.f32.mrb[0].mxu0
        %1116 = vmatprep.mubr.f32.mxu0 0.0
        %1117 = vmatmul.mubr.f32.gmra.mrb[0].mxu0 %v977
        %v1118 = vpop.f32.mrb[0].mxu0
        %v1119 = vadd.f32 0.0, %v1118
        %v1120 = vpop.f32.mrb[0].mxu0
        %1121 = vmatprep.mubr.f32.mxu0 0.0
        %1122 = vmatmul.mubr.f32.gmra.mrb[0].mxu0 %v980
        %v1123 = vpop.f32.mrb[0].mxu0
        %v1124 = vadd.f32 0.0, %v1123
        %v1125 = vpop.f32.mrb[0].mxu0
        %1126 = vdwg.mxu0
        %v1127 = vsub.f32 %v1049, %v751
        %v1128 = vsub.f32 %v1054, %v756
        %v1129 = vsub.f32 %v1059, %v761
        %v1130 = vsub.f32 %v1064, %v766
        %v1131 = vsub.f32 %v1069, %v771
        %v1132 = vsub.f32 %v1074, %v776
        %v1133 = vsub.f32 %v1079, %v781
        %v1134 = vsub.f32 %v1084, %v786
        %v1135 = vsub.f32 %v1089, %v791
        %v1136 = vsub.f32 %v1094, %v796
        %v1137 = vsub.f32 %v1099, %v801
        %v1138 = vsub.f32 %v1104, %v806
        %v1139 = vsub.f32 %v1109, %v811
        %v1140 = vsub.f32 %v1114, %v816
        %v1141 = vsub.f32 %v1119, %v821
        %v1142 = vsub.f32 %v1124, %v826
        %v1143 = vpack.c.bf16 %v756, %v751
        %v1144 = vpack.c.bf16 %v766, %v761
        %v1145 = vpack.c.bf16 %v776, %v771
        %v1146 = vpack.c.bf16 %v786, %v781
        %v1147 = vpack.c.bf16 %v796, %v791
        %v1148 = vpack.c.bf16 %v806, %v801
        %v1149 = vpack.c.bf16 %v816, %v811
        %v1150 = vpack.c.bf16 %v826, %v821
        %v1151 = vpack.c.bf16 %v1128, %v1127
        %v1152 = vpack.c.bf16 %v1130, %v1129
        %v1153 = vpack.c.bf16 %v1132, %v1131
        %v1154 = vpack.c.bf16 %v1134, %v1133
        %v1155 = vpack.c.bf16 %v1136, %v1135
        %v1156 = vpack.c.bf16 %v1138, %v1137
        %v1157 = vpack.c.bf16 %v1140, %v1139
        %v1158 = vpack.c.bf16 %v1142, %v1141
        %v1159 = vld [vmem:[%s4] sm:$0xf]
        %v1160 = vld [vmem:[%s4 + $0x4] sm:$0xf]
        %v1161 = vld [vmem:[%s4 + $0x8] sm:$0xf]
        %v1162 = vld [vmem:[%s4 + $0xc] sm:$0xf]
        %v1163 = vld [vmem:[%s4 + $0x10] sm:$0xf]
        %v1164 = vld [vmem:[%s4 + $0x14] sm:$0xf]
        %v1165 = vld [vmem:[%s4 + $0x18] sm:$0xf]
        %v1166 = vld [vmem:[%s4 + $0x1c] sm:$0xf]
        %v1167 = vld [vmem:[%s4 + $0x20] sm:$0xf]
        %v1168 = vld [vmem:[%s4 + $0x24] sm:$0xf]
        %v1169 = vld [vmem:[%s4 + $0x28] sm:$0xf]
        %v1170 = vld [vmem:[%s4 + $0x2c] sm:$0xf]
        %v1171 = vld [vmem:[%s4 + $0x30] sm:$0xf]
        %v1172 = vld [vmem:[%s4 + $0x34] sm:$0xf]
        %v1173 = vld [vmem:[%s4 + $0x38] sm:$0xf]
        %v1174 = vld [vmem:[%s4 + $0x3c] sm:$0xf]
        %v1175 = vld [vmem:[%s4 + $0x40] sm:$0xf]
        %v1176 = vld [vmem:[%s4 + $0x44] sm:$0xf]
        %v1177 = vld [vmem:[%s4 + $0x48] sm:$0xf]
        %v1178 = vld [vmem:[%s4 + $0x4c] sm:$0xf]
        %v1179 = vld [vmem:[%s4 + $0x50] sm:$0xf]
        %v1180 = vld [vmem:[%s4 + $0x54] sm:$0xf]
        %v1181 = vld [vmem:[%s4 + $0x58] sm:$0xf]
        %v1182 = vld [vmem:[%s4 + $0x5c] sm:$0xf]
        %v1183 = vld [vmem:[%s4 + $0x60] sm:$0xf]
        %v1184 = vld [vmem:[%s4 + $0x64] sm:$0xf]
        %v1185 = vld [vmem:[%s4 + $0x68] sm:$0xf]
        %v1186 = vld [vmem:[%s4 + $0x6c] sm:$0xf]
        %v1187 = vld [vmem:[%s4 + $0x70] sm:$0xf]
        %v1188 = vld [vmem:[%s4 + $0x74] sm:$0xf]
        %v1189 = vld [vmem:[%s4 + $0x78] sm:$0xf]
        %v1190 = vld [vmem:[%s4 + $0x7c] sm:$0xf]
        %v1207 = vunpack.c.l.b16 %v1175
        %v1208 = vunpack.c.l.b16 %v1176
        %v1209 = vunpack.c.l.b16 %v1177
        %v1210 = vunpack.c.l.b16 %v1178
        %v1211 = vunpack.c.l.b16 %v1179
        %v1212 = vunpack.c.l.b16 %v1180
        %v1213 = vunpack.c.l.b16 %v1181
        %v1214 = vunpack.c.l.b16 %v1182
        %v1215 = vunpack.c.l.b16 %v1183
        %v1216 = vunpack.c.l.b16 %v1184
        %v1217 = vunpack.c.l.b16 %v1185
        %v1218 = vunpack.c.l.b16 %v1186
        %v1219 = vunpack.c.l.b16 %v1187
        %v1220 = vunpack.c.l.b16 %v1188
        %v1221 = vunpack.c.l.b16 %v1189
        %v1222 = vunpack.c.l.b16 %v1190
        %v1223 = vpack.c.b16 %v1208, %v1207
        %v1224 = vpack.c.b16 %v1210, %v1209
        %v1225 = vpack.c.b16 %v1212, %v1211
        %v1226 = vpack.c.b16 %v1214, %v1213
        %v1227 = vpack.c.b16 %v1216, %v1215
        %v1228 = vpack.c.b16 %v1218, %v1217
        %v1229 = vpack.c.b16 %v1220, %v1219
        %v1230 = vpack.c.b16 %v1222, %v1221
        %1239 = vmatprep.subr.bf16.mxu0 0
        %1240 = vmatpush1.bf16.msra.mxu0 %v1223
        %1241 = vmatprep.subr.bf16.mxu0 0
        %1242 = vmatpush1.bf16.msra.mxu0 %v1224
        %1243 = vmatprep.subr.bf16.mxu0 0
        %1244 = vmatpush1.bf16.msra.mxu0 %v1225
        %1245 = vmatprep.subr.bf16.mxu0 0
        %1246 = vmatpush1.bf16.msra.mxu0 %v1226
        %1247 = vmatprep.subr.bf16.mxu0 0
        %1248 = vmatpush1.bf16.msra.mxu0 %v1227
        %1249 = vmatprep.subr.bf16.mxu0 0
        %1250 = vmatpush1.bf16.msra.mxu0 %v1228
        %1251 = vmatprep.subr.bf16.mxu0 0
        %1252 = vmatpush1.bf16.msra.mxu0 %v1229
        %1253 = vmatprep.subr.bf16.mxu0 0
        %1254 = vmatpush1.bf16.msra.mxu0 %v1230
        %1255 = vmatprep.subr.bf16.mxu0 0
        %1256 = vmatpush1.bf16.msra.mxu0 0
        %1257 = vmatprep.subr.bf16.mxu0 0
        %1258 = vmatpush1.bf16.msra.mxu0 0
        %1259 = vmatprep.subr.bf16.mxu0 0
        %1260 = vmatpush1.bf16.msra.mxu0 0
        %1261 = vmatprep.subr.bf16.mxu0 0
        %1262 = vmatpush1.bf16.msra.mxu0 0
        %1263 = vmatprep.subr.bf16.mxu0 0
        %1264 = vmatpush1.bf16.msra.mxu0 0
        %1265 = vmatprep.subr.bf16.mxu0 0
        %1266 = vmatpush1.bf16.msra.mxu0 0
        %1267 = vmatprep.subr.bf16.mxu0 0
        %1268 = vmatpush1.bf16.msra.mxu0 0
        %1269 = vmatprep.subr.bf16.mxu0 0
        %1270 = vmatpush1.bf16.msra.mxu0 0
        %1271 = vmatprep.mubr.bf16.mxu0 0
        %1272 = vmatmul.mubr.bf16.gmra.mrb[0].mxu0 %v1151
        %v1273 = vpop.f32.mrb[0].mxu0
        %v1274 = vadd.f32 0.0, %v1273
        %v1275 = vpop.f32.mrb[0].mxu0
        %v1276 = vpop.f32.mrb[0].mxu0
        %v1277 = vadd.f32 0.0, %v1276
        %v1278 = vpop.f32.mrb[0].mxu0
        %1279 = vmatprep.mubr.bf16.mxu0 0
        %1280 = vmatmul.mubr.bf16.gmra.mrb[0].mxu0 %v1152
        %v1281 = vpop.f32.mrb[0].mxu0
        %v1282 = vadd.f32 0.0, %v1281
        %v1283 = vpop.f32.mrb[0].mxu0
        %v1284 = vpop.f32.mrb[0].mxu0
        %v1285 = vadd.f32 0.0, %v1284
        %v1286 = vpop.f32.mrb[0].mxu0
        %1287 = vmatprep.mubr.bf16.mxu0 0
        %1288 = vmatmul.mubr.bf16.gmra.mrb[0].mxu0 %v1153
        %v1289 = vpop.f32.mrb[0].mxu0
        %v1290 = vadd.f32 0.0, %v1289
        %v1291 = vpop.f32.mrb[0].mxu0
        %v1292 = vpop.f32.mrb[0].mxu0
        %v1293 = vadd.f32 0.0, %v1292
        %v1294 = vpop.f32.mrb[0].mxu0
        %1295 = vmatprep.mubr.bf16.mxu0 0
        %1296 = vmatmul.mubr.bf16.gmra.mrb[0].mxu0 %v1154
        %v1297 = vpop.f32.mrb[0].mxu0
        %v1298 = vadd.f32 0.0, %v1297
        %v1299 = vpop.f32.mrb[0].mxu0
        %v1300 = vpop.f32.mrb[0].mxu0
        %v1301 = vadd.f32 0.0, %v1300
        %v1302 = vpop.f32.mrb[0].mxu0
        %1303 = vmatprep.mubr.bf16.mxu0 0
        %1304 = vmatmul.mubr.bf16.gmra.mrb[0].mxu0 %v1155
        %v1305 = vpop.f32.mrb[0].mxu0
        %v1306 = vadd.f32 0.0, %v1305
        %v1307 = vpop.f32.mrb[0].mxu0
        %v1308 = vpop.f32.mrb[0].mxu0
        %v1309 = vadd.f32 0.0, %v1308
        %v1310 = vpop.f32.mrb[0].mxu0
        %1311 = vmatprep.mubr.bf16.mxu0 0
        %1312 = vmatmul.mubr.bf16.gmra.mrb[0].mxu0 %v1156
        %v1313 = vpop.f32.mrb[0].mxu0
        %v1314 = vadd.f32 0.0, %v1313
        %v1315 = vpop.f32.mrb[0].mxu0
        %v1316 = vpop.f32.mrb[0].mxu0
        %v1317 = vadd.f32 0.0, %v1316
        %v1318 = vpop.f32.mrb[0].mxu0
        %1319 = vmatprep.mubr.bf16.mxu0 0
        %1320 = vmatmul.mubr.bf16.gmra.mrb[0].mxu0 %v1157
        %v1321 = vpop.f32.mrb[0].mxu0
        %v1322 = vadd.f32 0.0, %v1321
        %v1323 = vpop.f32.mrb[0].mxu0
        %v1324 = vpop.f32.mrb[0].mxu0
        %v1325 = vadd.f32 0.0, %v1324
        %v1326 = vpop.f32.mrb[0].mxu0
        %1327 = vmatprep.mubr.bf16.mxu0 0
        %1328 = vmatmul.mubr.bf16.gmra.mrb[0].mxu0 %v1158
        %v1329 = vpop.f32.mrb[0].mxu0
        %v1330 = vadd.f32 0.0, %v1329
        %v1331 = vpop.f32.mrb[0].mxu0
        %v1332 = vpop.f32.mrb[0].mxu0
        %v1333 = vadd.f32 0.0, %v1332
        %v1334 = vpop.f32.mrb[0].mxu0
        %1335 = vdwg.mxu0
        %v1352 = vunpack.c.l.b16 %v1159
        %v1353 = vunpack.c.l.b16 %v1160
        %v1354 = vunpack.c.l.b16 %v1161
        %v1355 = vunpack.c.l.b16 %v1162
        %v1356 = vunpack.c.l.b16 %v1163
        %v1357 = vunpack.c.l.b16 %v1164
        %v1358 = vunpack.c.l.b16 %v1165
        %v1359 = vunpack.c.l.b16 %v1166
        %v1360 = vunpack.c.l.b16 %v1167
        %v1361 = vunpack.c.l.b16 %v1168
        %v1362 = vunpack.c.l.b16 %v1169
        %v1363 = vunpack.c.l.b16 %v1170
        %v1364 = vunpack.c.l.b16 %v1171
        %v1365 = vunpack.c.l.b16 %v1172
        %v1366 = vunpack.c.l.b16 %v1173
        %v1367 = vunpack.c.l.b16 %v1174
        %v1368 = vpack.c.b16 %v1353, %v1352
        %v1369 = vpack.c.b16 %v1355, %v1354
        %v1370 = vpack.c.b16 %v1357, %v1356
        %v1371 = vpack.c.b16 %v1359, %v1358
        %v1372 = vpack.c.b16 %v1361, %v1360
        %v1373 = vpack.c.b16 %v1363, %v1362
        %v1374 = vpack.c.b16 %v1365, %v1364
        %v1375 = vpack.c.b16 %v1367, %v1366
        %1384 = vmatprep.subr.bf16.mxu0 0
        %1385 = vmatpush1.bf16.msra.mxu0 %v1368
        %1386 = vmatprep.subr.bf16.mxu0 0
        %1387 = vmatpush1.bf16.msra.mxu0 %v1369
        %1388 = vmatprep.subr.bf16.mxu0 0
        %1389 = vmatpush1.bf16.msra.mxu0 %v1370
        %1390 = vmatprep.subr.bf16.mxu0 0
        %1391 = vmatpush1.bf16.msra.mxu0 %v1371
        %1392 = vmatprep.subr.bf16.mxu0 0
        %1393 = vmatpush1.bf16.msra.mxu0 %v1372
        %1394 = vmatprep.subr.bf16.mxu0 0
        %1395 = vmatpush1.bf16.msra.mxu0 %v1373
        %1396 = vmatprep.subr.bf16.mxu0 0
        %1397 = vmatpush1.bf16.msra.mxu0 %v1374
        %1398 = vmatprep.subr.bf16.mxu0 0
        %1399 = vmatpush1.bf16.msra.mxu0 %v1375
        %1400 = vmatprep.subr.bf16.mxu0 0
        %1401 = vmatpush1.bf16.msra.mxu0 0
        %1402 = vmatprep.subr.bf16.mxu0 0
        %1403 = vmatpush1.bf16.msra.mxu0 0
        %1404 = vmatprep.subr.bf16.mxu0 0
        %1405 = vmatpush1.bf16.msra.mxu0 0
        %1406 = vmatprep.subr.bf16.mxu0 0
        %1407 = vmatpush1.bf16.msra.mxu0 0
        %1408 = vmatprep.subr.bf16.mxu0 0
        %1409 = vmatpush1.bf16.msra.mxu0 0
        %1410 = vmatprep.subr.bf16.mxu0 0
        %1411 = vmatpush1.bf16.msra.mxu0 0
        %1412 = vmatprep.subr.bf16.mxu0 0
        %1413 = vmatpush1.bf16.msra.mxu0 0
        %1414 = vmatprep.subr.bf16.mxu0 0
        %1415 = vmatpush1.bf16.msra.mxu0 0
        %1416 = vmatprep.mubr.bf16.mxu0 0
        %1417 = vmatmul.mubr.bf16.gmra.mrb[0].mxu0 %v1143
        %v1418 = vpop.f32.mrb[0].mxu0
        %v1419 = vadd.f32 %v1274, %v1418
        %v1420 = vpop.f32.mrb[0].mxu0
        %v1421 = vpop.f32.mrb[0].mxu0
        %v1422 = vadd.f32 %v1277, %v1421
        %v1423 = vpop.f32.mrb[0].mxu0
        %1424 = vmatprep.mubr.bf16.mxu0 0
        %1425 = vmatmul.mubr.bf16.gmra.mrb[0].mxu0 %v1144
        %v1426 = vpop.f32.mrb[0].mxu0
        %v1427 = vadd.f32 %v1282, %v1426
        %v1428 = vpop.f32.mrb[0].mxu0
        %v1429 = vpop.f32.mrb[0].mxu0
        %v1430 = vadd.f32 %v1285, %v1429
        %v1431 = vpop.f32.mrb[0].mxu0
        %1432 = vmatprep.mubr.bf16.mxu0 0
        %1433 = vmatmul.mubr.bf16.gmra.mrb[0].mxu0 %v1145
        %v1434 = vpop.f32.mrb[0].mxu0
        %v1435 = vadd.f32 %v1290, %v1434
        %v1436 = vpop.f32.mrb[0].mxu0
        %v1437 = vpop.f32.mrb[0].mxu0
        %v1438 = vadd.f32 %v1293, %v1437
        %v1439 = vpop.f32.mrb[0].mxu0
        %1440 = vmatprep.mubr.bf16.mxu0 0
        %1441 = vmatmul.mubr.bf16.gmra.mrb[0].mxu0 %v1146
        %v1442 = vpop.f32.mrb[0].mxu0
        %v1443 = vadd.f32 %v1298, %v1442
        %v1444 = vpop.f32.mrb[0].mxu0
        %v1445 = vpop.f32.mrb[0].mxu0
        %v1446 = vadd.f32 %v1301, %v1445
        %v1447 = vpop.f32.mrb[0].mxu0
        %1448 = vmatprep.mubr.bf16.mxu0 0
        %1449 = vmatmul.mubr.bf16.gmra.mrb[0].mxu0 %v1147
        %v1450 = vpop.f32.mrb[0].mxu0
        %v1451 = vadd.f32 %v1306, %v1450
        %v1452 = vpop.f32.mrb[0].mxu0
        %v1453 = vpop.f32.mrb[0].mxu0
        %v1454 = vadd.f32 %v1309, %v1453
        %v1455 = vpop.f32.mrb[0].mxu0
        %1456 = vmatprep.mubr.bf16.mxu0 0
        %1457 = vmatmul.mubr.bf16.gmra.mrb[0].mxu0 %v1148
        %v1458 = vpop.f32.mrb[0].mxu0
        %v1459 = vadd.f32 %v1314, %v1458
        %v1460 = vpop.f32.mrb[0].mxu0
        %v1461 = vpop.f32.mrb[0].mxu0
        %v1462 = vadd.f32 %v1317, %v1461
        %v1463 = vpop.f32.mrb[0].mxu0
        %1464 = vmatprep.mubr.bf16.mxu0 0
        %1465 = vmatmul.mubr.bf16.gmra.mrb[0].mxu0 %v1149
        %v1466 = vpop.f32.mrb[0].mxu0
        %v1467 = vadd.f32 %v1322, %v1466
        %v1468 = vpop.f32.mrb[0].mxu0
        %v1469 = vpop.f32.mrb[0].mxu0
        %v1470 = vadd.f32 %v1325, %v1469
        %v1471 = vpop.f32.mrb[0].mxu0
        %1472 = vmatprep.mubr.bf16.mxu0 0
        %1473 = vmatmul.mubr.bf16.gmra.mrb[0].mxu0 %v1150
        %v1474 = vpop.f32.mrb[0].mxu0
        %v1475 = vadd.f32 %v1330, %v1474
        %v1476 = vpop.f32.mrb[0].mxu0
        %v1477 = vpop.f32.mrb[0].mxu0
        %v1478 = vadd.f32 %v1333, %v1477
        %v1479 = vpop.f32.mrb[0].mxu0
        %1480 = vdwg.mxu0
        %v1481 = vld [vmem:[%s5] sm:$0x1]
        %v1483 = vlaneseq
        %v1484 = vshrl.u32 %v1483, 7
        %v1485 = vsub.s32 0, %v1484
        %v1486 = vrot.slane %v1481, %v1485
        %v1488 = vadd.f32 %v1419, %v1486
        %v1489 = vadd.f32 %v1422, %v1486
        %v1490 = vadd.f32 %v1427, %v1486
        %v1491 = vadd.f32 %v1430, %v1486
        %v1492 = vadd.f32 %v1435, %v1486
        %v1493 = vadd.f32 %v1438, %v1486
        %v1494 = vadd.f32 %v1443, %v1486
        %v1495 = vadd.f32 %v1446, %v1486
        %v1496 = vadd.f32 %v1451, %v1486
        %v1497 = vadd.f32 %v1454, %v1486
        %v1498 = vadd.f32 %v1459, %v1486
        %v1499 = vadd.f32 %v1462, %v1486
        %v1500 = vadd.f32 %v1467, %v1486
        %v1501 = vadd.f32 %v1470, %v1486
        %v1502 = vadd.f32 %v1475, %v1486
        %v1503 = vadd.f32 %v1478, %v1486
        %v1504 = vmax.f32 %v1488, 0.0
        %v1505 = vmax.f32 %v1489, 0.0
        %v1506 = vmax.f32 %v1490, 0.0
        %v1507 = vmax.f32 %v1491, 0.0
        %v1508 = vmax.f32 %v1492, 0.0
        %v1509 = vmax.f32 %v1493, 0.0
        %v1510 = vmax.f32 %v1494, 0.0
        %v1511 = vmax.f32 %v1495, 0.0
        %v1512 = vmax.f32 %v1496, 0.0
        %v1513 = vmax.f32 %v1497, 0.0
        %v1514 = vmax.f32 %v1498, 0.0
        %v1515 = vmax.f32 %v1499, 0.0
        %v1516 = vmax.f32 %v1500, 0.0
        %v1517 = vmax.f32 %v1501, 0.0
        %v1518 = vmax.f32 %v1502, 0.0
        %v1519 = vmax.f32 %v1503, 0.0
        %v1520 = vpack.c.bf16 %v1505, %v1504
        %v1521 = vpack.c.bf16 %v1507, %v1506
        %v1522 = vpack.c.bf16 %v1509, %v1508
        %v1523 = vpack.c.bf16 %v1511, %v1510
        %v1524 = vpack.c.bf16 %v1513, %v1512
        %v1525 = vpack.c.bf16 %v1515, %v1514
        %v1526 = vpack.c.bf16 %v1517, %v1516
        %v1527 = vpack.c.bf16 %v1519, %v1518
        %v1528 = vld [vmem:[%s6] sm:$0xf]
        %v1529 = vld [vmem:[%s6 + $0x4] sm:$0xf]
        %v1530 = vld [vmem:[%s6 + $0x8] sm:$0xf]
        %v1531 = vld [vmem:[%s6 + $0xc] sm:$0xf]
        %v1532 = vld [vmem:[%s6 + $0x10] sm:$0xf]
        %v1533 = vld [vmem:[%s6 + $0x14] sm:$0xf]
        %v1534 = vld [vmem:[%s6 + $0x18] sm:$0xf]
        %v1535 = vld [vmem:[%s6 + $0x1c] sm:$0xf]
        %v1536 = vld [vmem:[%s6 + $0x20] sm:$0xf]
        %v1537 = vld [vmem:[%s6 + $0x24] sm:$0xf]
        %v1538 = vld [vmem:[%s6 + $0x28] sm:$0xf]
        %v1539 = vld [vmem:[%s6 + $0x2c] sm:$0xf]
        %v1540 = vld [vmem:[%s6 + $0x30] sm:$0xf]
        %v1541 = vld [vmem:[%s6 + $0x34] sm:$0xf]
        %v1542 = vld [vmem:[%s6 + $0x38] sm:$0xf]
        %v1543 = vld [vmem:[%s6 + $0x3c] sm:$0xf]
        %v1544 = vld [vmem:[%s7] sm:$0x1]
        %v1546 = vlaneseq
        %v1547 = vshrl.u32 %v1546, 7
        %v1548 = vsub.s32 0, %v1547
        %v1549 = vrot.slane %v1544, %v1548
        %v1567 = vunpack.c.l.b16 %v1528
        %v1568 = vunpack.c.l.b16 %v1529
        %v1569 = vunpack.c.l.b16 %v1530
        %v1570 = vunpack.c.l.b16 %v1531
        %v1571 = vunpack.c.l.b16 %v1532
        %v1572 = vunpack.c.l.b16 %v1533
        %v1573 = vunpack.c.l.b16 %v1534
        %v1574 = vunpack.c.l.b16 %v1535
        %v1575 = vunpack.c.l.b16 %v1536
        %v1576 = vunpack.c.l.b16 %v1537
        %v1577 = vunpack.c.l.b16 %v1538
        %v1578 = vunpack.c.l.b16 %v1539
        %v1579 = vunpack.c.l.b16 %v1540
        %v1580 = vunpack.c.l.b16 %v1541
        %v1581 = vunpack.c.l.b16 %v1542
        %v1582 = vunpack.c.l.b16 %v1543
        %v1583 = vpack.c.b16 %v1568, %v1567
        %v1584 = vpack.c.b16 %v1570, %v1569
        %v1585 = vpack.c.b16 %v1572, %v1571
        %v1586 = vpack.c.b16 %v1574, %v1573
        %v1587 = vpack.c.b16 %v1576, %v1575
        %v1588 = vpack.c.b16 %v1578, %v1577
        %v1589 = vpack.c.b16 %v1580, %v1579
        %v1590 = vpack.c.b16 %v1582, %v1581
        %1599 = vmatprep.subr.bf16.mxu0 0
        %1600 = vmatpush1.bf16.msra.mxu0 %v1583
        %1601 = vmatprep.subr.bf16.mxu0 0
        %1602 = vmatpush1.bf16.msra.mxu0 %v1584
        %1603 = vmatprep.subr.bf16.mxu0 0
        %1604 = vmatpush1.bf16.msra.mxu0 %v1585
        %1605 = vmatprep.subr.bf16.mxu0 0
        %1606 = vmatpush1.bf16.msra.mxu0 %v1586
        %1607 = vmatprep.subr.bf16.mxu0 0
        %1608 = vmatpush1.bf16.msra.mxu0 %v1587
        %1609 = vmatprep.subr.bf16.mxu0 0
        %1610 = vmatpush1.bf16.msra.mxu0 %v1588
        %1611 = vmatprep.subr.bf16.mxu0 0
        %1612 = vmatpush1.bf16.msra.mxu0 %v1589
        %1613 = vmatprep.subr.bf16.mxu0 0
        %1614 = vmatpush1.bf16.msra.mxu0 %v1590
        %1615 = vmatprep.subr.bf16.mxu0 0
        %1616 = vmatpush1.bf16.msra.mxu0 0
        %1617 = vmatprep.subr.bf16.mxu0 0
        %1618 = vmatpush1.bf16.msra.mxu0 0
        %1619 = vmatprep.subr.bf16.mxu0 0
        %1620 = vmatpush1.bf16.msra.mxu0 0
        %1621 = vmatprep.subr.bf16.mxu0 0
        %1622 = vmatpush1.bf16.msra.mxu0 0
        %1623 = vmatprep.subr.bf16.mxu0 0
        %1624 = vmatpush1.bf16.msra.mxu0 0
        %1625 = vmatprep.subr.bf16.mxu0 0
        %1626 = vmatpush1.bf16.msra.mxu0 0
        %1627 = vmatprep.subr.bf16.mxu0 0
        %1628 = vmatpush1.bf16.msra.mxu0 0
        %1629 = vmatprep.subr.bf16.mxu0 0
        %1630 = vmatpush1.bf16.msra.mxu0 0
        %1631 = vmatprep.mubr.bf16.mxu0 0
        %1632 = vmatmul.mubr.bf16.gmra.mrb[0].mxu0 %v1520
        %v1633 = vpop.f32.mrb[0].mxu0
        %v1634 = vadd.f32 %v1549, %v1633
        %v1635 = vpop.f32.mrb[0].mxu0
        %v1636 = vpop.f32.mrb[0].mxu0
        %v1637 = vadd.f32 %v1549, %v1636
        %v1638 = vpop.f32.mrb[0].mxu0
        %1639 = vmatprep.mubr.bf16.mxu0 0
        %1640 = vmatmul.mubr.bf16.gmra.mrb[0].mxu0 %v1521
        %v1641 = vpop.f32.mrb[0].mxu0
        %v1642 = vadd.f32 %v1549, %v1641
        %v1643 = vpop.f32.mrb[0].mxu0
        %v1644 = vpop.f32.mrb[0].mxu0
        %v1645 = vadd.f32 %v1549, %v1644
        %v1646 = vpop.f32.mrb[0].mxu0
        %1647 = vmatprep.mubr.bf16.mxu0 0
        %1648 = vmatmul.mubr.bf16.gmra.mrb[0].mxu0 %v1522
        %v1649 = vpop.f32.mrb[0].mxu0
        %v1650 = vadd.f32 %v1549, %v1649
        %v1651 = vpop.f32.mrb[0].mxu0
        %v1652 = vpop.f32.mrb[0].mxu0
        %v1653 = vadd.f32 %v1549, %v1652
        %v1654 = vpop.f32.mrb[0].mxu0
        %1655 = vmatprep.mubr.bf16.mxu0 0
        %1656 = vmatmul.mubr.bf16.gmra.mrb[0].mxu0 %v1523
        %v1657 = vpop.f32.mrb[0].mxu0
        %v1658 = vadd.f32 %v1549, %v1657
        %v1659 = vpop.f32.mrb[0].mxu0
        %v1660 = vpop.f32.mrb[0].mxu0
        %v1661 = vadd.f32 %v1549, %v1660
        %v1662 = vpop.f32.mrb[0].mxu0
        %1663 = vmatprep.mubr.bf16.mxu0 0
        %1664 = vmatmul.mubr.bf16.gmra.mrb[0].mxu0 %v1524
        %v1665 = vpop.f32.mrb[0].mxu0
        %v1666 = vadd.f32 %v1549, %v1665
        %v1667 = vpop.f32.mrb[0].mxu0
        %v1668 = vpop.f32.mrb[0].mxu0
        %v1669 = vadd.f32 %v1549, %v1668
        %v1670 = vpop.f32.mrb[0].mxu0
        %1671 = vmatprep.mubr.bf16.mxu0 0
        %1672 = vmatmul.mubr.bf16.gmra.mrb[0].mxu0 %v1525
        %v1673 = vpop.f32.mrb[0].mxu0
        %v1674 = vadd.f32 %v1549, %v1673
        %v1675 = vpop.f32.mrb[0].mxu0
        %v1676 = vpop.f32.mrb[0].mxu0
        %v1677 = vadd.f32 %v1549, %v1676
        %v1678 = vpop.f32.mrb[0].mxu0
        %1679 = vmatprep.mubr.bf16.mxu0 0
        %1680 = vmatmul.mubr.bf16.gmra.mrb[0].mxu0 %v1526
        %v1681 = vpop.f32.mrb[0].mxu0
        %v1682 = vadd.f32 %v1549, %v1681
        %v1683 = vpop.f32.mrb[0].mxu0
        %v1684 = vpop.f32.mrb[0].mxu0
        %v1685 = vadd.f32 %v1549, %v1684
        %v1686 = vpop.f32.mrb[0].mxu0
        %1687 = vmatprep.mubr.bf16.mxu0 0
        %1688 = vmatmul.mubr.bf16.gmra.mrb[0].mxu0 %v1527
        %v1689 = vpop.f32.mrb[0].mxu0
        %v1690 = vadd.f32 %v1549, %v1689
        %v1691 = vpop.f32.mrb[0].mxu0
        %v1692 = vpop.f32.mrb[0].mxu0
        %v1693 = vadd.f32 %v1549, %v1692
        %v1694 = vpop.f32.mrb[0].mxu0
        %1695 = vdwg.mxu0
        %1696 = vset.pattern.permute.xlu0 0
        %1697 = vperm.xlu0 %1696, %v598
        %v1698 = vpop.permute.xlu0 %1697
        %1699 = vset.pattern.permute.xlu0 0
        %1700 = vperm.xlu0 %1699, %v599
        %v1701 = vpop.permute.xlu0 %1700
        %1702 = vset.pattern.permute.xlu0 0
        %1703 = vperm.xlu0 %1702, %v600
        %v1704 = vpop.permute.xlu0 %1703
        %1705 = vset.pattern.permute.xlu0 0
        %1706 = vperm.xlu0 %1705, %v601
        %v1707 = vpop.permute.xlu0 %1706
        %1708 = vset.pattern.permute.xlu0 0
        %1709 = vperm.xlu0 %1708, %v602
        %v1710 = vpop.permute.xlu0 %1709
        %1711 = vset.pattern.permute.xlu0 0
        %1712 = vperm.xlu0 %1711, %v603
        %v1713 = vpop.permute.xlu0 %1712
        %1714 = vset.pattern.permute.xlu0 0
        %1715 = vperm.xlu0 %1714, %v604
        %v1716 = vpop.permute.xlu0 %1715
        %1717 = vset.pattern.permute.xlu0 0
        %1718 = vperm.xlu0 %1717, %v605
        %v1719 = vpop.permute.xlu0 %1718
        %1720 = vset.pattern.permute.xlu0 0
        %1721 = vperm.xlu0 %1720, %v606
        %v1722 = vpop.permute.xlu0 %1721
        %1723 = vset.pattern.permute.xlu0 0
        %1724 = vperm.xlu0 %1723, %v607
        %v1725 = vpop.permute.xlu0 %1724
        %1726 = vset.pattern.permute.xlu0 0
        %1727 = vperm.xlu0 %1726, %v608
        %v1728 = vpop.permute.xlu0 %1727
        %1729 = vset.pattern.permute.xlu0 0
        %1730 = vperm.xlu0 %1729, %v609
        %v1731 = vpop.permute.xlu0 %1730
        %1732 = vset.pattern.permute.xlu0 0
        %1733 = vperm.xlu0 %1732, %v610
        %v1734 = vpop.permute.xlu0 %1733
        %1735 = vset.pattern.permute.xlu0 0
        %1736 = vperm.xlu0 %1735, %v611
        %v1737 = vpop.permute.xlu0 %1736
        %1738 = vset.pattern.permute.xlu0 0
        %1739 = vperm.xlu0 %1738, %v612
        %v1740 = vpop.permute.xlu0 %1739
        %1741 = vset.pattern.permute.xlu0 0
        %1742 = vperm.xlu0 %1741, %v613
        %v1743 = vpop.permute.xlu0 %1742
        %vm1744 = vcmp.eq.s32.totalorder %v1698, 1
        %vm1745 = vcmp.eq.s32.totalorder %v1701, 1
        %vm1746 = vcmp.eq.s32.totalorder %v1704, 1
        %vm1747 = vcmp.eq.s32.totalorder %v1707, 1
        %vm1748 = vcmp.eq.s32.totalorder %v1710, 1
        %vm1749 = vcmp.eq.s32.totalorder %v1713, 1
        %vm1750 = vcmp.eq.s32.totalorder %v1716, 1
        %vm1751 = vcmp.eq.s32.totalorder %v1719, 1
        %vm1752 = vcmp.eq.s32.totalorder %v1722, 1
        %vm1753 = vcmp.eq.s32.totalorder %v1725, 1
        %vm1754 = vcmp.eq.s32.totalorder %v1728, 1
        %vm1755 = vcmp.eq.s32.totalorder %v1731, 1
        %vm1756 = vcmp.eq.s32.totalorder %v1734, 1
        %vm1757 = vcmp.eq.s32.totalorder %v1737, 1
        %vm1758 = vcmp.eq.s32.totalorder %v1740, 1
        %vm1759 = vcmp.eq.s32.totalorder %v1743, 1
        %v1760 = vsel %vm1744, %v1634, -1e+30
        %v1761 = vsel %vm1745, %v1637, -1e+30
        %v1762 = vsel %vm1746, %v1642, -1e+30
        %v1763 = vsel %vm1747, %v1645, -1e+30
        %v1764 = vsel %vm1748, %v1650, -1e+30
        %v1765 = vsel %vm1749, %v1653, -1e+30
        %v1766 = vsel %vm1750, %v1658, -1e+30
        %v1767 = vsel %vm1751, %v1661, -1e+30
        %v1768 = vsel %vm1752, %v1666, -1e+30
        %v1769 = vsel %vm1753, %v1669, -1e+30
        %v1770 = vsel %vm1754, %v1674, -1e+30
        %v1771 = vsel %vm1755, %v1677, -1e+30
        %v1772 = vsel %vm1756, %v1682, -1e+30
        %v1773 = vsel %vm1757, %v1685, -1e+30
        %v1774 = vsel %vm1758, %v1690, -1e+30
        %v1775 = vsel %vm1759, %v1693, -1e+30
        %v1776 = vmax.f32 %v1760, %v1764
        %v1777 = vmax.f32 %v1761, %v1765
        %v1778 = vmax.f32 %v1762, %v1766
        %v1779 = vmax.f32 %v1763, %v1767
        %v1780 = vmax.f32 %v1776, %v1768
        %v1781 = vmax.f32 %v1777, %v1769
        %v1782 = vmax.f32 %v1778, %v1770
        %v1783 = vmax.f32 %v1779, %v1771
        %v1784 = vmax.f32 %v1780, %v1772
        %v1785 = vmax.f32 %v1781, %v1773
        %v1786 = vmax.f32 %v1782, %v1774
        %v1787 = vmax.f32 %v1783, %v1775
        %v1788 = vmax.f32 %v1784, %v1785
        %v1789 = vmax.f32 %v1786, %v1787
        %v1790 = vmax.f32 %v1788, %v1789
        %v1791 = vrot.slane %v1790, 4
        %v1792 = vmax.f32 %v1790, %v1791
        %v1793 = vrot.slane %v1792, 2
        %v1794 = vmax.f32 %v1792, %v1793
        %v1795 = vrot.slane %v1794, 1
        %v1796 = vmax.f32 %v1794, %v1795
        %1797 = vset.pattern.permute.xlu0 1
        %1798 = vperm.xlu0 %1797, %v598
        %v1799 = vpop.permute.xlu0 %1798
        %1800 = vset.pattern.permute.xlu0 1
        %1801 = vperm.xlu0 %1800, %v599
        %v1802 = vpop.permute.xlu0 %1801
        %1803 = vset.pattern.permute.xlu0 1
        %1804 = vperm.xlu0 %1803, %v600
        %v1805 = vpop.permute.xlu0 %1804
        %1806 = vset.pattern.permute.xlu0 1
        %1807 = vperm.xlu0 %1806, %v601
        %v1808 = vpop.permute.xlu0 %1807
        %1809 = vset.pattern.permute.xlu0 1
        %1810 = vperm.xlu0 %1809, %v602
        %v1811 = vpop.permute.xlu0 %1810
        %1812 = vset.pattern.permute.xlu0 1
        %1813 = vperm.xlu0 %1812, %v603
        %v1814 = vpop.permute.xlu0 %1813
        %1815 = vset.pattern.permute.xlu0 1
        %1816 = vperm.xlu0 %1815, %v604
        %v1817 = vpop.permute.xlu0 %1816
        %1818 = vset.pattern.permute.xlu0 1
        %1819 = vperm.xlu0 %1818, %v605
        %v1820 = vpop.permute.xlu0 %1819
        %1821 = vset.pattern.permute.xlu0 1
        %1822 = vperm.xlu0 %1821, %v606
        %v1823 = vpop.permute.xlu0 %1822
        %1824 = vset.pattern.permute.xlu0 1
        %1825 = vperm.xlu0 %1824, %v607
        %v1826 = vpop.permute.xlu0 %1825
        %1827 = vset.pattern.permute.xlu0 1
        %1828 = vperm.xlu0 %1827, %v608
        %v1829 = vpop.permute.xlu0 %1828
        %1830 = vset.pattern.permute.xlu0 1
        %1831 = vperm.xlu0 %1830, %v609
        %v1832 = vpop.permute.xlu0 %1831
        %1833 = vset.pattern.permute.xlu0 1
        %1834 = vperm.xlu0 %1833, %v610
        %v1835 = vpop.permute.xlu0 %1834
        %1836 = vset.pattern.permute.xlu0 1
        %1837 = vperm.xlu0 %1836, %v611
        %v1838 = vpop.permute.xlu0 %1837
        %1839 = vset.pattern.permute.xlu0 1
        %1840 = vperm.xlu0 %1839, %v612
        %v1841 = vpop.permute.xlu0 %1840
        %1842 = vset.pattern.permute.xlu0 1
        %1843 = vperm.xlu0 %1842, %v613
        %v1844 = vpop.permute.xlu0 %1843
        %vm1845 = vcmp.eq.s32.totalorder %v1799, 1
        %vm1846 = vcmp.eq.s32.totalorder %v1802, 1
        %vm1847 = vcmp.eq.s32.totalorder %v1805, 1
        %vm1848 = vcmp.eq.s32.totalorder %v1808, 1
        %vm1849 = vcmp.eq.s32.totalorder %v1811, 1
        %vm1850 = vcmp.eq.s32.totalorder %v1814, 1
        %vm1851 = vcmp.eq.s32.totalorder %v1817, 1
        %vm1852 = vcmp.eq.s32.totalorder %v1820, 1
        %vm1853 = vcmp.eq.s32.totalorder %v1823, 1
        %vm1854 = vcmp.eq.s32.totalorder %v1826, 1
        %vm1855 = vcmp.eq.s32.totalorder %v1829, 1
        %vm1856 = vcmp.eq.s32.totalorder %v1832, 1
        %vm1857 = vcmp.eq.s32.totalorder %v1835, 1
        %vm1858 = vcmp.eq.s32.totalorder %v1838, 1
        %vm1859 = vcmp.eq.s32.totalorder %v1841, 1
        %vm1860 = vcmp.eq.s32.totalorder %v1844, 1
        %v1861 = vsel %vm1845, %v1634, -1e+30
        %v1862 = vsel %vm1846, %v1637, -1e+30
        %v1863 = vsel %vm1847, %v1642, -1e+30
        %v1864 = vsel %vm1848, %v1645, -1e+30
        %v1865 = vsel %vm1849, %v1650, -1e+30
        %v1866 = vsel %vm1850, %v1653, -1e+30
        %v1867 = vsel %vm1851, %v1658, -1e+30
        %v1868 = vsel %vm1852, %v1661, -1e+30
        %v1869 = vsel %vm1853, %v1666, -1e+30
        %v1870 = vsel %vm1854, %v1669, -1e+30
        %v1871 = vsel %vm1855, %v1674, -1e+30
        %v1872 = vsel %vm1856, %v1677, -1e+30
        %v1873 = vsel %vm1857, %v1682, -1e+30
        %v1874 = vsel %vm1858, %v1685, -1e+30
        %v1875 = vsel %vm1859, %v1690, -1e+30
        %v1876 = vsel %vm1860, %v1693, -1e+30
        %v1877 = vmax.f32 %v1861, %v1865
        %v1878 = vmax.f32 %v1862, %v1866
        %v1879 = vmax.f32 %v1863, %v1867
        %v1880 = vmax.f32 %v1864, %v1868
        %v1881 = vmax.f32 %v1877, %v1869
        %v1882 = vmax.f32 %v1878, %v1870
        %v1883 = vmax.f32 %v1879, %v1871
        %v1884 = vmax.f32 %v1880, %v1872
        %v1885 = vmax.f32 %v1881, %v1873
        %v1886 = vmax.f32 %v1882, %v1874
        %v1887 = vmax.f32 %v1883, %v1875
        %v1888 = vmax.f32 %v1884, %v1876
        %v1889 = vmax.f32 %v1885, %v1886
        %v1890 = vmax.f32 %v1887, %v1888
        %v1891 = vmax.f32 %v1889, %v1890
        %v1892 = vrot.slane %v1891, 4
        %v1893 = vmax.f32 %v1891, %v1892
        %v1894 = vrot.slane %v1893, 2
        %v1895 = vmax.f32 %v1893, %v1894
        %v1896 = vrot.slane %v1895, 1
        %v1897 = vmax.f32 %v1895, %v1896
        %1898 = vset.pattern.permute.xlu0 2
        %1899 = vperm.xlu0 %1898, %v598
        %v1900 = vpop.permute.xlu0 %1899
        %1901 = vset.pattern.permute.xlu0 2
        %1902 = vperm.xlu0 %1901, %v599
        %v1903 = vpop.permute.xlu0 %1902
        %1904 = vset.pattern.permute.xlu0 2
        %1905 = vperm.xlu0 %1904, %v600
        %v1906 = vpop.permute.xlu0 %1905
        %1907 = vset.pattern.permute.xlu0 2
        %1908 = vperm.xlu0 %1907, %v601
        %v1909 = vpop.permute.xlu0 %1908
        %1910 = vset.pattern.permute.xlu0 2
        %1911 = vperm.xlu0 %1910, %v602
        %v1912 = vpop.permute.xlu0 %1911
        %1913 = vset.pattern.permute.xlu0 2
        %1914 = vperm.xlu0 %1913, %v603
        %v1915 = vpop.permute.xlu0 %1914
        %1916 = vset.pattern.permute.xlu0 2
        %1917 = vperm.xlu0 %1916, %v604
        %v1918 = vpop.permute.xlu0 %1917
        %1919 = vset.pattern.permute.xlu0 2
        %1920 = vperm.xlu0 %1919, %v605
        %v1921 = vpop.permute.xlu0 %1920
        %1922 = vset.pattern.permute.xlu0 2
        %1923 = vperm.xlu0 %1922, %v606
        %v1924 = vpop.permute.xlu0 %1923
        %1925 = vset.pattern.permute.xlu0 2
        %1926 = vperm.xlu0 %1925, %v607
        %v1927 = vpop.permute.xlu0 %1926
        %1928 = vset.pattern.permute.xlu0 2
        %1929 = vperm.xlu0 %1928, %v608
        %v1930 = vpop.permute.xlu0 %1929
        %1931 = vset.pattern.permute.xlu0 2
        %1932 = vperm.xlu0 %1931, %v609
        %v1933 = vpop.permute.xlu0 %1932
        %1934 = vset.pattern.permute.xlu0 2
        %1935 = vperm.xlu0 %1934, %v610
        %v1936 = vpop.permute.xlu0 %1935
        %1937 = vset.pattern.permute.xlu0 2
        %1938 = vperm.xlu0 %1937, %v611
        %v1939 = vpop.permute.xlu0 %1938
        %1940 = vset.pattern.permute.xlu0 2
        %1941 = vperm.xlu0 %1940, %v612
        %v1942 = vpop.permute.xlu0 %1941
        %1943 = vset.pattern.permute.xlu0 2
        %1944 = vperm.xlu0 %1943, %v613
        %v1945 = vpop.permute.xlu0 %1944
        %vm1946 = vcmp.eq.s32.totalorder %v1900, 1
        %vm1947 = vcmp.eq.s32.totalorder %v1903, 1
        %vm1948 = vcmp.eq.s32.totalorder %v1906, 1
        %vm1949 = vcmp.eq.s32.totalorder %v1909, 1
        %vm1950 = vcmp.eq.s32.totalorder %v1912, 1
        %vm1951 = vcmp.eq.s32.totalorder %v1915, 1
        %vm1952 = vcmp.eq.s32.totalorder %v1918, 1
        %vm1953 = vcmp.eq.s32.totalorder %v1921, 1
        %vm1954 = vcmp.eq.s32.totalorder %v1924, 1
        %vm1955 = vcmp.eq.s32.totalorder %v1927, 1
        %vm1956 = vcmp.eq.s32.totalorder %v1930, 1
        %vm1957 = vcmp.eq.s32.totalorder %v1933, 1
        %vm1958 = vcmp.eq.s32.totalorder %v1936, 1
        %vm1959 = vcmp.eq.s32.totalorder %v1939, 1
        %vm1960 = vcmp.eq.s32.totalorder %v1942, 1
        %vm1961 = vcmp.eq.s32.totalorder %v1945, 1
        %v1962 = vsel %vm1946, %v1634, -1e+30
        %v1963 = vsel %vm1947, %v1637, -1e+30
        %v1964 = vsel %vm1948, %v1642, -1e+30
        %v1965 = vsel %vm1949, %v1645, -1e+30
        %v1966 = vsel %vm1950, %v1650, -1e+30
        %v1967 = vsel %vm1951, %v1653, -1e+30
        %v1968 = vsel %vm1952, %v1658, -1e+30
        %v1969 = vsel %vm1953, %v1661, -1e+30
        %v1970 = vsel %vm1954, %v1666, -1e+30
        %v1971 = vsel %vm1955, %v1669, -1e+30
        %v1972 = vsel %vm1956, %v1674, -1e+30
        %v1973 = vsel %vm1957, %v1677, -1e+30
        %v1974 = vsel %vm1958, %v1682, -1e+30
        %v1975 = vsel %vm1959, %v1685, -1e+30
        %v1976 = vsel %vm1960, %v1690, -1e+30
        %v1977 = vsel %vm1961, %v1693, -1e+30
        %v1978 = vmax.f32 %v1962, %v1966
        %v1979 = vmax.f32 %v1963, %v1967
        %v1980 = vmax.f32 %v1964, %v1968
        %v1981 = vmax.f32 %v1965, %v1969
        %v1982 = vmax.f32 %v1978, %v1970
        %v1983 = vmax.f32 %v1979, %v1971
        %v1984 = vmax.f32 %v1980, %v1972
        %v1985 = vmax.f32 %v1981, %v1973
        %v1986 = vmax.f32 %v1982, %v1974
        %v1987 = vmax.f32 %v1983, %v1975
        %v1988 = vmax.f32 %v1984, %v1976
        %v1989 = vmax.f32 %v1985, %v1977
        %v1990 = vmax.f32 %v1986, %v1987
        %v1991 = vmax.f32 %v1988, %v1989
        %v1992 = vmax.f32 %v1990, %v1991
        %v1993 = vrot.slane %v1992, 4
        %v1994 = vmax.f32 %v1992, %v1993
        %v1995 = vrot.slane %v1994, 2
        %v1996 = vmax.f32 %v1994, %v1995
        %v1997 = vrot.slane %v1996, 1
        %v1998 = vmax.f32 %v1996, %v1997
        %1999 = vset.pattern.permute.xlu0 3
        %2000 = vperm.xlu0 %1999, %v598
        %v2001 = vpop.permute.xlu0 %2000
        %2002 = vset.pattern.permute.xlu0 3
        %2003 = vperm.xlu0 %2002, %v599
        %v2004 = vpop.permute.xlu0 %2003
        %2005 = vset.pattern.permute.xlu0 3
        %2006 = vperm.xlu0 %2005, %v600
        %v2007 = vpop.permute.xlu0 %2006
        %2008 = vset.pattern.permute.xlu0 3
        %2009 = vperm.xlu0 %2008, %v601
        %v2010 = vpop.permute.xlu0 %2009
        %2011 = vset.pattern.permute.xlu0 3
        %2012 = vperm.xlu0 %2011, %v602
        %v2013 = vpop.permute.xlu0 %2012
        %2014 = vset.pattern.permute.xlu0 3
        %2015 = vperm.xlu0 %2014, %v603
        %v2016 = vpop.permute.xlu0 %2015
        %2017 = vset.pattern.permute.xlu0 3
        %2018 = vperm.xlu0 %2017, %v604
        %v2019 = vpop.permute.xlu0 %2018
        %2020 = vset.pattern.permute.xlu0 3
        %2021 = vperm.xlu0 %2020, %v605
        %v2022 = vpop.permute.xlu0 %2021
        %2023 = vset.pattern.permute.xlu0 3
        %2024 = vperm.xlu0 %2023, %v606
        %v2025 = vpop.permute.xlu0 %2024
        %2026 = vset.pattern.permute.xlu0 3
        %2027 = vperm.xlu0 %2026, %v607
        %v2028 = vpop.permute.xlu0 %2027
        %2029 = vset.pattern.permute.xlu0 3
        %2030 = vperm.xlu0 %2029, %v608
        %v2031 = vpop.permute.xlu0 %2030
        %2032 = vset.pattern.permute.xlu0 3
        %2033 = vperm.xlu0 %2032, %v609
        %v2034 = vpop.permute.xlu0 %2033
        %2035 = vset.pattern.permute.xlu0 3
        %2036 = vperm.xlu0 %2035, %v610
        %v2037 = vpop.permute.xlu0 %2036
        %2038 = vset.pattern.permute.xlu0 3
        %2039 = vperm.xlu0 %2038, %v611
        %v2040 = vpop.permute.xlu0 %2039
        %2041 = vset.pattern.permute.xlu0 3
        %2042 = vperm.xlu0 %2041, %v612
        %v2043 = vpop.permute.xlu0 %2042
        %2044 = vset.pattern.permute.xlu0 3
        %2045 = vperm.xlu0 %2044, %v613
        %v2046 = vpop.permute.xlu0 %2045
        %vm2047 = vcmp.eq.s32.totalorder %v2001, 1
        %vm2048 = vcmp.eq.s32.totalorder %v2004, 1
        %vm2049 = vcmp.eq.s32.totalorder %v2007, 1
        %vm2050 = vcmp.eq.s32.totalorder %v2010, 1
        %vm2051 = vcmp.eq.s32.totalorder %v2013, 1
        %vm2052 = vcmp.eq.s32.totalorder %v2016, 1
        %vm2053 = vcmp.eq.s32.totalorder %v2019, 1
        %vm2054 = vcmp.eq.s32.totalorder %v2022, 1
        %vm2055 = vcmp.eq.s32.totalorder %v2025, 1
        %vm2056 = vcmp.eq.s32.totalorder %v2028, 1
        %vm2057 = vcmp.eq.s32.totalorder %v2031, 1
        %vm2058 = vcmp.eq.s32.totalorder %v2034, 1
        %vm2059 = vcmp.eq.s32.totalorder %v2037, 1
        %vm2060 = vcmp.eq.s32.totalorder %v2040, 1
        %vm2061 = vcmp.eq.s32.totalorder %v2043, 1
        %vm2062 = vcmp.eq.s32.totalorder %v2046, 1
        %v2063 = vsel %vm2047, %v1634, -1e+30
        %v2064 = vsel %vm2048, %v1637, -1e+30
        %v2065 = vsel %vm2049, %v1642, -1e+30
        %v2066 = vsel %vm2050, %v1645, -1e+30
        %v2067 = vsel %vm2051, %v1650, -1e+30
        %v2068 = vsel %vm2052, %v1653, -1e+30
        %v2069 = vsel %vm2053, %v1658, -1e+30
        %v2070 = vsel %vm2054, %v1661, -1e+30
        %v2071 = vsel %vm2055, %v1666, -1e+30
        %v2072 = vsel %vm2056, %v1669, -1e+30
        %v2073 = vsel %vm2057, %v1674, -1e+30
        %v2074 = vsel %vm2058, %v1677, -1e+30
        %v2075 = vsel %vm2059, %v1682, -1e+30
        %v2076 = vsel %vm2060, %v1685, -1e+30
        %v2077 = vsel %vm2061, %v1690, -1e+30
        %v2078 = vsel %vm2062, %v1693, -1e+30
        %v2079 = vmax.f32 %v2063, %v2067
        %v2080 = vmax.f32 %v2064, %v2068
        %v2081 = vmax.f32 %v2065, %v2069
        %v2082 = vmax.f32 %v2066, %v2070
        %v2083 = vmax.f32 %v2079, %v2071
        %v2084 = vmax.f32 %v2080, %v2072
        %v2085 = vmax.f32 %v2081, %v2073
        %v2086 = vmax.f32 %v2082, %v2074
        %v2087 = vmax.f32 %v2083, %v2075
        %v2088 = vmax.f32 %v2084, %v2076
        %v2089 = vmax.f32 %v2085, %v2077
        %v2090 = vmax.f32 %v2086, %v2078
        %v2091 = vmax.f32 %v2087, %v2088
        %v2092 = vmax.f32 %v2089, %v2090
        %v2093 = vmax.f32 %v2091, %v2092
        %v2094 = vrot.slane %v2093, 4
        %v2095 = vmax.f32 %v2093, %v2094
        %v2096 = vrot.slane %v2095, 2
        %v2097 = vmax.f32 %v2095, %v2096
        %v2098 = vrot.slane %v2097, 1
        %v2099 = vmax.f32 %v2097, %v2098
        %2100 = vset.pattern.permute.xlu0 4
        %2101 = vperm.xlu0 %2100, %v598
        %v2102 = vpop.permute.xlu0 %2101
        %2103 = vset.pattern.permute.xlu0 4
        %2104 = vperm.xlu0 %2103, %v599
        %v2105 = vpop.permute.xlu0 %2104
        %2106 = vset.pattern.permute.xlu0 4
        %2107 = vperm.xlu0 %2106, %v600
        %v2108 = vpop.permute.xlu0 %2107
        %2109 = vset.pattern.permute.xlu0 4
        %2110 = vperm.xlu0 %2109, %v601
        %v2111 = vpop.permute.xlu0 %2110
        %2112 = vset.pattern.permute.xlu0 4
        %2113 = vperm.xlu0 %2112, %v602
        %v2114 = vpop.permute.xlu0 %2113
        %2115 = vset.pattern.permute.xlu0 4
        %2116 = vperm.xlu0 %2115, %v603
        %v2117 = vpop.permute.xlu0 %2116
        %2118 = vset.pattern.permute.xlu0 4
        %2119 = vperm.xlu0 %2118, %v604
        %v2120 = vpop.permute.xlu0 %2119
        %2121 = vset.pattern.permute.xlu0 4
        %2122 = vperm.xlu0 %2121, %v605
        %v2123 = vpop.permute.xlu0 %2122
        %2124 = vset.pattern.permute.xlu0 4
        %2125 = vperm.xlu0 %2124, %v606
        %v2126 = vpop.permute.xlu0 %2125
        %2127 = vset.pattern.permute.xlu0 4
        %2128 = vperm.xlu0 %2127, %v607
        %v2129 = vpop.permute.xlu0 %2128
        %2130 = vset.pattern.permute.xlu0 4
        %2131 = vperm.xlu0 %2130, %v608
        %v2132 = vpop.permute.xlu0 %2131
        %2133 = vset.pattern.permute.xlu0 4
        %2134 = vperm.xlu0 %2133, %v609
        %v2135 = vpop.permute.xlu0 %2134
        %2136 = vset.pattern.permute.xlu0 4
        %2137 = vperm.xlu0 %2136, %v610
        %v2138 = vpop.permute.xlu0 %2137
        %2139 = vset.pattern.permute.xlu0 4
        %2140 = vperm.xlu0 %2139, %v611
        %v2141 = vpop.permute.xlu0 %2140
        %2142 = vset.pattern.permute.xlu0 4
        %2143 = vperm.xlu0 %2142, %v612
        %v2144 = vpop.permute.xlu0 %2143
        %2145 = vset.pattern.permute.xlu0 4
        %2146 = vperm.xlu0 %2145, %v613
        %v2147 = vpop.permute.xlu0 %2146
        %vm2148 = vcmp.eq.s32.totalorder %v2102, 1
        %vm2149 = vcmp.eq.s32.totalorder %v2105, 1
        %vm2150 = vcmp.eq.s32.totalorder %v2108, 1
        %vm2151 = vcmp.eq.s32.totalorder %v2111, 1
        %vm2152 = vcmp.eq.s32.totalorder %v2114, 1
        %vm2153 = vcmp.eq.s32.totalorder %v2117, 1
        %vm2154 = vcmp.eq.s32.totalorder %v2120, 1
        %vm2155 = vcmp.eq.s32.totalorder %v2123, 1
        %vm2156 = vcmp.eq.s32.totalorder %v2126, 1
        %vm2157 = vcmp.eq.s32.totalorder %v2129, 1
        %vm2158 = vcmp.eq.s32.totalorder %v2132, 1
        %vm2159 = vcmp.eq.s32.totalorder %v2135, 1
        %vm2160 = vcmp.eq.s32.totalorder %v2138, 1
        %vm2161 = vcmp.eq.s32.totalorder %v2141, 1
        %vm2162 = vcmp.eq.s32.totalorder %v2144, 1
        %vm2163 = vcmp.eq.s32.totalorder %v2147, 1
        %v2164 = vsel %vm2148, %v1634, -1e+30
        %v2165 = vsel %vm2149, %v1637, -1e+30
        %v2166 = vsel %vm2150, %v1642, -1e+30
        %v2167 = vsel %vm2151, %v1645, -1e+30
        %v2168 = vsel %vm2152, %v1650, -1e+30
        %v2169 = vsel %vm2153, %v1653, -1e+30
        %v2170 = vsel %vm2154, %v1658, -1e+30
        %v2171 = vsel %vm2155, %v1661, -1e+30
        %v2172 = vsel %vm2156, %v1666, -1e+30
        %v2173 = vsel %vm2157, %v1669, -1e+30
        %v2174 = vsel %vm2158, %v1674, -1e+30
        %v2175 = vsel %vm2159, %v1677, -1e+30
        %v2176 = vsel %vm2160, %v1682, -1e+30
        %v2177 = vsel %vm2161, %v1685, -1e+30
        %v2178 = vsel %vm2162, %v1690, -1e+30
        %v2179 = vsel %vm2163, %v1693, -1e+30
        %v2180 = vmax.f32 %v2164, %v2168
        %v2181 = vmax.f32 %v2165, %v2169
        %v2182 = vmax.f32 %v2166, %v2170
        %v2183 = vmax.f32 %v2167, %v2171
        %v2184 = vmax.f32 %v2180, %v2172
        %v2185 = vmax.f32 %v2181, %v2173
        %v2186 = vmax.f32 %v2182, %v2174
        %v2187 = vmax.f32 %v2183, %v2175
        %v2188 = vmax.f32 %v2184, %v2176
        %v2189 = vmax.f32 %v2185, %v2177
        %v2190 = vmax.f32 %v2186, %v2178
        %v2191 = vmax.f32 %v2187, %v2179
        %v2192 = vmax.f32 %v2188, %v2189
        %v2193 = vmax.f32 %v2190, %v2191
        %v2194 = vmax.f32 %v2192, %v2193
        %v2195 = vrot.slane %v2194, 4
        %v2196 = vmax.f32 %v2194, %v2195
        %v2197 = vrot.slane %v2196, 2
        %v2198 = vmax.f32 %v2196, %v2197
        %v2199 = vrot.slane %v2198, 1
        %v2200 = vmax.f32 %v2198, %v2199
        %2201 = vset.pattern.permute.xlu0 5
        %2202 = vperm.xlu0 %2201, %v598
        %v2203 = vpop.permute.xlu0 %2202
        %2204 = vset.pattern.permute.xlu0 5
        %2205 = vperm.xlu0 %2204, %v599
        %v2206 = vpop.permute.xlu0 %2205
        %2207 = vset.pattern.permute.xlu0 5
        %2208 = vperm.xlu0 %2207, %v600
        %v2209 = vpop.permute.xlu0 %2208
        %2210 = vset.pattern.permute.xlu0 5
        %2211 = vperm.xlu0 %2210, %v601
        %v2212 = vpop.permute.xlu0 %2211
        %2213 = vset.pattern.permute.xlu0 5
        %2214 = vperm.xlu0 %2213, %v602
        %v2215 = vpop.permute.xlu0 %2214
        %2216 = vset.pattern.permute.xlu0 5
        %2217 = vperm.xlu0 %2216, %v603
        %v2218 = vpop.permute.xlu0 %2217
        %2219 = vset.pattern.permute.xlu0 5
        %2220 = vperm.xlu0 %2219, %v604
        %v2221 = vpop.permute.xlu0 %2220
        %2222 = vset.pattern.permute.xlu0 5
        %2223 = vperm.xlu0 %2222, %v605
        %v2224 = vpop.permute.xlu0 %2223
        %2225 = vset.pattern.permute.xlu0 5
        %2226 = vperm.xlu0 %2225, %v606
        %v2227 = vpop.permute.xlu0 %2226
        %2228 = vset.pattern.permute.xlu0 5
        %2229 = vperm.xlu0 %2228, %v607
        %v2230 = vpop.permute.xlu0 %2229
        %2231 = vset.pattern.permute.xlu0 5
        %2232 = vperm.xlu0 %2231, %v608
        %v2233 = vpop.permute.xlu0 %2232
        %2234 = vset.pattern.permute.xlu0 5
        %2235 = vperm.xlu0 %2234, %v609
        %v2236 = vpop.permute.xlu0 %2235
        %2237 = vset.pattern.permute.xlu0 5
        %2238 = vperm.xlu0 %2237, %v610
        %v2239 = vpop.permute.xlu0 %2238
        %2240 = vset.pattern.permute.xlu0 5
        %2241 = vperm.xlu0 %2240, %v611
        %v2242 = vpop.permute.xlu0 %2241
        %2243 = vset.pattern.permute.xlu0 5
        %2244 = vperm.xlu0 %2243, %v612
        %v2245 = vpop.permute.xlu0 %2244
        %2246 = vset.pattern.permute.xlu0 5
        %2247 = vperm.xlu0 %2246, %v613
        %v2248 = vpop.permute.xlu0 %2247
        %vm2249 = vcmp.eq.s32.totalorder %v2203, 1
        %vm2250 = vcmp.eq.s32.totalorder %v2206, 1
        %vm2251 = vcmp.eq.s32.totalorder %v2209, 1
        %vm2252 = vcmp.eq.s32.totalorder %v2212, 1
        %vm2253 = vcmp.eq.s32.totalorder %v2215, 1
        %vm2254 = vcmp.eq.s32.totalorder %v2218, 1
        %vm2255 = vcmp.eq.s32.totalorder %v2221, 1
        %vm2256 = vcmp.eq.s32.totalorder %v2224, 1
        %vm2257 = vcmp.eq.s32.totalorder %v2227, 1
        %vm2258 = vcmp.eq.s32.totalorder %v2230, 1
        %vm2259 = vcmp.eq.s32.totalorder %v2233, 1
        %vm2260 = vcmp.eq.s32.totalorder %v2236, 1
        %vm2261 = vcmp.eq.s32.totalorder %v2239, 1
        %vm2262 = vcmp.eq.s32.totalorder %v2242, 1
        %vm2263 = vcmp.eq.s32.totalorder %v2245, 1
        %vm2264 = vcmp.eq.s32.totalorder %v2248, 1
        %v2265 = vsel %vm2249, %v1634, -1e+30
        %v2266 = vsel %vm2250, %v1637, -1e+30
        %v2267 = vsel %vm2251, %v1642, -1e+30
        %v2268 = vsel %vm2252, %v1645, -1e+30
        %v2269 = vsel %vm2253, %v1650, -1e+30
        %v2270 = vsel %vm2254, %v1653, -1e+30
        %v2271 = vsel %vm2255, %v1658, -1e+30
        %v2272 = vsel %vm2256, %v1661, -1e+30
        %v2273 = vsel %vm2257, %v1666, -1e+30
        %v2274 = vsel %vm2258, %v1669, -1e+30
        %v2275 = vsel %vm2259, %v1674, -1e+30
        %v2276 = vsel %vm2260, %v1677, -1e+30
        %v2277 = vsel %vm2261, %v1682, -1e+30
        %v2278 = vsel %vm2262, %v1685, -1e+30
        %v2279 = vsel %vm2263, %v1690, -1e+30
        %v2280 = vsel %vm2264, %v1693, -1e+30
        %v2281 = vmax.f32 %v2265, %v2269
        %v2282 = vmax.f32 %v2266, %v2270
        %v2283 = vmax.f32 %v2267, %v2271
        %v2284 = vmax.f32 %v2268, %v2272
        %v2285 = vmax.f32 %v2281, %v2273
        %v2286 = vmax.f32 %v2282, %v2274
        %v2287 = vmax.f32 %v2283, %v2275
        %v2288 = vmax.f32 %v2284, %v2276
        %v2289 = vmax.f32 %v2285, %v2277
        %v2290 = vmax.f32 %v2286, %v2278
        %v2291 = vmax.f32 %v2287, %v2279
        %v2292 = vmax.f32 %v2288, %v2280
        %v2293 = vmax.f32 %v2289, %v2290
        %v2294 = vmax.f32 %v2291, %v2292
        %v2295 = vmax.f32 %v2293, %v2294
        %v2296 = vrot.slane %v2295, 4
        %v2297 = vmax.f32 %v2295, %v2296
        %v2298 = vrot.slane %v2297, 2
        %v2299 = vmax.f32 %v2297, %v2298
        %v2300 = vrot.slane %v2299, 1
        %v2301 = vmax.f32 %v2299, %v2300
        %2302 = vset.pattern.permute.xlu0 6
        %2303 = vperm.xlu0 %2302, %v598
        %v2304 = vpop.permute.xlu0 %2303
        %2305 = vset.pattern.permute.xlu0 6
        %2306 = vperm.xlu0 %2305, %v599
        %v2307 = vpop.permute.xlu0 %2306
        %2308 = vset.pattern.permute.xlu0 6
        %2309 = vperm.xlu0 %2308, %v600
        %v2310 = vpop.permute.xlu0 %2309
        %2311 = vset.pattern.permute.xlu0 6
        %2312 = vperm.xlu0 %2311, %v601
        %v2313 = vpop.permute.xlu0 %2312
        %2314 = vset.pattern.permute.xlu0 6
        %2315 = vperm.xlu0 %2314, %v602
        %v2316 = vpop.permute.xlu0 %2315
        %2317 = vset.pattern.permute.xlu0 6
        %2318 = vperm.xlu0 %2317, %v603
        %v2319 = vpop.permute.xlu0 %2318
        %2320 = vset.pattern.permute.xlu0 6
        %2321 = vperm.xlu0 %2320, %v604
        %v2322 = vpop.permute.xlu0 %2321
        %2323 = vset.pattern.permute.xlu0 6
        %2324 = vperm.xlu0 %2323, %v605
        %v2325 = vpop.permute.xlu0 %2324
        %2326 = vset.pattern.permute.xlu0 6
        %2327 = vperm.xlu0 %2326, %v606
        %v2328 = vpop.permute.xlu0 %2327
        %2329 = vset.pattern.permute.xlu0 6
        %2330 = vperm.xlu0 %2329, %v607
        %v2331 = vpop.permute.xlu0 %2330
        %2332 = vset.pattern.permute.xlu0 6
        %2333 = vperm.xlu0 %2332, %v608
        %v2334 = vpop.permute.xlu0 %2333
        %2335 = vset.pattern.permute.xlu0 6
        %2336 = vperm.xlu0 %2335, %v609
        %v2337 = vpop.permute.xlu0 %2336
        %2338 = vset.pattern.permute.xlu0 6
        %2339 = vperm.xlu0 %2338, %v610
        %v2340 = vpop.permute.xlu0 %2339
        %2341 = vset.pattern.permute.xlu0 6
        %2342 = vperm.xlu0 %2341, %v611
        %v2343 = vpop.permute.xlu0 %2342
        %2344 = vset.pattern.permute.xlu0 6
        %2345 = vperm.xlu0 %2344, %v612
        %v2346 = vpop.permute.xlu0 %2345
        %2347 = vset.pattern.permute.xlu0 6
        %2348 = vperm.xlu0 %2347, %v613
        %v2349 = vpop.permute.xlu0 %2348
        %vm2350 = vcmp.eq.s32.totalorder %v2304, 1
        %vm2351 = vcmp.eq.s32.totalorder %v2307, 1
        %vm2352 = vcmp.eq.s32.totalorder %v2310, 1
        %vm2353 = vcmp.eq.s32.totalorder %v2313, 1
        %vm2354 = vcmp.eq.s32.totalorder %v2316, 1
        %vm2355 = vcmp.eq.s32.totalorder %v2319, 1
        %vm2356 = vcmp.eq.s32.totalorder %v2322, 1
        %vm2357 = vcmp.eq.s32.totalorder %v2325, 1
        %vm2358 = vcmp.eq.s32.totalorder %v2328, 1
        %vm2359 = vcmp.eq.s32.totalorder %v2331, 1
        %vm2360 = vcmp.eq.s32.totalorder %v2334, 1
        %vm2361 = vcmp.eq.s32.totalorder %v2337, 1
        %vm2362 = vcmp.eq.s32.totalorder %v2340, 1
        %vm2363 = vcmp.eq.s32.totalorder %v2343, 1
        %vm2364 = vcmp.eq.s32.totalorder %v2346, 1
        %vm2365 = vcmp.eq.s32.totalorder %v2349, 1
        %v2366 = vsel %vm2350, %v1634, -1e+30
        %v2367 = vsel %vm2351, %v1637, -1e+30
        %v2368 = vsel %vm2352, %v1642, -1e+30
        %v2369 = vsel %vm2353, %v1645, -1e+30
        %v2370 = vsel %vm2354, %v1650, -1e+30
        %v2371 = vsel %vm2355, %v1653, -1e+30
        %v2372 = vsel %vm2356, %v1658, -1e+30
        %v2373 = vsel %vm2357, %v1661, -1e+30
        %v2374 = vsel %vm2358, %v1666, -1e+30
        %v2375 = vsel %vm2359, %v1669, -1e+30
        %v2376 = vsel %vm2360, %v1674, -1e+30
        %v2377 = vsel %vm2361, %v1677, -1e+30
        %v2378 = vsel %vm2362, %v1682, -1e+30
        %v2379 = vsel %vm2363, %v1685, -1e+30
        %v2380 = vsel %vm2364, %v1690, -1e+30
        %v2381 = vsel %vm2365, %v1693, -1e+30
        %v2382 = vmax.f32 %v2366, %v2370
        %v2383 = vmax.f32 %v2367, %v2371
        %v2384 = vmax.f32 %v2368, %v2372
        %v2385 = vmax.f32 %v2369, %v2373
        %v2386 = vmax.f32 %v2382, %v2374
        %v2387 = vmax.f32 %v2383, %v2375
        %v2388 = vmax.f32 %v2384, %v2376
        %v2389 = vmax.f32 %v2385, %v2377
        %v2390 = vmax.f32 %v2386, %v2378
        %v2391 = vmax.f32 %v2387, %v2379
        %v2392 = vmax.f32 %v2388, %v2380
        %v2393 = vmax.f32 %v2389, %v2381
        %v2394 = vmax.f32 %v2390, %v2391
        %v2395 = vmax.f32 %v2392, %v2393
        %v2396 = vmax.f32 %v2394, %v2395
        %v2397 = vrot.slane %v2396, 4
        %v2398 = vmax.f32 %v2396, %v2397
        %v2399 = vrot.slane %v2398, 2
        %v2400 = vmax.f32 %v2398, %v2399
        %v2401 = vrot.slane %v2400, 1
        %v2402 = vmax.f32 %v2400, %v2401
        %2403 = vset.pattern.permute.xlu0 7
        %2404 = vperm.xlu0 %2403, %v598
        %v2405 = vpop.permute.xlu0 %2404
        %2406 = vset.pattern.permute.xlu0 7
        %2407 = vperm.xlu0 %2406, %v599
        %v2408 = vpop.permute.xlu0 %2407
        %2409 = vset.pattern.permute.xlu0 7
        %2410 = vperm.xlu0 %2409, %v600
        %v2411 = vpop.permute.xlu0 %2410
        %2412 = vset.pattern.permute.xlu0 7
        %2413 = vperm.xlu0 %2412, %v601
        %v2414 = vpop.permute.xlu0 %2413
        %2415 = vset.pattern.permute.xlu0 7
        %2416 = vperm.xlu0 %2415, %v602
        %v2417 = vpop.permute.xlu0 %2416
        %2418 = vset.pattern.permute.xlu0 7
        %2419 = vperm.xlu0 %2418, %v603
        %v2420 = vpop.permute.xlu0 %2419
        %2421 = vset.pattern.permute.xlu0 7
        %2422 = vperm.xlu0 %2421, %v604
        %v2423 = vpop.permute.xlu0 %2422
        %2424 = vset.pattern.permute.xlu0 7
        %2425 = vperm.xlu0 %2424, %v605
        %v2426 = vpop.permute.xlu0 %2425
        %2427 = vset.pattern.permute.xlu0 7
        %2428 = vperm.xlu0 %2427, %v606
        %v2429 = vpop.permute.xlu0 %2428
        %2430 = vset.pattern.permute.xlu0 7
        %2431 = vperm.xlu0 %2430, %v607
        %v2432 = vpop.permute.xlu0 %2431
        %2433 = vset.pattern.permute.xlu0 7
        %2434 = vperm.xlu0 %2433, %v608
        %v2435 = vpop.permute.xlu0 %2434
        %2436 = vset.pattern.permute.xlu0 7
        %2437 = vperm.xlu0 %2436, %v609
        %v2438 = vpop.permute.xlu0 %2437
        %2439 = vset.pattern.permute.xlu0 7
        %2440 = vperm.xlu0 %2439, %v610
        %v2441 = vpop.permute.xlu0 %2440
        %2442 = vset.pattern.permute.xlu0 7
        %2443 = vperm.xlu0 %2442, %v611
        %v2444 = vpop.permute.xlu0 %2443
        %2445 = vset.pattern.permute.xlu0 7
        %2446 = vperm.xlu0 %2445, %v612
        %v2447 = vpop.permute.xlu0 %2446
        %2448 = vset.pattern.permute.xlu0 7
        %2449 = vperm.xlu0 %2448, %v613
        %v2450 = vpop.permute.xlu0 %2449
        %vm2451 = vcmp.eq.s32.totalorder %v2405, 1
        %vm2452 = vcmp.eq.s32.totalorder %v2408, 1
        %vm2453 = vcmp.eq.s32.totalorder %v2411, 1
        %vm2454 = vcmp.eq.s32.totalorder %v2414, 1
        %vm2455 = vcmp.eq.s32.totalorder %v2417, 1
        %vm2456 = vcmp.eq.s32.totalorder %v2420, 1
        %vm2457 = vcmp.eq.s32.totalorder %v2423, 1
        %vm2458 = vcmp.eq.s32.totalorder %v2426, 1
        %vm2459 = vcmp.eq.s32.totalorder %v2429, 1
        %vm2460 = vcmp.eq.s32.totalorder %v2432, 1
        %vm2461 = vcmp.eq.s32.totalorder %v2435, 1
        %vm2462 = vcmp.eq.s32.totalorder %v2438, 1
        %vm2463 = vcmp.eq.s32.totalorder %v2441, 1
        %vm2464 = vcmp.eq.s32.totalorder %v2444, 1
        %vm2465 = vcmp.eq.s32.totalorder %v2447, 1
        %vm2466 = vcmp.eq.s32.totalorder %v2450, 1
        %v2467 = vsel %vm2451, %v1634, -1e+30
        %v2468 = vsel %vm2452, %v1637, -1e+30
        %v2469 = vsel %vm2453, %v1642, -1e+30
        %v2470 = vsel %vm2454, %v1645, -1e+30
        %v2471 = vsel %vm2455, %v1650, -1e+30
        %v2472 = vsel %vm2456, %v1653, -1e+30
        %v2473 = vsel %vm2457, %v1658, -1e+30
        %v2474 = vsel %vm2458, %v1661, -1e+30
        %v2475 = vsel %vm2459, %v1666, -1e+30
        %v2476 = vsel %vm2460, %v1669, -1e+30
        %v2477 = vsel %vm2461, %v1674, -1e+30
        %v2478 = vsel %vm2462, %v1677, -1e+30
        %v2479 = vsel %vm2463, %v1682, -1e+30
        %v2480 = vsel %vm2464, %v1685, -1e+30
        %v2481 = vsel %vm2465, %v1690, -1e+30
        %v2482 = vsel %vm2466, %v1693, -1e+30
        %v2483 = vmax.f32 %v2467, %v2471
        %v2484 = vmax.f32 %v2468, %v2472
        %v2485 = vmax.f32 %v2469, %v2473
        %v2486 = vmax.f32 %v2470, %v2474
        %v2487 = vmax.f32 %v2483, %v2475
        %v2488 = vmax.f32 %v2484, %v2476
        %v2489 = vmax.f32 %v2485, %v2477
        %v2490 = vmax.f32 %v2486, %v2478
        %v2491 = vmax.f32 %v2487, %v2479
        %v2492 = vmax.f32 %v2488, %v2480
        %v2493 = vmax.f32 %v2489, %v2481
        %v2494 = vmax.f32 %v2490, %v2482
        %v2495 = vmax.f32 %v2491, %v2492
        %v2496 = vmax.f32 %v2493, %v2494
        %v2497 = vmax.f32 %v2495, %v2496
        %v2498 = vrot.slane %v2497, 4
        %v2499 = vmax.f32 %v2497, %v2498
        %v2500 = vrot.slane %v2499, 2
        %v2501 = vmax.f32 %v2499, %v2500
        %v2502 = vrot.slane %v2501, 1
        %v2503 = vmax.f32 %v2501, %v2502
        %2504 = vset.pattern.permute.xlu0 8
        %2505 = vperm.xlu0 %2504, %v598
        %v2506 = vpop.permute.xlu0 %2505
        %2507 = vset.pattern.permute.xlu0 8
        %2508 = vperm.xlu0 %2507, %v599
        %v2509 = vpop.permute.xlu0 %2508
        %2510 = vset.pattern.permute.xlu0 8
        %2511 = vperm.xlu0 %2510, %v600
        %v2512 = vpop.permute.xlu0 %2511
        %2513 = vset.pattern.permute.xlu0 8
        %2514 = vperm.xlu0 %2513, %v601
        %v2515 = vpop.permute.xlu0 %2514
        %2516 = vset.pattern.permute.xlu0 8
        %2517 = vperm.xlu0 %2516, %v602
        %v2518 = vpop.permute.xlu0 %2517
        %2519 = vset.pattern.permute.xlu0 8
        %2520 = vperm.xlu0 %2519, %v603
        %v2521 = vpop.permute.xlu0 %2520
        %2522 = vset.pattern.permute.xlu0 8
        %2523 = vperm.xlu0 %2522, %v604
        %v2524 = vpop.permute.xlu0 %2523
        %2525 = vset.pattern.permute.xlu0 8
        %2526 = vperm.xlu0 %2525, %v605
        %v2527 = vpop.permute.xlu0 %2526
        %2528 = vset.pattern.permute.xlu0 8
        %2529 = vperm.xlu0 %2528, %v606
        %v2530 = vpop.permute.xlu0 %2529
        %2531 = vset.pattern.permute.xlu0 8
        %2532 = vperm.xlu0 %2531, %v607
        %v2533 = vpop.permute.xlu0 %2532
        %2534 = vset.pattern.permute.xlu0 8
        %2535 = vperm.xlu0 %2534, %v608
        %v2536 = vpop.permute.xlu0 %2535
        %2537 = vset.pattern.permute.xlu0 8
        %2538 = vperm.xlu0 %2537, %v609
        %v2539 = vpop.permute.xlu0 %2538
        %2540 = vset.pattern.permute.xlu0 8
        %2541 = vperm.xlu0 %2540, %v610
        %v2542 = vpop.permute.xlu0 %2541
        %2543 = vset.pattern.permute.xlu0 8
        %2544 = vperm.xlu0 %2543, %v611
        %v2545 = vpop.permute.xlu0 %2544
        %2546 = vset.pattern.permute.xlu0 8
        %2547 = vperm.xlu0 %2546, %v612
        %v2548 = vpop.permute.xlu0 %2547
        %2549 = vset.pattern.permute.xlu0 8
        %2550 = vperm.xlu0 %2549, %v613
        %v2551 = vpop.permute.xlu0 %2550
        %vm2552 = vcmp.eq.s32.totalorder %v2506, 1
        %vm2553 = vcmp.eq.s32.totalorder %v2509, 1
        %vm2554 = vcmp.eq.s32.totalorder %v2512, 1
        %vm2555 = vcmp.eq.s32.totalorder %v2515, 1
        %vm2556 = vcmp.eq.s32.totalorder %v2518, 1
        %vm2557 = vcmp.eq.s32.totalorder %v2521, 1
        %vm2558 = vcmp.eq.s32.totalorder %v2524, 1
        %vm2559 = vcmp.eq.s32.totalorder %v2527, 1
        %vm2560 = vcmp.eq.s32.totalorder %v2530, 1
        %vm2561 = vcmp.eq.s32.totalorder %v2533, 1
        %vm2562 = vcmp.eq.s32.totalorder %v2536, 1
        %vm2563 = vcmp.eq.s32.totalorder %v2539, 1
        %vm2564 = vcmp.eq.s32.totalorder %v2542, 1
        %vm2565 = vcmp.eq.s32.totalorder %v2545, 1
        %vm2566 = vcmp.eq.s32.totalorder %v2548, 1
        %vm2567 = vcmp.eq.s32.totalorder %v2551, 1
        %v2568 = vsel %vm2552, %v1634, -1e+30
        %v2569 = vsel %vm2553, %v1637, -1e+30
        %v2570 = vsel %vm2554, %v1642, -1e+30
        %v2571 = vsel %vm2555, %v1645, -1e+30
        %v2572 = vsel %vm2556, %v1650, -1e+30
        %v2573 = vsel %vm2557, %v1653, -1e+30
        %v2574 = vsel %vm2558, %v1658, -1e+30
        %v2575 = vsel %vm2559, %v1661, -1e+30
        %v2576 = vsel %vm2560, %v1666, -1e+30
        %v2577 = vsel %vm2561, %v1669, -1e+30
        %v2578 = vsel %vm2562, %v1674, -1e+30
        %v2579 = vsel %vm2563, %v1677, -1e+30
        %v2580 = vsel %vm2564, %v1682, -1e+30
        %v2581 = vsel %vm2565, %v1685, -1e+30
        %v2582 = vsel %vm2566, %v1690, -1e+30
        %v2583 = vsel %vm2567, %v1693, -1e+30
        %v2584 = vmax.f32 %v2568, %v2572
        %v2585 = vmax.f32 %v2569, %v2573
        %v2586 = vmax.f32 %v2570, %v2574
        %v2587 = vmax.f32 %v2571, %v2575
        %v2588 = vmax.f32 %v2584, %v2576
        %v2589 = vmax.f32 %v2585, %v2577
        %v2590 = vmax.f32 %v2586, %v2578
        %v2591 = vmax.f32 %v2587, %v2579
        %v2592 = vmax.f32 %v2588, %v2580
        %v2593 = vmax.f32 %v2589, %v2581
        %v2594 = vmax.f32 %v2590, %v2582
        %v2595 = vmax.f32 %v2591, %v2583
        %v2596 = vmax.f32 %v2592, %v2593
        %v2597 = vmax.f32 %v2594, %v2595
        %v2598 = vmax.f32 %v2596, %v2597
        %v2599 = vrot.slane %v2598, 4
        %v2600 = vmax.f32 %v2598, %v2599
        %v2601 = vrot.slane %v2600, 2
        %v2602 = vmax.f32 %v2600, %v2601
        %v2603 = vrot.slane %v2602, 1
        %v2604 = vmax.f32 %v2602, %v2603
        %2605 = vset.pattern.permute.xlu0 9
        %2606 = vperm.xlu0 %2605, %v598
        %v2607 = vpop.permute.xlu0 %2606
        %2608 = vset.pattern.permute.xlu0 9
        %2609 = vperm.xlu0 %2608, %v599
        %v2610 = vpop.permute.xlu0 %2609
        %2611 = vset.pattern.permute.xlu0 9
        %2612 = vperm.xlu0 %2611, %v600
        %v2613 = vpop.permute.xlu0 %2612
        %2614 = vset.pattern.permute.xlu0 9
        %2615 = vperm.xlu0 %2614, %v601
        %v2616 = vpop.permute.xlu0 %2615
        %2617 = vset.pattern.permute.xlu0 9
        %2618 = vperm.xlu0 %2617, %v602
        %v2619 = vpop.permute.xlu0 %2618
        %2620 = vset.pattern.permute.xlu0 9
        %2621 = vperm.xlu0 %2620, %v603
        %v2622 = vpop.permute.xlu0 %2621
        %2623 = vset.pattern.permute.xlu0 9
        %2624 = vperm.xlu0 %2623, %v604
        %v2625 = vpop.permute.xlu0 %2624
        %2626 = vset.pattern.permute.xlu0 9
        %2627 = vperm.xlu0 %2626, %v605
        %v2628 = vpop.permute.xlu0 %2627
        %2629 = vset.pattern.permute.xlu0 9
        %2630 = vperm.xlu0 %2629, %v606
        %v2631 = vpop.permute.xlu0 %2630
        %2632 = vset.pattern.permute.xlu0 9
        %2633 = vperm.xlu0 %2632, %v607
        %v2634 = vpop.permute.xlu0 %2633
        %2635 = vset.pattern.permute.xlu0 9
        %2636 = vperm.xlu0 %2635, %v608
        %v2637 = vpop.permute.xlu0 %2636
        %2638 = vset.pattern.permute.xlu0 9
        %2639 = vperm.xlu0 %2638, %v609
        %v2640 = vpop.permute.xlu0 %2639
        %2641 = vset.pattern.permute.xlu0 9
        %2642 = vperm.xlu0 %2641, %v610
        %v2643 = vpop.permute.xlu0 %2642
        %2644 = vset.pattern.permute.xlu0 9
        %2645 = vperm.xlu0 %2644, %v611
        %v2646 = vpop.permute.xlu0 %2645
        %2647 = vset.pattern.permute.xlu0 9
        %2648 = vperm.xlu0 %2647, %v612
        %v2649 = vpop.permute.xlu0 %2648
        %2650 = vset.pattern.permute.xlu0 9
        %2651 = vperm.xlu0 %2650, %v613
        %v2652 = vpop.permute.xlu0 %2651
        %vm2653 = vcmp.eq.s32.totalorder %v2607, 1
        %vm2654 = vcmp.eq.s32.totalorder %v2610, 1
        %vm2655 = vcmp.eq.s32.totalorder %v2613, 1
        %vm2656 = vcmp.eq.s32.totalorder %v2616, 1
        %vm2657 = vcmp.eq.s32.totalorder %v2619, 1
        %vm2658 = vcmp.eq.s32.totalorder %v2622, 1
        %vm2659 = vcmp.eq.s32.totalorder %v2625, 1
        %vm2660 = vcmp.eq.s32.totalorder %v2628, 1
        %vm2661 = vcmp.eq.s32.totalorder %v2631, 1
        %vm2662 = vcmp.eq.s32.totalorder %v2634, 1
        %vm2663 = vcmp.eq.s32.totalorder %v2637, 1
        %vm2664 = vcmp.eq.s32.totalorder %v2640, 1
        %vm2665 = vcmp.eq.s32.totalorder %v2643, 1
        %vm2666 = vcmp.eq.s32.totalorder %v2646, 1
        %vm2667 = vcmp.eq.s32.totalorder %v2649, 1
        %vm2668 = vcmp.eq.s32.totalorder %v2652, 1
        %v2669 = vsel %vm2653, %v1634, -1e+30
        %v2670 = vsel %vm2654, %v1637, -1e+30
        %v2671 = vsel %vm2655, %v1642, -1e+30
        %v2672 = vsel %vm2656, %v1645, -1e+30
        %v2673 = vsel %vm2657, %v1650, -1e+30
        %v2674 = vsel %vm2658, %v1653, -1e+30
        %v2675 = vsel %vm2659, %v1658, -1e+30
        %v2676 = vsel %vm2660, %v1661, -1e+30
        %v2677 = vsel %vm2661, %v1666, -1e+30
        %v2678 = vsel %vm2662, %v1669, -1e+30
        %v2679 = vsel %vm2663, %v1674, -1e+30
        %v2680 = vsel %vm2664, %v1677, -1e+30
        %v2681 = vsel %vm2665, %v1682, -1e+30
        %v2682 = vsel %vm2666, %v1685, -1e+30
        %v2683 = vsel %vm2667, %v1690, -1e+30
        %v2684 = vsel %vm2668, %v1693, -1e+30
        %v2685 = vmax.f32 %v2669, %v2673
        %v2686 = vmax.f32 %v2670, %v2674
        %v2687 = vmax.f32 %v2671, %v2675
        %v2688 = vmax.f32 %v2672, %v2676
        %v2689 = vmax.f32 %v2685, %v2677
        %v2690 = vmax.f32 %v2686, %v2678
        %v2691 = vmax.f32 %v2687, %v2679
        %v2692 = vmax.f32 %v2688, %v2680
        %v2693 = vmax.f32 %v2689, %v2681
        %v2694 = vmax.f32 %v2690, %v2682
        %v2695 = vmax.f32 %v2691, %v2683
        %v2696 = vmax.f32 %v2692, %v2684
        %v2697 = vmax.f32 %v2693, %v2694
        %v2698 = vmax.f32 %v2695, %v2696
        %v2699 = vmax.f32 %v2697, %v2698
        %v2700 = vrot.slane %v2699, 4
        %v2701 = vmax.f32 %v2699, %v2700
        %v2702 = vrot.slane %v2701, 2
        %v2703 = vmax.f32 %v2701, %v2702
        %v2704 = vrot.slane %v2703, 1
        %v2705 = vmax.f32 %v2703, %v2704
        %2706 = vset.pattern.permute.xlu0 10
        %2707 = vperm.xlu0 %2706, %v598
        %v2708 = vpop.permute.xlu0 %2707
        %2709 = vset.pattern.permute.xlu0 10
        %2710 = vperm.xlu0 %2709, %v599
        %v2711 = vpop.permute.xlu0 %2710
        %2712 = vset.pattern.permute.xlu0 10
        %2713 = vperm.xlu0 %2712, %v600
        %v2714 = vpop.permute.xlu0 %2713
        %2715 = vset.pattern.permute.xlu0 10
        %2716 = vperm.xlu0 %2715, %v601
        %v2717 = vpop.permute.xlu0 %2716
        %2718 = vset.pattern.permute.xlu0 10
        %2719 = vperm.xlu0 %2718, %v602
        %v2720 = vpop.permute.xlu0 %2719
        %2721 = vset.pattern.permute.xlu0 10
        %2722 = vperm.xlu0 %2721, %v603
        %v2723 = vpop.permute.xlu0 %2722
        %2724 = vset.pattern.permute.xlu0 10
        %2725 = vperm.xlu0 %2724, %v604
        %v2726 = vpop.permute.xlu0 %2725
        %2727 = vset.pattern.permute.xlu0 10
        %2728 = vperm.xlu0 %2727, %v605
        %v2729 = vpop.permute.xlu0 %2728
        %2730 = vset.pattern.permute.xlu0 10
        %2731 = vperm.xlu0 %2730, %v606
        %v2732 = vpop.permute.xlu0 %2731
        %2733 = vset.pattern.permute.xlu0 10
        %2734 = vperm.xlu0 %2733, %v607
        %v2735 = vpop.permute.xlu0 %2734
        %2736 = vset.pattern.permute.xlu0 10
        %2737 = vperm.xlu0 %2736, %v608
        %v2738 = vpop.permute.xlu0 %2737
        %2739 = vset.pattern.permute.xlu0 10
        %2740 = vperm.xlu0 %2739, %v609
        %v2741 = vpop.permute.xlu0 %2740
        %2742 = vset.pattern.permute.xlu0 10
        %2743 = vperm.xlu0 %2742, %v610
        %v2744 = vpop.permute.xlu0 %2743
        %2745 = vset.pattern.permute.xlu0 10
        %2746 = vperm.xlu0 %2745, %v611
        %v2747 = vpop.permute.xlu0 %2746
        %2748 = vset.pattern.permute.xlu0 10
        %2749 = vperm.xlu0 %2748, %v612
        %v2750 = vpop.permute.xlu0 %2749
        %2751 = vset.pattern.permute.xlu0 10
        %2752 = vperm.xlu0 %2751, %v613
        %v2753 = vpop.permute.xlu0 %2752
        %vm2754 = vcmp.eq.s32.totalorder %v2708, 1
        %vm2755 = vcmp.eq.s32.totalorder %v2711, 1
        %vm2756 = vcmp.eq.s32.totalorder %v2714, 1
        %vm2757 = vcmp.eq.s32.totalorder %v2717, 1
        %vm2758 = vcmp.eq.s32.totalorder %v2720, 1
        %vm2759 = vcmp.eq.s32.totalorder %v2723, 1
        %vm2760 = vcmp.eq.s32.totalorder %v2726, 1
        %vm2761 = vcmp.eq.s32.totalorder %v2729, 1
        %vm2762 = vcmp.eq.s32.totalorder %v2732, 1
        %vm2763 = vcmp.eq.s32.totalorder %v2735, 1
        %vm2764 = vcmp.eq.s32.totalorder %v2738, 1
        %vm2765 = vcmp.eq.s32.totalorder %v2741, 1
        %vm2766 = vcmp.eq.s32.totalorder %v2744, 1
        %vm2767 = vcmp.eq.s32.totalorder %v2747, 1
        %vm2768 = vcmp.eq.s32.totalorder %v2750, 1
        %vm2769 = vcmp.eq.s32.totalorder %v2753, 1
        %v2770 = vsel %vm2754, %v1634, -1e+30
        %v2771 = vsel %vm2755, %v1637, -1e+30
        %v2772 = vsel %vm2756, %v1642, -1e+30
        %v2773 = vsel %vm2757, %v1645, -1e+30
        %v2774 = vsel %vm2758, %v1650, -1e+30
        %v2775 = vsel %vm2759, %v1653, -1e+30
        %v2776 = vsel %vm2760, %v1658, -1e+30
        %v2777 = vsel %vm2761, %v1661, -1e+30
        %v2778 = vsel %vm2762, %v1666, -1e+30
        %v2779 = vsel %vm2763, %v1669, -1e+30
        %v2780 = vsel %vm2764, %v1674, -1e+30
        %v2781 = vsel %vm2765, %v1677, -1e+30
        %v2782 = vsel %vm2766, %v1682, -1e+30
        %v2783 = vsel %vm2767, %v1685, -1e+30
        %v2784 = vsel %vm2768, %v1690, -1e+30
        %v2785 = vsel %vm2769, %v1693, -1e+30
        %v2786 = vmax.f32 %v2770, %v2774
        %v2787 = vmax.f32 %v2771, %v2775
        %v2788 = vmax.f32 %v2772, %v2776
        %v2789 = vmax.f32 %v2773, %v2777
        %v2790 = vmax.f32 %v2786, %v2778
        %v2791 = vmax.f32 %v2787, %v2779
        %v2792 = vmax.f32 %v2788, %v2780
        %v2793 = vmax.f32 %v2789, %v2781
        %v2794 = vmax.f32 %v2790, %v2782
        %v2795 = vmax.f32 %v2791, %v2783
        %v2796 = vmax.f32 %v2792, %v2784
        %v2797 = vmax.f32 %v2793, %v2785
        %v2798 = vmax.f32 %v2794, %v2795
        %v2799 = vmax.f32 %v2796, %v2797
        %v2800 = vmax.f32 %v2798, %v2799
        %v2801 = vrot.slane %v2800, 4
        %v2802 = vmax.f32 %v2800, %v2801
        %v2803 = vrot.slane %v2802, 2
        %v2804 = vmax.f32 %v2802, %v2803
        %v2805 = vrot.slane %v2804, 1
        %v2806 = vmax.f32 %v2804, %v2805
        %2807 = vset.pattern.permute.xlu0 11
        %2808 = vperm.xlu0 %2807, %v598
        %v2809 = vpop.permute.xlu0 %2808
        %2810 = vset.pattern.permute.xlu0 11
        %2811 = vperm.xlu0 %2810, %v599
        %v2812 = vpop.permute.xlu0 %2811
        %2813 = vset.pattern.permute.xlu0 11
        %2814 = vperm.xlu0 %2813, %v600
        %v2815 = vpop.permute.xlu0 %2814
        %2816 = vset.pattern.permute.xlu0 11
        %2817 = vperm.xlu0 %2816, %v601
        %v2818 = vpop.permute.xlu0 %2817
        %2819 = vset.pattern.permute.xlu0 11
        %2820 = vperm.xlu0 %2819, %v602
        %v2821 = vpop.permute.xlu0 %2820
        %2822 = vset.pattern.permute.xlu0 11
        %2823 = vperm.xlu0 %2822, %v603
        %v2824 = vpop.permute.xlu0 %2823
        %2825 = vset.pattern.permute.xlu0 11
        %2826 = vperm.xlu0 %2825, %v604
        %v2827 = vpop.permute.xlu0 %2826
        %2828 = vset.pattern.permute.xlu0 11
        %2829 = vperm.xlu0 %2828, %v605
        %v2830 = vpop.permute.xlu0 %2829
        %2831 = vset.pattern.permute.xlu0 11
        %2832 = vperm.xlu0 %2831, %v606
        %v2833 = vpop.permute.xlu0 %2832
        %2834 = vset.pattern.permute.xlu0 11
        %2835 = vperm.xlu0 %2834, %v607
        %v2836 = vpop.permute.xlu0 %2835
        %2837 = vset.pattern.permute.xlu0 11
        %2838 = vperm.xlu0 %2837, %v608
        %v2839 = vpop.permute.xlu0 %2838
        %2840 = vset.pattern.permute.xlu0 11
        %2841 = vperm.xlu0 %2840, %v609
        %v2842 = vpop.permute.xlu0 %2841
        %2843 = vset.pattern.permute.xlu0 11
        %2844 = vperm.xlu0 %2843, %v610
        %v2845 = vpop.permute.xlu0 %2844
        %2846 = vset.pattern.permute.xlu0 11
        %2847 = vperm.xlu0 %2846, %v611
        %v2848 = vpop.permute.xlu0 %2847
        %2849 = vset.pattern.permute.xlu0 11
        %2850 = vperm.xlu0 %2849, %v612
        %v2851 = vpop.permute.xlu0 %2850
        %2852 = vset.pattern.permute.xlu0 11
        %2853 = vperm.xlu0 %2852, %v613
        %v2854 = vpop.permute.xlu0 %2853
        %vm2855 = vcmp.eq.s32.totalorder %v2809, 1
        %vm2856 = vcmp.eq.s32.totalorder %v2812, 1
        %vm2857 = vcmp.eq.s32.totalorder %v2815, 1
        %vm2858 = vcmp.eq.s32.totalorder %v2818, 1
        %vm2859 = vcmp.eq.s32.totalorder %v2821, 1
        %vm2860 = vcmp.eq.s32.totalorder %v2824, 1
        %vm2861 = vcmp.eq.s32.totalorder %v2827, 1
        %vm2862 = vcmp.eq.s32.totalorder %v2830, 1
        %vm2863 = vcmp.eq.s32.totalorder %v2833, 1
        %vm2864 = vcmp.eq.s32.totalorder %v2836, 1
        %vm2865 = vcmp.eq.s32.totalorder %v2839, 1
        %vm2866 = vcmp.eq.s32.totalorder %v2842, 1
        %vm2867 = vcmp.eq.s32.totalorder %v2845, 1
        %vm2868 = vcmp.eq.s32.totalorder %v2848, 1
        %vm2869 = vcmp.eq.s32.totalorder %v2851, 1
        %vm2870 = vcmp.eq.s32.totalorder %v2854, 1
        %v2871 = vsel %vm2855, %v1634, -1e+30
        %v2872 = vsel %vm2856, %v1637, -1e+30
        %v2873 = vsel %vm2857, %v1642, -1e+30
        %v2874 = vsel %vm2858, %v1645, -1e+30
        %v2875 = vsel %vm2859, %v1650, -1e+30
        %v2876 = vsel %vm2860, %v1653, -1e+30
        %v2877 = vsel %vm2861, %v1658, -1e+30
        %v2878 = vsel %vm2862, %v1661, -1e+30
        %v2879 = vsel %vm2863, %v1666, -1e+30
        %v2880 = vsel %vm2864, %v1669, -1e+30
        %v2881 = vsel %vm2865, %v1674, -1e+30
        %v2882 = vsel %vm2866, %v1677, -1e+30
        %v2883 = vsel %vm2867, %v1682, -1e+30
        %v2884 = vsel %vm2868, %v1685, -1e+30
        %v2885 = vsel %vm2869, %v1690, -1e+30
        %v2886 = vsel %vm2870, %v1693, -1e+30
        %v2887 = vmax.f32 %v2871, %v2875
        %v2888 = vmax.f32 %v2872, %v2876
        %v2889 = vmax.f32 %v2873, %v2877
        %v2890 = vmax.f32 %v2874, %v2878
        %v2891 = vmax.f32 %v2887, %v2879
        %v2892 = vmax.f32 %v2888, %v2880
        %v2893 = vmax.f32 %v2889, %v2881
        %v2894 = vmax.f32 %v2890, %v2882
        %v2895 = vmax.f32 %v2891, %v2883
        %v2896 = vmax.f32 %v2892, %v2884
        %v2897 = vmax.f32 %v2893, %v2885
        %v2898 = vmax.f32 %v2894, %v2886
        %v2899 = vmax.f32 %v2895, %v2896
        %v2900 = vmax.f32 %v2897, %v2898
        %v2901 = vmax.f32 %v2899, %v2900
        %v2902 = vrot.slane %v2901, 4
        %v2903 = vmax.f32 %v2901, %v2902
        %v2904 = vrot.slane %v2903, 2
        %v2905 = vmax.f32 %v2903, %v2904
        %v2906 = vrot.slane %v2905, 1
        %v2907 = vmax.f32 %v2905, %v2906
        %2908 = vset.pattern.permute.xlu0 12
        %2909 = vperm.xlu0 %2908, %v598
        %v2910 = vpop.permute.xlu0 %2909
        %2911 = vset.pattern.permute.xlu0 12
        %2912 = vperm.xlu0 %2911, %v599
        %v2913 = vpop.permute.xlu0 %2912
        %2914 = vset.pattern.permute.xlu0 12
        %2915 = vperm.xlu0 %2914, %v600
        %v2916 = vpop.permute.xlu0 %2915
        %2917 = vset.pattern.permute.xlu0 12
        %2918 = vperm.xlu0 %2917, %v601
        %v2919 = vpop.permute.xlu0 %2918
        %2920 = vset.pattern.permute.xlu0 12
        %2921 = vperm.xlu0 %2920, %v602
        %v2922 = vpop.permute.xlu0 %2921
        %2923 = vset.pattern.permute.xlu0 12
        %2924 = vperm.xlu0 %2923, %v603
        %v2925 = vpop.permute.xlu0 %2924
        %2926 = vset.pattern.permute.xlu0 12
        %2927 = vperm.xlu0 %2926, %v604
        %v2928 = vpop.permute.xlu0 %2927
        %2929 = vset.pattern.permute.xlu0 12
        %2930 = vperm.xlu0 %2929, %v605
        %v2931 = vpop.permute.xlu0 %2930
        %2932 = vset.pattern.permute.xlu0 12
        %2933 = vperm.xlu0 %2932, %v606
        %v2934 = vpop.permute.xlu0 %2933
        %2935 = vset.pattern.permute.xlu0 12
        %2936 = vperm.xlu0 %2935, %v607
        %v2937 = vpop.permute.xlu0 %2936
        %2938 = vset.pattern.permute.xlu0 12
        %2939 = vperm.xlu0 %2938, %v608
        %v2940 = vpop.permute.xlu0 %2939
        %2941 = vset.pattern.permute.xlu0 12
        %2942 = vperm.xlu0 %2941, %v609
        %v2943 = vpop.permute.xlu0 %2942
        %2944 = vset.pattern.permute.xlu0 12
        %2945 = vperm.xlu0 %2944, %v610
        %v2946 = vpop.permute.xlu0 %2945
        %2947 = vset.pattern.permute.xlu0 12
        %2948 = vperm.xlu0 %2947, %v611
        %v2949 = vpop.permute.xlu0 %2948
        %2950 = vset.pattern.permute.xlu0 12
        %2951 = vperm.xlu0 %2950, %v612
        %v2952 = vpop.permute.xlu0 %2951
        %2953 = vset.pattern.permute.xlu0 12
        %2954 = vperm.xlu0 %2953, %v613
        %v2955 = vpop.permute.xlu0 %2954
        %vm2956 = vcmp.eq.s32.totalorder %v2910, 1
        %vm2957 = vcmp.eq.s32.totalorder %v2913, 1
        %vm2958 = vcmp.eq.s32.totalorder %v2916, 1
        %vm2959 = vcmp.eq.s32.totalorder %v2919, 1
        %vm2960 = vcmp.eq.s32.totalorder %v2922, 1
        %vm2961 = vcmp.eq.s32.totalorder %v2925, 1
        %vm2962 = vcmp.eq.s32.totalorder %v2928, 1
        %vm2963 = vcmp.eq.s32.totalorder %v2931, 1
        %vm2964 = vcmp.eq.s32.totalorder %v2934, 1
        %vm2965 = vcmp.eq.s32.totalorder %v2937, 1
        %vm2966 = vcmp.eq.s32.totalorder %v2940, 1
        %vm2967 = vcmp.eq.s32.totalorder %v2943, 1
        %vm2968 = vcmp.eq.s32.totalorder %v2946, 1
        %vm2969 = vcmp.eq.s32.totalorder %v2949, 1
        %vm2970 = vcmp.eq.s32.totalorder %v2952, 1
        %vm2971 = vcmp.eq.s32.totalorder %v2955, 1
        %v2972 = vsel %vm2956, %v1634, -1e+30
        %v2973 = vsel %vm2957, %v1637, -1e+30
        %v2974 = vsel %vm2958, %v1642, -1e+30
        %v2975 = vsel %vm2959, %v1645, -1e+30
        %v2976 = vsel %vm2960, %v1650, -1e+30
        %v2977 = vsel %vm2961, %v1653, -1e+30
        %v2978 = vsel %vm2962, %v1658, -1e+30
        %v2979 = vsel %vm2963, %v1661, -1e+30
        %v2980 = vsel %vm2964, %v1666, -1e+30
        %v2981 = vsel %vm2965, %v1669, -1e+30
        %v2982 = vsel %vm2966, %v1674, -1e+30
        %v2983 = vsel %vm2967, %v1677, -1e+30
        %v2984 = vsel %vm2968, %v1682, -1e+30
        %v2985 = vsel %vm2969, %v1685, -1e+30
        %v2986 = vsel %vm2970, %v1690, -1e+30
        %v2987 = vsel %vm2971, %v1693, -1e+30
        %v2988 = vmax.f32 %v2972, %v2976
        %v2989 = vmax.f32 %v2973, %v2977
        %v2990 = vmax.f32 %v2974, %v2978
        %v2991 = vmax.f32 %v2975, %v2979
        %v2992 = vmax.f32 %v2988, %v2980
        %v2993 = vmax.f32 %v2989, %v2981
        %v2994 = vmax.f32 %v2990, %v2982
        %v2995 = vmax.f32 %v2991, %v2983
        %v2996 = vmax.f32 %v2992, %v2984
        %v2997 = vmax.f32 %v2993, %v2985
        %v2998 = vmax.f32 %v2994, %v2986
        %v2999 = vmax.f32 %v2995, %v2987
        %v3000 = vmax.f32 %v2996, %v2997
        %v3001 = vmax.f32 %v2998, %v2999
        %v3002 = vmax.f32 %v3000, %v3001
        %v3003 = vrot.slane %v3002, 4
        %v3004 = vmax.f32 %v3002, %v3003
        %v3005 = vrot.slane %v3004, 2
        %v3006 = vmax.f32 %v3004, %v3005
        %v3007 = vrot.slane %v3006, 1
        %v3008 = vmax.f32 %v3006, %v3007
        %3009 = vset.pattern.permute.xlu0 13
        %3010 = vperm.xlu0 %3009, %v598
        %v3011 = vpop.permute.xlu0 %3010
        %3012 = vset.pattern.permute.xlu0 13
        %3013 = vperm.xlu0 %3012, %v599
        %v3014 = vpop.permute.xlu0 %3013
        %3015 = vset.pattern.permute.xlu0 13
        %3016 = vperm.xlu0 %3015, %v600
        %v3017 = vpop.permute.xlu0 %3016
        %3018 = vset.pattern.permute.xlu0 13
        %3019 = vperm.xlu0 %3018, %v601
        %v3020 = vpop.permute.xlu0 %3019
        %3021 = vset.pattern.permute.xlu0 13
        %3022 = vperm.xlu0 %3021, %v602
        %v3023 = vpop.permute.xlu0 %3022
        %3024 = vset.pattern.permute.xlu0 13
        %3025 = vperm.xlu0 %3024, %v603
        %v3026 = vpop.permute.xlu0 %3025
        %3027 = vset.pattern.permute.xlu0 13
        %3028 = vperm.xlu0 %3027, %v604
        %v3029 = vpop.permute.xlu0 %3028
        %3030 = vset.pattern.permute.xlu0 13
        %3031 = vperm.xlu0 %3030, %v605
        %v3032 = vpop.permute.xlu0 %3031
        %3033 = vset.pattern.permute.xlu0 13
        %3034 = vperm.xlu0 %3033, %v606
        %v3035 = vpop.permute.xlu0 %3034
        %3036 = vset.pattern.permute.xlu0 13
        %3037 = vperm.xlu0 %3036, %v607
        %v3038 = vpop.permute.xlu0 %3037
        %3039 = vset.pattern.permute.xlu0 13
        %3040 = vperm.xlu0 %3039, %v608
        %v3041 = vpop.permute.xlu0 %3040
        %3042 = vset.pattern.permute.xlu0 13
        %3043 = vperm.xlu0 %3042, %v609
        %v3044 = vpop.permute.xlu0 %3043
        %3045 = vset.pattern.permute.xlu0 13
        %3046 = vperm.xlu0 %3045, %v610
        %v3047 = vpop.permute.xlu0 %3046
        %3048 = vset.pattern.permute.xlu0 13
        %3049 = vperm.xlu0 %3048, %v611
        %v3050 = vpop.permute.xlu0 %3049
        %3051 = vset.pattern.permute.xlu0 13
        %3052 = vperm.xlu0 %3051, %v612
        %v3053 = vpop.permute.xlu0 %3052
        %3054 = vset.pattern.permute.xlu0 13
        %3055 = vperm.xlu0 %3054, %v613
        %v3056 = vpop.permute.xlu0 %3055
        %vm3057 = vcmp.eq.s32.totalorder %v3011, 1
        %vm3058 = vcmp.eq.s32.totalorder %v3014, 1
        %vm3059 = vcmp.eq.s32.totalorder %v3017, 1
        %vm3060 = vcmp.eq.s32.totalorder %v3020, 1
        %vm3061 = vcmp.eq.s32.totalorder %v3023, 1
        %vm3062 = vcmp.eq.s32.totalorder %v3026, 1
        %vm3063 = vcmp.eq.s32.totalorder %v3029, 1
        %vm3064 = vcmp.eq.s32.totalorder %v3032, 1
        %vm3065 = vcmp.eq.s32.totalorder %v3035, 1
        %vm3066 = vcmp.eq.s32.totalorder %v3038, 1
        %vm3067 = vcmp.eq.s32.totalorder %v3041, 1
        %vm3068 = vcmp.eq.s32.totalorder %v3044, 1
        %vm3069 = vcmp.eq.s32.totalorder %v3047, 1
        %vm3070 = vcmp.eq.s32.totalorder %v3050, 1
        %vm3071 = vcmp.eq.s32.totalorder %v3053, 1
        %vm3072 = vcmp.eq.s32.totalorder %v3056, 1
        %v3073 = vsel %vm3057, %v1634, -1e+30
        %v3074 = vsel %vm3058, %v1637, -1e+30
        %v3075 = vsel %vm3059, %v1642, -1e+30
        %v3076 = vsel %vm3060, %v1645, -1e+30
        %v3077 = vsel %vm3061, %v1650, -1e+30
        %v3078 = vsel %vm3062, %v1653, -1e+30
        %v3079 = vsel %vm3063, %v1658, -1e+30
        %v3080 = vsel %vm3064, %v1661, -1e+30
        %v3081 = vsel %vm3065, %v1666, -1e+30
        %v3082 = vsel %vm3066, %v1669, -1e+30
        %v3083 = vsel %vm3067, %v1674, -1e+30
        %v3084 = vsel %vm3068, %v1677, -1e+30
        %v3085 = vsel %vm3069, %v1682, -1e+30
        %v3086 = vsel %vm3070, %v1685, -1e+30
        %v3087 = vsel %vm3071, %v1690, -1e+30
        %v3088 = vsel %vm3072, %v1693, -1e+30
        %v3089 = vmax.f32 %v3073, %v3077
        %v3090 = vmax.f32 %v3074, %v3078
        %v3091 = vmax.f32 %v3075, %v3079
        %v3092 = vmax.f32 %v3076, %v3080
        %v3093 = vmax.f32 %v3089, %v3081
        %v3094 = vmax.f32 %v3090, %v3082
        %v3095 = vmax.f32 %v3091, %v3083
        %v3096 = vmax.f32 %v3092, %v3084
        %v3097 = vmax.f32 %v3093, %v3085
        %v3098 = vmax.f32 %v3094, %v3086
        %v3099 = vmax.f32 %v3095, %v3087
        %v3100 = vmax.f32 %v3096, %v3088
        %v3101 = vmax.f32 %v3097, %v3098
        %v3102 = vmax.f32 %v3099, %v3100
        %v3103 = vmax.f32 %v3101, %v3102
        %v3104 = vrot.slane %v3103, 4
        %v3105 = vmax.f32 %v3103, %v3104
        %v3106 = vrot.slane %v3105, 2
        %v3107 = vmax.f32 %v3105, %v3106
        %v3108 = vrot.slane %v3107, 1
        %v3109 = vmax.f32 %v3107, %v3108
        %3110 = vset.pattern.permute.xlu0 14
        %3111 = vperm.xlu0 %3110, %v598
        %v3112 = vpop.permute.xlu0 %3111
        %3113 = vset.pattern.permute.xlu0 14
        %3114 = vperm.xlu0 %3113, %v599
        %v3115 = vpop.permute.xlu0 %3114
        %3116 = vset.pattern.permute.xlu0 14
        %3117 = vperm.xlu0 %3116, %v600
        %v3118 = vpop.permute.xlu0 %3117
        %3119 = vset.pattern.permute.xlu0 14
        %3120 = vperm.xlu0 %3119, %v601
        %v3121 = vpop.permute.xlu0 %3120
        %3122 = vset.pattern.permute.xlu0 14
        %3123 = vperm.xlu0 %3122, %v602
        %v3124 = vpop.permute.xlu0 %3123
        %3125 = vset.pattern.permute.xlu0 14
        %3126 = vperm.xlu0 %3125, %v603
        %v3127 = vpop.permute.xlu0 %3126
        %3128 = vset.pattern.permute.xlu0 14
        %3129 = vperm.xlu0 %3128, %v604
        %v3130 = vpop.permute.xlu0 %3129
        %3131 = vset.pattern.permute.xlu0 14
        %3132 = vperm.xlu0 %3131, %v605
        %v3133 = vpop.permute.xlu0 %3132
        %3134 = vset.pattern.permute.xlu0 14
        %3135 = vperm.xlu0 %3134, %v606
        %v3136 = vpop.permute.xlu0 %3135
        %3137 = vset.pattern.permute.xlu0 14
        %3138 = vperm.xlu0 %3137, %v607
        %v3139 = vpop.permute.xlu0 %3138
        %3140 = vset.pattern.permute.xlu0 14
        %3141 = vperm.xlu0 %3140, %v608
        %v3142 = vpop.permute.xlu0 %3141
        %3143 = vset.pattern.permute.xlu0 14
        %3144 = vperm.xlu0 %3143, %v609
        %v3145 = vpop.permute.xlu0 %3144
        %3146 = vset.pattern.permute.xlu0 14
        %3147 = vperm.xlu0 %3146, %v610
        %v3148 = vpop.permute.xlu0 %3147
        %3149 = vset.pattern.permute.xlu0 14
        %3150 = vperm.xlu0 %3149, %v611
        %v3151 = vpop.permute.xlu0 %3150
        %3152 = vset.pattern.permute.xlu0 14
        %3153 = vperm.xlu0 %3152, %v612
        %v3154 = vpop.permute.xlu0 %3153
        %3155 = vset.pattern.permute.xlu0 14
        %3156 = vperm.xlu0 %3155, %v613
        %v3157 = vpop.permute.xlu0 %3156
        %vm3158 = vcmp.eq.s32.totalorder %v3112, 1
        %vm3159 = vcmp.eq.s32.totalorder %v3115, 1
        %vm3160 = vcmp.eq.s32.totalorder %v3118, 1
        %vm3161 = vcmp.eq.s32.totalorder %v3121, 1
        %vm3162 = vcmp.eq.s32.totalorder %v3124, 1
        %vm3163 = vcmp.eq.s32.totalorder %v3127, 1
        %vm3164 = vcmp.eq.s32.totalorder %v3130, 1
        %vm3165 = vcmp.eq.s32.totalorder %v3133, 1
        %vm3166 = vcmp.eq.s32.totalorder %v3136, 1
        %vm3167 = vcmp.eq.s32.totalorder %v3139, 1
        %vm3168 = vcmp.eq.s32.totalorder %v3142, 1
        %vm3169 = vcmp.eq.s32.totalorder %v3145, 1
        %vm3170 = vcmp.eq.s32.totalorder %v3148, 1
        %vm3171 = vcmp.eq.s32.totalorder %v3151, 1
        %vm3172 = vcmp.eq.s32.totalorder %v3154, 1
        %vm3173 = vcmp.eq.s32.totalorder %v3157, 1
        %v3174 = vsel %vm3158, %v1634, -1e+30
        %v3175 = vsel %vm3159, %v1637, -1e+30
        %v3176 = vsel %vm3160, %v1642, -1e+30
        %v3177 = vsel %vm3161, %v1645, -1e+30
        %v3178 = vsel %vm3162, %v1650, -1e+30
        %v3179 = vsel %vm3163, %v1653, -1e+30
        %v3180 = vsel %vm3164, %v1658, -1e+30
        %v3181 = vsel %vm3165, %v1661, -1e+30
        %v3182 = vsel %vm3166, %v1666, -1e+30
        %v3183 = vsel %vm3167, %v1669, -1e+30
        %v3184 = vsel %vm3168, %v1674, -1e+30
        %v3185 = vsel %vm3169, %v1677, -1e+30
        %v3186 = vsel %vm3170, %v1682, -1e+30
        %v3187 = vsel %vm3171, %v1685, -1e+30
        %v3188 = vsel %vm3172, %v1690, -1e+30
        %v3189 = vsel %vm3173, %v1693, -1e+30
        %v3190 = vmax.f32 %v3174, %v3178
        %v3191 = vmax.f32 %v3175, %v3179
        %v3192 = vmax.f32 %v3176, %v3180
        %v3193 = vmax.f32 %v3177, %v3181
        %v3194 = vmax.f32 %v3190, %v3182
        %v3195 = vmax.f32 %v3191, %v3183
        %v3196 = vmax.f32 %v3192, %v3184
        %v3197 = vmax.f32 %v3193, %v3185
        %v3198 = vmax.f32 %v3194, %v3186
        %v3199 = vmax.f32 %v3195, %v3187
        %v3200 = vmax.f32 %v3196, %v3188
        %v3201 = vmax.f32 %v3197, %v3189
        %v3202 = vmax.f32 %v3198, %v3199
        %v3203 = vmax.f32 %v3200, %v3201
        %v3204 = vmax.f32 %v3202, %v3203
        %v3205 = vrot.slane %v3204, 4
        %v3206 = vmax.f32 %v3204, %v3205
        %v3207 = vrot.slane %v3206, 2
        %v3208 = vmax.f32 %v3206, %v3207
        %v3209 = vrot.slane %v3208, 1
        %v3210 = vmax.f32 %v3208, %v3209
        %3211 = vset.pattern.permute.xlu0 15
        %3212 = vperm.xlu0 %3211, %v598
        %v3213 = vpop.permute.xlu0 %3212
        %3214 = vset.pattern.permute.xlu0 15
        %3215 = vperm.xlu0 %3214, %v599
        %v3216 = vpop.permute.xlu0 %3215
        %3217 = vset.pattern.permute.xlu0 15
        %3218 = vperm.xlu0 %3217, %v600
        %v3219 = vpop.permute.xlu0 %3218
        %3220 = vset.pattern.permute.xlu0 15
        %3221 = vperm.xlu0 %3220, %v601
        %v3222 = vpop.permute.xlu0 %3221
        %3223 = vset.pattern.permute.xlu0 15
        %3224 = vperm.xlu0 %3223, %v602
        %v3225 = vpop.permute.xlu0 %3224
        %3226 = vset.pattern.permute.xlu0 15
        %3227 = vperm.xlu0 %3226, %v603
        %v3228 = vpop.permute.xlu0 %3227
        %3229 = vset.pattern.permute.xlu0 15
        %3230 = vperm.xlu0 %3229, %v604
        %v3231 = vpop.permute.xlu0 %3230
        %3232 = vset.pattern.permute.xlu0 15
        %3233 = vperm.xlu0 %3232, %v605
        %v3234 = vpop.permute.xlu0 %3233
        %3235 = vset.pattern.permute.xlu0 15
        %3236 = vperm.xlu0 %3235, %v606
        %v3237 = vpop.permute.xlu0 %3236
        %3238 = vset.pattern.permute.xlu0 15
        %3239 = vperm.xlu0 %3238, %v607
        %v3240 = vpop.permute.xlu0 %3239
        %3241 = vset.pattern.permute.xlu0 15
        %3242 = vperm.xlu0 %3241, %v608
        %v3243 = vpop.permute.xlu0 %3242
        %3244 = vset.pattern.permute.xlu0 15
        %3245 = vperm.xlu0 %3244, %v609
        %v3246 = vpop.permute.xlu0 %3245
        %3247 = vset.pattern.permute.xlu0 15
        %3248 = vperm.xlu0 %3247, %v610
        %v3249 = vpop.permute.xlu0 %3248
        %3250 = vset.pattern.permute.xlu0 15
        %3251 = vperm.xlu0 %3250, %v611
        %v3252 = vpop.permute.xlu0 %3251
        %3253 = vset.pattern.permute.xlu0 15
        %3254 = vperm.xlu0 %3253, %v612
        %v3255 = vpop.permute.xlu0 %3254
        %3256 = vset.pattern.permute.xlu0 15
        %3257 = vperm.xlu0 %3256, %v613
        %v3258 = vpop.permute.xlu0 %3257
        %vm3259 = vcmp.eq.s32.totalorder %v3213, 1
        %vm3260 = vcmp.eq.s32.totalorder %v3216, 1
        %vm3261 = vcmp.eq.s32.totalorder %v3219, 1
        %vm3262 = vcmp.eq.s32.totalorder %v3222, 1
        %vm3263 = vcmp.eq.s32.totalorder %v3225, 1
        %vm3264 = vcmp.eq.s32.totalorder %v3228, 1
        %vm3265 = vcmp.eq.s32.totalorder %v3231, 1
        %vm3266 = vcmp.eq.s32.totalorder %v3234, 1
        %vm3267 = vcmp.eq.s32.totalorder %v3237, 1
        %vm3268 = vcmp.eq.s32.totalorder %v3240, 1
        %vm3269 = vcmp.eq.s32.totalorder %v3243, 1
        %vm3270 = vcmp.eq.s32.totalorder %v3246, 1
        %vm3271 = vcmp.eq.s32.totalorder %v3249, 1
        %vm3272 = vcmp.eq.s32.totalorder %v3252, 1
        %vm3273 = vcmp.eq.s32.totalorder %v3255, 1
        %vm3274 = vcmp.eq.s32.totalorder %v3258, 1
        %v3275 = vsel %vm3259, %v1634, -1e+30
        %v3276 = vsel %vm3260, %v1637, -1e+30
        %v3277 = vsel %vm3261, %v1642, -1e+30
        %v3278 = vsel %vm3262, %v1645, -1e+30
        %v3279 = vsel %vm3263, %v1650, -1e+30
        %v3280 = vsel %vm3264, %v1653, -1e+30
        %v3281 = vsel %vm3265, %v1658, -1e+30
        %v3282 = vsel %vm3266, %v1661, -1e+30
        %v3283 = vsel %vm3267, %v1666, -1e+30
        %v3284 = vsel %vm3268, %v1669, -1e+30
        %v3285 = vsel %vm3269, %v1674, -1e+30
        %v3286 = vsel %vm3270, %v1677, -1e+30
        %v3287 = vsel %vm3271, %v1682, -1e+30
        %v3288 = vsel %vm3272, %v1685, -1e+30
        %v3289 = vsel %vm3273, %v1690, -1e+30
        %v3290 = vsel %vm3274, %v1693, -1e+30
        %v3291 = vmax.f32 %v3275, %v3279
        %v3292 = vmax.f32 %v3276, %v3280
        %v3293 = vmax.f32 %v3277, %v3281
        %v3294 = vmax.f32 %v3278, %v3282
        %v3295 = vmax.f32 %v3291, %v3283
        %v3296 = vmax.f32 %v3292, %v3284
        %v3297 = vmax.f32 %v3293, %v3285
        %v3298 = vmax.f32 %v3294, %v3286
        %v3299 = vmax.f32 %v3295, %v3287
        %v3300 = vmax.f32 %v3296, %v3288
        %v3301 = vmax.f32 %v3297, %v3289
        %v3302 = vmax.f32 %v3298, %v3290
        %v3303 = vmax.f32 %v3299, %v3300
        %v3304 = vmax.f32 %v3301, %v3302
        %v3305 = vmax.f32 %v3303, %v3304
        %v3306 = vrot.slane %v3305, 4
        %v3307 = vmax.f32 %v3305, %v3306
        %v3308 = vrot.slane %v3307, 2
        %v3309 = vmax.f32 %v3307, %v3308
        %v3310 = vrot.slane %v3309, 1
        %v3311 = vmax.f32 %v3309, %v3310
        %3312 = vset.pattern.permute.xlu0 16
        %3313 = vperm.xlu0 %3312, %v598
        %v3314 = vpop.permute.xlu0 %3313
        %3315 = vset.pattern.permute.xlu0 16
        %3316 = vperm.xlu0 %3315, %v599
        %v3317 = vpop.permute.xlu0 %3316
        %3318 = vset.pattern.permute.xlu0 16
        %3319 = vperm.xlu0 %3318, %v600
        %v3320 = vpop.permute.xlu0 %3319
        %3321 = vset.pattern.permute.xlu0 16
        %3322 = vperm.xlu0 %3321, %v601
        %v3323 = vpop.permute.xlu0 %3322
        %3324 = vset.pattern.permute.xlu0 16
        %3325 = vperm.xlu0 %3324, %v602
        %v3326 = vpop.permute.xlu0 %3325
        %3327 = vset.pattern.permute.xlu0 16
        %3328 = vperm.xlu0 %3327, %v603
        %v3329 = vpop.permute.xlu0 %3328
        %3330 = vset.pattern.permute.xlu0 16
        %3331 = vperm.xlu0 %3330, %v604
        %v3332 = vpop.permute.xlu0 %3331
        %3333 = vset.pattern.permute.xlu0 16
        %3334 = vperm.xlu0 %3333, %v605
        %v3335 = vpop.permute.xlu0 %3334
        %3336 = vset.pattern.permute.xlu0 16
        %3337 = vperm.xlu0 %3336, %v606
        %v3338 = vpop.permute.xlu0 %3337
        %3339 = vset.pattern.permute.xlu0 16
        %3340 = vperm.xlu0 %3339, %v607
        %v3341 = vpop.permute.xlu0 %3340
        %3342 = vset.pattern.permute.xlu0 16
        %3343 = vperm.xlu0 %3342, %v608
        %v3344 = vpop.permute.xlu0 %3343
        %3345 = vset.pattern.permute.xlu0 16
        %3346 = vperm.xlu0 %3345, %v609
        %v3347 = vpop.permute.xlu0 %3346
        %3348 = vset.pattern.permute.xlu0 16
        %3349 = vperm.xlu0 %3348, %v610
        %v3350 = vpop.permute.xlu0 %3349
        %3351 = vset.pattern.permute.xlu0 16
        %3352 = vperm.xlu0 %3351, %v611
        %v3353 = vpop.permute.xlu0 %3352
        %3354 = vset.pattern.permute.xlu0 16
        %3355 = vperm.xlu0 %3354, %v612
        %v3356 = vpop.permute.xlu0 %3355
        %3357 = vset.pattern.permute.xlu0 16
        %3358 = vperm.xlu0 %3357, %v613
        %v3359 = vpop.permute.xlu0 %3358
        %vm3360 = vcmp.eq.s32.totalorder %v3314, 1
        %vm3361 = vcmp.eq.s32.totalorder %v3317, 1
        %vm3362 = vcmp.eq.s32.totalorder %v3320, 1
        %vm3363 = vcmp.eq.s32.totalorder %v3323, 1
        %vm3364 = vcmp.eq.s32.totalorder %v3326, 1
        %vm3365 = vcmp.eq.s32.totalorder %v3329, 1
        %vm3366 = vcmp.eq.s32.totalorder %v3332, 1
        %vm3367 = vcmp.eq.s32.totalorder %v3335, 1
        %vm3368 = vcmp.eq.s32.totalorder %v3338, 1
        %vm3369 = vcmp.eq.s32.totalorder %v3341, 1
        %vm3370 = vcmp.eq.s32.totalorder %v3344, 1
        %vm3371 = vcmp.eq.s32.totalorder %v3347, 1
        %vm3372 = vcmp.eq.s32.totalorder %v3350, 1
        %vm3373 = vcmp.eq.s32.totalorder %v3353, 1
        %vm3374 = vcmp.eq.s32.totalorder %v3356, 1
        %vm3375 = vcmp.eq.s32.totalorder %v3359, 1
        %v3376 = vsel %vm3360, %v1634, -1e+30
        %v3377 = vsel %vm3361, %v1637, -1e+30
        %v3378 = vsel %vm3362, %v1642, -1e+30
        %v3379 = vsel %vm3363, %v1645, -1e+30
        %v3380 = vsel %vm3364, %v1650, -1e+30
        %v3381 = vsel %vm3365, %v1653, -1e+30
        %v3382 = vsel %vm3366, %v1658, -1e+30
        %v3383 = vsel %vm3367, %v1661, -1e+30
        %v3384 = vsel %vm3368, %v1666, -1e+30
        %v3385 = vsel %vm3369, %v1669, -1e+30
        %v3386 = vsel %vm3370, %v1674, -1e+30
        %v3387 = vsel %vm3371, %v1677, -1e+30
        %v3388 = vsel %vm3372, %v1682, -1e+30
        %v3389 = vsel %vm3373, %v1685, -1e+30
        %v3390 = vsel %vm3374, %v1690, -1e+30
        %v3391 = vsel %vm3375, %v1693, -1e+30
        %v3392 = vmax.f32 %v3376, %v3380
        %v3393 = vmax.f32 %v3377, %v3381
        %v3394 = vmax.f32 %v3378, %v3382
        %v3395 = vmax.f32 %v3379, %v3383
        %v3396 = vmax.f32 %v3392, %v3384
        %v3397 = vmax.f32 %v3393, %v3385
        %v3398 = vmax.f32 %v3394, %v3386
        %v3399 = vmax.f32 %v3395, %v3387
        %v3400 = vmax.f32 %v3396, %v3388
        %v3401 = vmax.f32 %v3397, %v3389
        %v3402 = vmax.f32 %v3398, %v3390
        %v3403 = vmax.f32 %v3399, %v3391
        %v3404 = vmax.f32 %v3400, %v3401
        %v3405 = vmax.f32 %v3402, %v3403
        %v3406 = vmax.f32 %v3404, %v3405
        %v3407 = vrot.slane %v3406, 4
        %v3408 = vmax.f32 %v3406, %v3407
        %v3409 = vrot.slane %v3408, 2
        %v3410 = vmax.f32 %v3408, %v3409
        %v3411 = vrot.slane %v3410, 1
        %v3412 = vmax.f32 %v3410, %v3411
        %3413 = vset.pattern.permute.xlu0 17
        %3414 = vperm.xlu0 %3413, %v598
        %v3415 = vpop.permute.xlu0 %3414
        %3416 = vset.pattern.permute.xlu0 17
        %3417 = vperm.xlu0 %3416, %v599
        %v3418 = vpop.permute.xlu0 %3417
        %3419 = vset.pattern.permute.xlu0 17
        %3420 = vperm.xlu0 %3419, %v600
        %v3421 = vpop.permute.xlu0 %3420
        %3422 = vset.pattern.permute.xlu0 17
        %3423 = vperm.xlu0 %3422, %v601
        %v3424 = vpop.permute.xlu0 %3423
        %3425 = vset.pattern.permute.xlu0 17
        %3426 = vperm.xlu0 %3425, %v602
        %v3427 = vpop.permute.xlu0 %3426
        %3428 = vset.pattern.permute.xlu0 17
        %3429 = vperm.xlu0 %3428, %v603
        %v3430 = vpop.permute.xlu0 %3429
        %3431 = vset.pattern.permute.xlu0 17
        %3432 = vperm.xlu0 %3431, %v604
        %v3433 = vpop.permute.xlu0 %3432
        %3434 = vset.pattern.permute.xlu0 17
        %3435 = vperm.xlu0 %3434, %v605
        %v3436 = vpop.permute.xlu0 %3435
        %3437 = vset.pattern.permute.xlu0 17
        %3438 = vperm.xlu0 %3437, %v606
        %v3439 = vpop.permute.xlu0 %3438
        %3440 = vset.pattern.permute.xlu0 17
        %3441 = vperm.xlu0 %3440, %v607
        %v3442 = vpop.permute.xlu0 %3441
        %3443 = vset.pattern.permute.xlu0 17
        %3444 = vperm.xlu0 %3443, %v608
        %v3445 = vpop.permute.xlu0 %3444
        %3446 = vset.pattern.permute.xlu0 17
        %3447 = vperm.xlu0 %3446, %v609
        %v3448 = vpop.permute.xlu0 %3447
        %3449 = vset.pattern.permute.xlu0 17
        %3450 = vperm.xlu0 %3449, %v610
        %v3451 = vpop.permute.xlu0 %3450
        %3452 = vset.pattern.permute.xlu0 17
        %3453 = vperm.xlu0 %3452, %v611
        %v3454 = vpop.permute.xlu0 %3453
        %3455 = vset.pattern.permute.xlu0 17
        %3456 = vperm.xlu0 %3455, %v612
        %v3457 = vpop.permute.xlu0 %3456
        %3458 = vset.pattern.permute.xlu0 17
        %3459 = vperm.xlu0 %3458, %v613
        %v3460 = vpop.permute.xlu0 %3459
        %vm3461 = vcmp.eq.s32.totalorder %v3415, 1
        %vm3462 = vcmp.eq.s32.totalorder %v3418, 1
        %vm3463 = vcmp.eq.s32.totalorder %v3421, 1
        %vm3464 = vcmp.eq.s32.totalorder %v3424, 1
        %vm3465 = vcmp.eq.s32.totalorder %v3427, 1
        %vm3466 = vcmp.eq.s32.totalorder %v3430, 1
        %vm3467 = vcmp.eq.s32.totalorder %v3433, 1
        %vm3468 = vcmp.eq.s32.totalorder %v3436, 1
        %vm3469 = vcmp.eq.s32.totalorder %v3439, 1
        %vm3470 = vcmp.eq.s32.totalorder %v3442, 1
        %vm3471 = vcmp.eq.s32.totalorder %v3445, 1
        %vm3472 = vcmp.eq.s32.totalorder %v3448, 1
        %vm3473 = vcmp.eq.s32.totalorder %v3451, 1
        %vm3474 = vcmp.eq.s32.totalorder %v3454, 1
        %vm3475 = vcmp.eq.s32.totalorder %v3457, 1
        %vm3476 = vcmp.eq.s32.totalorder %v3460, 1
        %v3477 = vsel %vm3461, %v1634, -1e+30
        %v3478 = vsel %vm3462, %v1637, -1e+30
        %v3479 = vsel %vm3463, %v1642, -1e+30
        %v3480 = vsel %vm3464, %v1645, -1e+30
        %v3481 = vsel %vm3465, %v1650, -1e+30
        %v3482 = vsel %vm3466, %v1653, -1e+30
        %v3483 = vsel %vm3467, %v1658, -1e+30
        %v3484 = vsel %vm3468, %v1661, -1e+30
        %v3485 = vsel %vm3469, %v1666, -1e+30
        %v3486 = vsel %vm3470, %v1669, -1e+30
        %v3487 = vsel %vm3471, %v1674, -1e+30
        %v3488 = vsel %vm3472, %v1677, -1e+30
        %v3489 = vsel %vm3473, %v1682, -1e+30
        %v3490 = vsel %vm3474, %v1685, -1e+30
        %v3491 = vsel %vm3475, %v1690, -1e+30
        %v3492 = vsel %vm3476, %v1693, -1e+30
        %v3493 = vmax.f32 %v3477, %v3481
        %v3494 = vmax.f32 %v3478, %v3482
        %v3495 = vmax.f32 %v3479, %v3483
        %v3496 = vmax.f32 %v3480, %v3484
        %v3497 = vmax.f32 %v3493, %v3485
        %v3498 = vmax.f32 %v3494, %v3486
        %v3499 = vmax.f32 %v3495, %v3487
        %v3500 = vmax.f32 %v3496, %v3488
        %v3501 = vmax.f32 %v3497, %v3489
        %v3502 = vmax.f32 %v3498, %v3490
        %v3503 = vmax.f32 %v3499, %v3491
        %v3504 = vmax.f32 %v3500, %v3492
        %v3505 = vmax.f32 %v3501, %v3502
        %v3506 = vmax.f32 %v3503, %v3504
        %v3507 = vmax.f32 %v3505, %v3506
        %v3508 = vrot.slane %v3507, 4
        %v3509 = vmax.f32 %v3507, %v3508
        %v3510 = vrot.slane %v3509, 2
        %v3511 = vmax.f32 %v3509, %v3510
        %v3512 = vrot.slane %v3511, 1
        %v3513 = vmax.f32 %v3511, %v3512
        %3514 = vset.pattern.permute.xlu0 18
        %3515 = vperm.xlu0 %3514, %v598
        %v3516 = vpop.permute.xlu0 %3515
        %3517 = vset.pattern.permute.xlu0 18
        %3518 = vperm.xlu0 %3517, %v599
        %v3519 = vpop.permute.xlu0 %3518
        %3520 = vset.pattern.permute.xlu0 18
        %3521 = vperm.xlu0 %3520, %v600
        %v3522 = vpop.permute.xlu0 %3521
        %3523 = vset.pattern.permute.xlu0 18
        %3524 = vperm.xlu0 %3523, %v601
        %v3525 = vpop.permute.xlu0 %3524
        %3526 = vset.pattern.permute.xlu0 18
        %3527 = vperm.xlu0 %3526, %v602
        %v3528 = vpop.permute.xlu0 %3527
        %3529 = vset.pattern.permute.xlu0 18
        %3530 = vperm.xlu0 %3529, %v603
        %v3531 = vpop.permute.xlu0 %3530
        %3532 = vset.pattern.permute.xlu0 18
        %3533 = vperm.xlu0 %3532, %v604
        %v3534 = vpop.permute.xlu0 %3533
        %3535 = vset.pattern.permute.xlu0 18
        %3536 = vperm.xlu0 %3535, %v605
        %v3537 = vpop.permute.xlu0 %3536
        %3538 = vset.pattern.permute.xlu0 18
        %3539 = vperm.xlu0 %3538, %v606
        %v3540 = vpop.permute.xlu0 %3539
        %3541 = vset.pattern.permute.xlu0 18
        %3542 = vperm.xlu0 %3541, %v607
        %v3543 = vpop.permute.xlu0 %3542
        %3544 = vset.pattern.permute.xlu0 18
        %3545 = vperm.xlu0 %3544, %v608
        %v3546 = vpop.permute.xlu0 %3545
        %3547 = vset.pattern.permute.xlu0 18
        %3548 = vperm.xlu0 %3547, %v609
        %v3549 = vpop.permute.xlu0 %3548
        %3550 = vset.pattern.permute.xlu0 18
        %3551 = vperm.xlu0 %3550, %v610
        %v3552 = vpop.permute.xlu0 %3551
        %3553 = vset.pattern.permute.xlu0 18
        %3554 = vperm.xlu0 %3553, %v611
        %v3555 = vpop.permute.xlu0 %3554
        %3556 = vset.pattern.permute.xlu0 18
        %3557 = vperm.xlu0 %3556, %v612
        %v3558 = vpop.permute.xlu0 %3557
        %3559 = vset.pattern.permute.xlu0 18
        %3560 = vperm.xlu0 %3559, %v613
        %v3561 = vpop.permute.xlu0 %3560
        %vm3562 = vcmp.eq.s32.totalorder %v3516, 1
        %vm3563 = vcmp.eq.s32.totalorder %v3519, 1
        %vm3564 = vcmp.eq.s32.totalorder %v3522, 1
        %vm3565 = vcmp.eq.s32.totalorder %v3525, 1
        %vm3566 = vcmp.eq.s32.totalorder %v3528, 1
        %vm3567 = vcmp.eq.s32.totalorder %v3531, 1
        %vm3568 = vcmp.eq.s32.totalorder %v3534, 1
        %vm3569 = vcmp.eq.s32.totalorder %v3537, 1
        %vm3570 = vcmp.eq.s32.totalorder %v3540, 1
        %vm3571 = vcmp.eq.s32.totalorder %v3543, 1
        %vm3572 = vcmp.eq.s32.totalorder %v3546, 1
        %vm3573 = vcmp.eq.s32.totalorder %v3549, 1
        %vm3574 = vcmp.eq.s32.totalorder %v3552, 1
        %vm3575 = vcmp.eq.s32.totalorder %v3555, 1
        %vm3576 = vcmp.eq.s32.totalorder %v3558, 1
        %vm3577 = vcmp.eq.s32.totalorder %v3561, 1
        %v3578 = vsel %vm3562, %v1634, -1e+30
        %v3579 = vsel %vm3563, %v1637, -1e+30
        %v3580 = vsel %vm3564, %v1642, -1e+30
        %v3581 = vsel %vm3565, %v1645, -1e+30
        %v3582 = vsel %vm3566, %v1650, -1e+30
        %v3583 = vsel %vm3567, %v1653, -1e+30
        %v3584 = vsel %vm3568, %v1658, -1e+30
        %v3585 = vsel %vm3569, %v1661, -1e+30
        %v3586 = vsel %vm3570, %v1666, -1e+30
        %v3587 = vsel %vm3571, %v1669, -1e+30
        %v3588 = vsel %vm3572, %v1674, -1e+30
        %v3589 = vsel %vm3573, %v1677, -1e+30
        %v3590 = vsel %vm3574, %v1682, -1e+30
        %v3591 = vsel %vm3575, %v1685, -1e+30
        %v3592 = vsel %vm3576, %v1690, -1e+30
        %v3593 = vsel %vm3577, %v1693, -1e+30
        %v3594 = vmax.f32 %v3578, %v3582
        %v3595 = vmax.f32 %v3579, %v3583
        %v3596 = vmax.f32 %v3580, %v3584
        %v3597 = vmax.f32 %v3581, %v3585
        %v3598 = vmax.f32 %v3594, %v3586
        %v3599 = vmax.f32 %v3595, %v3587
        %v3600 = vmax.f32 %v3596, %v3588
        %v3601 = vmax.f32 %v3597, %v3589
        %v3602 = vmax.f32 %v3598, %v3590
        %v3603 = vmax.f32 %v3599, %v3591
        %v3604 = vmax.f32 %v3600, %v3592
        %v3605 = vmax.f32 %v3601, %v3593
        %v3606 = vmax.f32 %v3602, %v3603
        %v3607 = vmax.f32 %v3604, %v3605
        %v3608 = vmax.f32 %v3606, %v3607
        %v3609 = vrot.slane %v3608, 4
        %v3610 = vmax.f32 %v3608, %v3609
        %v3611 = vrot.slane %v3610, 2
        %v3612 = vmax.f32 %v3610, %v3611
        %v3613 = vrot.slane %v3612, 1
        %v3614 = vmax.f32 %v3612, %v3613
        %3615 = vset.pattern.permute.xlu0 19
        %3616 = vperm.xlu0 %3615, %v598
        %v3617 = vpop.permute.xlu0 %3616
        %3618 = vset.pattern.permute.xlu0 19
        %3619 = vperm.xlu0 %3618, %v599
        %v3620 = vpop.permute.xlu0 %3619
        %3621 = vset.pattern.permute.xlu0 19
        %3622 = vperm.xlu0 %3621, %v600
        %v3623 = vpop.permute.xlu0 %3622
        %3624 = vset.pattern.permute.xlu0 19
        %3625 = vperm.xlu0 %3624, %v601
        %v3626 = vpop.permute.xlu0 %3625
        %3627 = vset.pattern.permute.xlu0 19
        %3628 = vperm.xlu0 %3627, %v602
        %v3629 = vpop.permute.xlu0 %3628
        %3630 = vset.pattern.permute.xlu0 19
        %3631 = vperm.xlu0 %3630, %v603
        %v3632 = vpop.permute.xlu0 %3631
        %3633 = vset.pattern.permute.xlu0 19
        %3634 = vperm.xlu0 %3633, %v604
        %v3635 = vpop.permute.xlu0 %3634
        %3636 = vset.pattern.permute.xlu0 19
        %3637 = vperm.xlu0 %3636, %v605
        %v3638 = vpop.permute.xlu0 %3637
        %3639 = vset.pattern.permute.xlu0 19
        %3640 = vperm.xlu0 %3639, %v606
        %v3641 = vpop.permute.xlu0 %3640
        %3642 = vset.pattern.permute.xlu0 19
        %3643 = vperm.xlu0 %3642, %v607
        %v3644 = vpop.permute.xlu0 %3643
        %3645 = vset.pattern.permute.xlu0 19
        %3646 = vperm.xlu0 %3645, %v608
        %v3647 = vpop.permute.xlu0 %3646
        %3648 = vset.pattern.permute.xlu0 19
        %3649 = vperm.xlu0 %3648, %v609
        %v3650 = vpop.permute.xlu0 %3649
        %3651 = vset.pattern.permute.xlu0 19
        %3652 = vperm.xlu0 %3651, %v610
        %v3653 = vpop.permute.xlu0 %3652
        %3654 = vset.pattern.permute.xlu0 19
        %3655 = vperm.xlu0 %3654, %v611
        %v3656 = vpop.permute.xlu0 %3655
        %3657 = vset.pattern.permute.xlu0 19
        %3658 = vperm.xlu0 %3657, %v612
        %v3659 = vpop.permute.xlu0 %3658
        %3660 = vset.pattern.permute.xlu0 19
        %3661 = vperm.xlu0 %3660, %v613
        %v3662 = vpop.permute.xlu0 %3661
        %vm3663 = vcmp.eq.s32.totalorder %v3617, 1
        %vm3664 = vcmp.eq.s32.totalorder %v3620, 1
        %vm3665 = vcmp.eq.s32.totalorder %v3623, 1
        %vm3666 = vcmp.eq.s32.totalorder %v3626, 1
        %vm3667 = vcmp.eq.s32.totalorder %v3629, 1
        %vm3668 = vcmp.eq.s32.totalorder %v3632, 1
        %vm3669 = vcmp.eq.s32.totalorder %v3635, 1
        %vm3670 = vcmp.eq.s32.totalorder %v3638, 1
        %vm3671 = vcmp.eq.s32.totalorder %v3641, 1
        %vm3672 = vcmp.eq.s32.totalorder %v3644, 1
        %vm3673 = vcmp.eq.s32.totalorder %v3647, 1
        %vm3674 = vcmp.eq.s32.totalorder %v3650, 1
        %vm3675 = vcmp.eq.s32.totalorder %v3653, 1
        %vm3676 = vcmp.eq.s32.totalorder %v3656, 1
        %vm3677 = vcmp.eq.s32.totalorder %v3659, 1
        %vm3678 = vcmp.eq.s32.totalorder %v3662, 1
        %v3679 = vsel %vm3663, %v1634, -1e+30
        %v3680 = vsel %vm3664, %v1637, -1e+30
        %v3681 = vsel %vm3665, %v1642, -1e+30
        %v3682 = vsel %vm3666, %v1645, -1e+30
        %v3683 = vsel %vm3667, %v1650, -1e+30
        %v3684 = vsel %vm3668, %v1653, -1e+30
        %v3685 = vsel %vm3669, %v1658, -1e+30
        %v3686 = vsel %vm3670, %v1661, -1e+30
        %v3687 = vsel %vm3671, %v1666, -1e+30
        %v3688 = vsel %vm3672, %v1669, -1e+30
        %v3689 = vsel %vm3673, %v1674, -1e+30
        %v3690 = vsel %vm3674, %v1677, -1e+30
        %v3691 = vsel %vm3675, %v1682, -1e+30
        %v3692 = vsel %vm3676, %v1685, -1e+30
        %v3693 = vsel %vm3677, %v1690, -1e+30
        %v3694 = vsel %vm3678, %v1693, -1e+30
        %v3695 = vmax.f32 %v3679, %v3683
        %v3696 = vmax.f32 %v3680, %v3684
        %v3697 = vmax.f32 %v3681, %v3685
        %v3698 = vmax.f32 %v3682, %v3686
        %v3699 = vmax.f32 %v3695, %v3687
        %v3700 = vmax.f32 %v3696, %v3688
        %v3701 = vmax.f32 %v3697, %v3689
        %v3702 = vmax.f32 %v3698, %v3690
        %v3703 = vmax.f32 %v3699, %v3691
        %v3704 = vmax.f32 %v3700, %v3692
        %v3705 = vmax.f32 %v3701, %v3693
        %v3706 = vmax.f32 %v3702, %v3694
        %v3707 = vmax.f32 %v3703, %v3704
        %v3708 = vmax.f32 %v3705, %v3706
        %v3709 = vmax.f32 %v3707, %v3708
        %v3710 = vrot.slane %v3709, 4
        %v3711 = vmax.f32 %v3709, %v3710
        %v3712 = vrot.slane %v3711, 2
        %v3713 = vmax.f32 %v3711, %v3712
        %v3714 = vrot.slane %v3713, 1
        %v3715 = vmax.f32 %v3713, %v3714
        %3716 = vset.pattern.permute.xlu0 20
        %3717 = vperm.xlu0 %3716, %v598
        %v3718 = vpop.permute.xlu0 %3717
        %3719 = vset.pattern.permute.xlu0 20
        %3720 = vperm.xlu0 %3719, %v599
        %v3721 = vpop.permute.xlu0 %3720
        %3722 = vset.pattern.permute.xlu0 20
        %3723 = vperm.xlu0 %3722, %v600
        %v3724 = vpop.permute.xlu0 %3723
        %3725 = vset.pattern.permute.xlu0 20
        %3726 = vperm.xlu0 %3725, %v601
        %v3727 = vpop.permute.xlu0 %3726
        %3728 = vset.pattern.permute.xlu0 20
        %3729 = vperm.xlu0 %3728, %v602
        %v3730 = vpop.permute.xlu0 %3729
        %3731 = vset.pattern.permute.xlu0 20
        %3732 = vperm.xlu0 %3731, %v603
        %v3733 = vpop.permute.xlu0 %3732
        %3734 = vset.pattern.permute.xlu0 20
        %3735 = vperm.xlu0 %3734, %v604
        %v3736 = vpop.permute.xlu0 %3735
        %3737 = vset.pattern.permute.xlu0 20
        %3738 = vperm.xlu0 %3737, %v605
        %v3739 = vpop.permute.xlu0 %3738
        %3740 = vset.pattern.permute.xlu0 20
        %3741 = vperm.xlu0 %3740, %v606
        %v3742 = vpop.permute.xlu0 %3741
        %3743 = vset.pattern.permute.xlu0 20
        %3744 = vperm.xlu0 %3743, %v607
        %v3745 = vpop.permute.xlu0 %3744
        %3746 = vset.pattern.permute.xlu0 20
        %3747 = vperm.xlu0 %3746, %v608
        %v3748 = vpop.permute.xlu0 %3747
        %3749 = vset.pattern.permute.xlu0 20
        %3750 = vperm.xlu0 %3749, %v609
        %v3751 = vpop.permute.xlu0 %3750
        %3752 = vset.pattern.permute.xlu0 20
        %3753 = vperm.xlu0 %3752, %v610
        %v3754 = vpop.permute.xlu0 %3753
        %3755 = vset.pattern.permute.xlu0 20
        %3756 = vperm.xlu0 %3755, %v611
        %v3757 = vpop.permute.xlu0 %3756
        %3758 = vset.pattern.permute.xlu0 20
        %3759 = vperm.xlu0 %3758, %v612
        %v3760 = vpop.permute.xlu0 %3759
        %3761 = vset.pattern.permute.xlu0 20
        %3762 = vperm.xlu0 %3761, %v613
        %v3763 = vpop.permute.xlu0 %3762
        %vm3764 = vcmp.eq.s32.totalorder %v3718, 1
        %vm3765 = vcmp.eq.s32.totalorder %v3721, 1
        %vm3766 = vcmp.eq.s32.totalorder %v3724, 1
        %vm3767 = vcmp.eq.s32.totalorder %v3727, 1
        %vm3768 = vcmp.eq.s32.totalorder %v3730, 1
        %vm3769 = vcmp.eq.s32.totalorder %v3733, 1
        %vm3770 = vcmp.eq.s32.totalorder %v3736, 1
        %vm3771 = vcmp.eq.s32.totalorder %v3739, 1
        %vm3772 = vcmp.eq.s32.totalorder %v3742, 1
        %vm3773 = vcmp.eq.s32.totalorder %v3745, 1
        %vm3774 = vcmp.eq.s32.totalorder %v3748, 1
        %vm3775 = vcmp.eq.s32.totalorder %v3751, 1
        %vm3776 = vcmp.eq.s32.totalorder %v3754, 1
        %vm3777 = vcmp.eq.s32.totalorder %v3757, 1
        %vm3778 = vcmp.eq.s32.totalorder %v3760, 1
        %vm3779 = vcmp.eq.s32.totalorder %v3763, 1
        %v3780 = vsel %vm3764, %v1634, -1e+30
        %v3781 = vsel %vm3765, %v1637, -1e+30
        %v3782 = vsel %vm3766, %v1642, -1e+30
        %v3783 = vsel %vm3767, %v1645, -1e+30
        %v3784 = vsel %vm3768, %v1650, -1e+30
        %v3785 = vsel %vm3769, %v1653, -1e+30
        %v3786 = vsel %vm3770, %v1658, -1e+30
        %v3787 = vsel %vm3771, %v1661, -1e+30
        %v3788 = vsel %vm3772, %v1666, -1e+30
        %v3789 = vsel %vm3773, %v1669, -1e+30
        %v3790 = vsel %vm3774, %v1674, -1e+30
        %v3791 = vsel %vm3775, %v1677, -1e+30
        %v3792 = vsel %vm3776, %v1682, -1e+30
        %v3793 = vsel %vm3777, %v1685, -1e+30
        %v3794 = vsel %vm3778, %v1690, -1e+30
        %v3795 = vsel %vm3779, %v1693, -1e+30
        %v3796 = vmax.f32 %v3780, %v3784
        %v3797 = vmax.f32 %v3781, %v3785
        %v3798 = vmax.f32 %v3782, %v3786
        %v3799 = vmax.f32 %v3783, %v3787
        %v3800 = vmax.f32 %v3796, %v3788
        %v3801 = vmax.f32 %v3797, %v3789
        %v3802 = vmax.f32 %v3798, %v3790
        %v3803 = vmax.f32 %v3799, %v3791
        %v3804 = vmax.f32 %v3800, %v3792
        %v3805 = vmax.f32 %v3801, %v3793
        %v3806 = vmax.f32 %v3802, %v3794
        %v3807 = vmax.f32 %v3803, %v3795
        %v3808 = vmax.f32 %v3804, %v3805
        %v3809 = vmax.f32 %v3806, %v3807
        %v3810 = vmax.f32 %v3808, %v3809
        %v3811 = vrot.slane %v3810, 4
        %v3812 = vmax.f32 %v3810, %v3811
        %v3813 = vrot.slane %v3812, 2
        %v3814 = vmax.f32 %v3812, %v3813
        %v3815 = vrot.slane %v3814, 1
        %v3816 = vmax.f32 %v3814, %v3815
        %3817 = vset.pattern.permute.xlu0 21
        %3818 = vperm.xlu0 %3817, %v598
        %v3819 = vpop.permute.xlu0 %3818
        %3820 = vset.pattern.permute.xlu0 21
        %3821 = vperm.xlu0 %3820, %v599
        %v3822 = vpop.permute.xlu0 %3821
        %3823 = vset.pattern.permute.xlu0 21
        %3824 = vperm.xlu0 %3823, %v600
        %v3825 = vpop.permute.xlu0 %3824
        %3826 = vset.pattern.permute.xlu0 21
        %3827 = vperm.xlu0 %3826, %v601
        %v3828 = vpop.permute.xlu0 %3827
        %3829 = vset.pattern.permute.xlu0 21
        %3830 = vperm.xlu0 %3829, %v602
        %v3831 = vpop.permute.xlu0 %3830
        %3832 = vset.pattern.permute.xlu0 21
        %3833 = vperm.xlu0 %3832, %v603
        %v3834 = vpop.permute.xlu0 %3833
        %3835 = vset.pattern.permute.xlu0 21
        %3836 = vperm.xlu0 %3835, %v604
        %v3837 = vpop.permute.xlu0 %3836
        %3838 = vset.pattern.permute.xlu0 21
        %3839 = vperm.xlu0 %3838, %v605
        %v3840 = vpop.permute.xlu0 %3839
        %3841 = vset.pattern.permute.xlu0 21
        %3842 = vperm.xlu0 %3841, %v606
        %v3843 = vpop.permute.xlu0 %3842
        %3844 = vset.pattern.permute.xlu0 21
        %3845 = vperm.xlu0 %3844, %v607
        %v3846 = vpop.permute.xlu0 %3845
        %3847 = vset.pattern.permute.xlu0 21
        %3848 = vperm.xlu0 %3847, %v608
        %v3849 = vpop.permute.xlu0 %3848
        %3850 = vset.pattern.permute.xlu0 21
        %3851 = vperm.xlu0 %3850, %v609
        %v3852 = vpop.permute.xlu0 %3851
        %3853 = vset.pattern.permute.xlu0 21
        %3854 = vperm.xlu0 %3853, %v610
        %v3855 = vpop.permute.xlu0 %3854
        %3856 = vset.pattern.permute.xlu0 21
        %3857 = vperm.xlu0 %3856, %v611
        %v3858 = vpop.permute.xlu0 %3857
        %3859 = vset.pattern.permute.xlu0 21
        %3860 = vperm.xlu0 %3859, %v612
        %v3861 = vpop.permute.xlu0 %3860
        %3862 = vset.pattern.permute.xlu0 21
        %3863 = vperm.xlu0 %3862, %v613
        %v3864 = vpop.permute.xlu0 %3863
        %vm3865 = vcmp.eq.s32.totalorder %v3819, 1
        %vm3866 = vcmp.eq.s32.totalorder %v3822, 1
        %vm3867 = vcmp.eq.s32.totalorder %v3825, 1
        %vm3868 = vcmp.eq.s32.totalorder %v3828, 1
        %vm3869 = vcmp.eq.s32.totalorder %v3831, 1
        %vm3870 = vcmp.eq.s32.totalorder %v3834, 1
        %vm3871 = vcmp.eq.s32.totalorder %v3837, 1
        %vm3872 = vcmp.eq.s32.totalorder %v3840, 1
        %vm3873 = vcmp.eq.s32.totalorder %v3843, 1
        %vm3874 = vcmp.eq.s32.totalorder %v3846, 1
        %vm3875 = vcmp.eq.s32.totalorder %v3849, 1
        %vm3876 = vcmp.eq.s32.totalorder %v3852, 1
        %vm3877 = vcmp.eq.s32.totalorder %v3855, 1
        %vm3878 = vcmp.eq.s32.totalorder %v3858, 1
        %vm3879 = vcmp.eq.s32.totalorder %v3861, 1
        %vm3880 = vcmp.eq.s32.totalorder %v3864, 1
        %v3881 = vsel %vm3865, %v1634, -1e+30
        %v3882 = vsel %vm3866, %v1637, -1e+30
        %v3883 = vsel %vm3867, %v1642, -1e+30
        %v3884 = vsel %vm3868, %v1645, -1e+30
        %v3885 = vsel %vm3869, %v1650, -1e+30
        %v3886 = vsel %vm3870, %v1653, -1e+30
        %v3887 = vsel %vm3871, %v1658, -1e+30
        %v3888 = vsel %vm3872, %v1661, -1e+30
        %v3889 = vsel %vm3873, %v1666, -1e+30
        %v3890 = vsel %vm3874, %v1669, -1e+30
        %v3891 = vsel %vm3875, %v1674, -1e+30
        %v3892 = vsel %vm3876, %v1677, -1e+30
        %v3893 = vsel %vm3877, %v1682, -1e+30
        %v3894 = vsel %vm3878, %v1685, -1e+30
        %v3895 = vsel %vm3879, %v1690, -1e+30
        %v3896 = vsel %vm3880, %v1693, -1e+30
        %v3897 = vmax.f32 %v3881, %v3885
        %v3898 = vmax.f32 %v3882, %v3886
        %v3899 = vmax.f32 %v3883, %v3887
        %v3900 = vmax.f32 %v3884, %v3888
        %v3901 = vmax.f32 %v3897, %v3889
        %v3902 = vmax.f32 %v3898, %v3890
        %v3903 = vmax.f32 %v3899, %v3891
        %v3904 = vmax.f32 %v3900, %v3892
        %v3905 = vmax.f32 %v3901, %v3893
        %v3906 = vmax.f32 %v3902, %v3894
        %v3907 = vmax.f32 %v3903, %v3895
        %v3908 = vmax.f32 %v3904, %v3896
        %v3909 = vmax.f32 %v3905, %v3906
        %v3910 = vmax.f32 %v3907, %v3908
        %v3911 = vmax.f32 %v3909, %v3910
        %v3912 = vrot.slane %v3911, 4
        %v3913 = vmax.f32 %v3911, %v3912
        %v3914 = vrot.slane %v3913, 2
        %v3915 = vmax.f32 %v3913, %v3914
        %v3916 = vrot.slane %v3915, 1
        %v3917 = vmax.f32 %v3915, %v3916
        %3918 = vset.pattern.permute.xlu0 22
        %3919 = vperm.xlu0 %3918, %v598
        %v3920 = vpop.permute.xlu0 %3919
        %3921 = vset.pattern.permute.xlu0 22
        %3922 = vperm.xlu0 %3921, %v599
        %v3923 = vpop.permute.xlu0 %3922
        %3924 = vset.pattern.permute.xlu0 22
        %3925 = vperm.xlu0 %3924, %v600
        %v3926 = vpop.permute.xlu0 %3925
        %3927 = vset.pattern.permute.xlu0 22
        %3928 = vperm.xlu0 %3927, %v601
        %v3929 = vpop.permute.xlu0 %3928
        %3930 = vset.pattern.permute.xlu0 22
        %3931 = vperm.xlu0 %3930, %v602
        %v3932 = vpop.permute.xlu0 %3931
        %3933 = vset.pattern.permute.xlu0 22
        %3934 = vperm.xlu0 %3933, %v603
        %v3935 = vpop.permute.xlu0 %3934
        %3936 = vset.pattern.permute.xlu0 22
        %3937 = vperm.xlu0 %3936, %v604
        %v3938 = vpop.permute.xlu0 %3937
        %3939 = vset.pattern.permute.xlu0 22
        %3940 = vperm.xlu0 %3939, %v605
        %v3941 = vpop.permute.xlu0 %3940
        %3942 = vset.pattern.permute.xlu0 22
        %3943 = vperm.xlu0 %3942, %v606
        %v3944 = vpop.permute.xlu0 %3943
        %3945 = vset.pattern.permute.xlu0 22
        %3946 = vperm.xlu0 %3945, %v607
        %v3947 = vpop.permute.xlu0 %3946
        %3948 = vset.pattern.permute.xlu0 22
        %3949 = vperm.xlu0 %3948, %v608
        %v3950 = vpop.permute.xlu0 %3949
        %3951 = vset.pattern.permute.xlu0 22
        %3952 = vperm.xlu0 %3951, %v609
        %v3953 = vpop.permute.xlu0 %3952
        %3954 = vset.pattern.permute.xlu0 22
        %3955 = vperm.xlu0 %3954, %v610
        %v3956 = vpop.permute.xlu0 %3955
        %3957 = vset.pattern.permute.xlu0 22
        %3958 = vperm.xlu0 %3957, %v611
        %v3959 = vpop.permute.xlu0 %3958
        %3960 = vset.pattern.permute.xlu0 22
        %3961 = vperm.xlu0 %3960, %v612
        %v3962 = vpop.permute.xlu0 %3961
        %3963 = vset.pattern.permute.xlu0 22
        %3964 = vperm.xlu0 %3963, %v613
        %v3965 = vpop.permute.xlu0 %3964
        %vm3966 = vcmp.eq.s32.totalorder %v3920, 1
        %vm3967 = vcmp.eq.s32.totalorder %v3923, 1
        %vm3968 = vcmp.eq.s32.totalorder %v3926, 1
        %vm3969 = vcmp.eq.s32.totalorder %v3929, 1
        %vm3970 = vcmp.eq.s32.totalorder %v3932, 1
        %vm3971 = vcmp.eq.s32.totalorder %v3935, 1
        %vm3972 = vcmp.eq.s32.totalorder %v3938, 1
        %vm3973 = vcmp.eq.s32.totalorder %v3941, 1
        %vm3974 = vcmp.eq.s32.totalorder %v3944, 1
        %vm3975 = vcmp.eq.s32.totalorder %v3947, 1
        %vm3976 = vcmp.eq.s32.totalorder %v3950, 1
        %vm3977 = vcmp.eq.s32.totalorder %v3953, 1
        %vm3978 = vcmp.eq.s32.totalorder %v3956, 1
        %vm3979 = vcmp.eq.s32.totalorder %v3959, 1
        %vm3980 = vcmp.eq.s32.totalorder %v3962, 1
        %vm3981 = vcmp.eq.s32.totalorder %v3965, 1
        %v3982 = vsel %vm3966, %v1634, -1e+30
        %v3983 = vsel %vm3967, %v1637, -1e+30
        %v3984 = vsel %vm3968, %v1642, -1e+30
        %v3985 = vsel %vm3969, %v1645, -1e+30
        %v3986 = vsel %vm3970, %v1650, -1e+30
        %v3987 = vsel %vm3971, %v1653, -1e+30
        %v3988 = vsel %vm3972, %v1658, -1e+30
        %v3989 = vsel %vm3973, %v1661, -1e+30
        %v3990 = vsel %vm3974, %v1666, -1e+30
        %v3991 = vsel %vm3975, %v1669, -1e+30
        %v3992 = vsel %vm3976, %v1674, -1e+30
        %v3993 = vsel %vm3977, %v1677, -1e+30
        %v3994 = vsel %vm3978, %v1682, -1e+30
        %v3995 = vsel %vm3979, %v1685, -1e+30
        %v3996 = vsel %vm3980, %v1690, -1e+30
        %v3997 = vsel %vm3981, %v1693, -1e+30
        %v3998 = vmax.f32 %v3982, %v3986
        %v3999 = vmax.f32 %v3983, %v3987
        %v4000 = vmax.f32 %v3984, %v3988
        %v4001 = vmax.f32 %v3985, %v3989
        %v4002 = vmax.f32 %v3998, %v3990
        %v4003 = vmax.f32 %v3999, %v3991
        %v4004 = vmax.f32 %v4000, %v3992
        %v4005 = vmax.f32 %v4001, %v3993
        %v4006 = vmax.f32 %v4002, %v3994
        %v4007 = vmax.f32 %v4003, %v3995
        %v4008 = vmax.f32 %v4004, %v3996
        %v4009 = vmax.f32 %v4005, %v3997
        %v4010 = vmax.f32 %v4006, %v4007
        %v4011 = vmax.f32 %v4008, %v4009
        %v4012 = vmax.f32 %v4010, %v4011
        %v4013 = vrot.slane %v4012, 4
        %v4014 = vmax.f32 %v4012, %v4013
        %v4015 = vrot.slane %v4014, 2
        %v4016 = vmax.f32 %v4014, %v4015
        %v4017 = vrot.slane %v4016, 1
        %v4018 = vmax.f32 %v4016, %v4017
        %4019 = vset.pattern.permute.xlu0 23
        %4020 = vperm.xlu0 %4019, %v598
        %v4021 = vpop.permute.xlu0 %4020
        %4022 = vset.pattern.permute.xlu0 23
        %4023 = vperm.xlu0 %4022, %v599
        %v4024 = vpop.permute.xlu0 %4023
        %4025 = vset.pattern.permute.xlu0 23
        %4026 = vperm.xlu0 %4025, %v600
        %v4027 = vpop.permute.xlu0 %4026
        %4028 = vset.pattern.permute.xlu0 23
        %4029 = vperm.xlu0 %4028, %v601
        %v4030 = vpop.permute.xlu0 %4029
        %4031 = vset.pattern.permute.xlu0 23
        %4032 = vperm.xlu0 %4031, %v602
        %v4033 = vpop.permute.xlu0 %4032
        %4034 = vset.pattern.permute.xlu0 23
        %4035 = vperm.xlu0 %4034, %v603
        %v4036 = vpop.permute.xlu0 %4035
        %4037 = vset.pattern.permute.xlu0 23
        %4038 = vperm.xlu0 %4037, %v604
        %v4039 = vpop.permute.xlu0 %4038
        %4040 = vset.pattern.permute.xlu0 23
        %4041 = vperm.xlu0 %4040, %v605
        %v4042 = vpop.permute.xlu0 %4041
        %4043 = vset.pattern.permute.xlu0 23
        %4044 = vperm.xlu0 %4043, %v606
        %v4045 = vpop.permute.xlu0 %4044
        %4046 = vset.pattern.permute.xlu0 23
        %4047 = vperm.xlu0 %4046, %v607
        %v4048 = vpop.permute.xlu0 %4047
        %4049 = vset.pattern.permute.xlu0 23
        %4050 = vperm.xlu0 %4049, %v608
        %v4051 = vpop.permute.xlu0 %4050
        %4052 = vset.pattern.permute.xlu0 23
        %4053 = vperm.xlu0 %4052, %v609
        %v4054 = vpop.permute.xlu0 %4053
        %4055 = vset.pattern.permute.xlu0 23
        %4056 = vperm.xlu0 %4055, %v610
        %v4057 = vpop.permute.xlu0 %4056
        %4058 = vset.pattern.permute.xlu0 23
        %4059 = vperm.xlu0 %4058, %v611
        %v4060 = vpop.permute.xlu0 %4059
        %4061 = vset.pattern.permute.xlu0 23
        %4062 = vperm.xlu0 %4061, %v612
        %v4063 = vpop.permute.xlu0 %4062
        %4064 = vset.pattern.permute.xlu0 23
        %4065 = vperm.xlu0 %4064, %v613
        %v4066 = vpop.permute.xlu0 %4065
        %vm4067 = vcmp.eq.s32.totalorder %v4021, 1
        %vm4068 = vcmp.eq.s32.totalorder %v4024, 1
        %vm4069 = vcmp.eq.s32.totalorder %v4027, 1
        %vm4070 = vcmp.eq.s32.totalorder %v4030, 1
        %vm4071 = vcmp.eq.s32.totalorder %v4033, 1
        %vm4072 = vcmp.eq.s32.totalorder %v4036, 1
        %vm4073 = vcmp.eq.s32.totalorder %v4039, 1
        %vm4074 = vcmp.eq.s32.totalorder %v4042, 1
        %vm4075 = vcmp.eq.s32.totalorder %v4045, 1
        %vm4076 = vcmp.eq.s32.totalorder %v4048, 1
        %vm4077 = vcmp.eq.s32.totalorder %v4051, 1
        %vm4078 = vcmp.eq.s32.totalorder %v4054, 1
        %vm4079 = vcmp.eq.s32.totalorder %v4057, 1
        %vm4080 = vcmp.eq.s32.totalorder %v4060, 1
        %vm4081 = vcmp.eq.s32.totalorder %v4063, 1
        %vm4082 = vcmp.eq.s32.totalorder %v4066, 1
        %v4083 = vsel %vm4067, %v1634, -1e+30
        %v4084 = vsel %vm4068, %v1637, -1e+30
        %v4085 = vsel %vm4069, %v1642, -1e+30
        %v4086 = vsel %vm4070, %v1645, -1e+30
        %v4087 = vsel %vm4071, %v1650, -1e+30
        %v4088 = vsel %vm4072, %v1653, -1e+30
        %v4089 = vsel %vm4073, %v1658, -1e+30
        %v4090 = vsel %vm4074, %v1661, -1e+30
        %v4091 = vsel %vm4075, %v1666, -1e+30
        %v4092 = vsel %vm4076, %v1669, -1e+30
        %v4093 = vsel %vm4077, %v1674, -1e+30
        %v4094 = vsel %vm4078, %v1677, -1e+30
        %v4095 = vsel %vm4079, %v1682, -1e+30
        %v4096 = vsel %vm4080, %v1685, -1e+30
        %v4097 = vsel %vm4081, %v1690, -1e+30
        %v4098 = vsel %vm4082, %v1693, -1e+30
        %v4099 = vmax.f32 %v4083, %v4087
        %v4100 = vmax.f32 %v4084, %v4088
        %v4101 = vmax.f32 %v4085, %v4089
        %v4102 = vmax.f32 %v4086, %v4090
        %v4103 = vmax.f32 %v4099, %v4091
        %v4104 = vmax.f32 %v4100, %v4092
        %v4105 = vmax.f32 %v4101, %v4093
        %v4106 = vmax.f32 %v4102, %v4094
        %v4107 = vmax.f32 %v4103, %v4095
        %v4108 = vmax.f32 %v4104, %v4096
        %v4109 = vmax.f32 %v4105, %v4097
        %v4110 = vmax.f32 %v4106, %v4098
        %v4111 = vmax.f32 %v4107, %v4108
        %v4112 = vmax.f32 %v4109, %v4110
        %v4113 = vmax.f32 %v4111, %v4112
        %v4114 = vrot.slane %v4113, 4
        %v4115 = vmax.f32 %v4113, %v4114
        %v4116 = vrot.slane %v4115, 2
        %v4117 = vmax.f32 %v4115, %v4116
        %v4118 = vrot.slane %v4117, 1
        %v4119 = vmax.f32 %v4117, %v4118
        %4120 = vset.pattern.permute.xlu0 24
        %4121 = vperm.xlu0 %4120, %v598
        %v4122 = vpop.permute.xlu0 %4121
        %4123 = vset.pattern.permute.xlu0 24
        %4124 = vperm.xlu0 %4123, %v599
        %v4125 = vpop.permute.xlu0 %4124
        %4126 = vset.pattern.permute.xlu0 24
        %4127 = vperm.xlu0 %4126, %v600
        %v4128 = vpop.permute.xlu0 %4127
        %4129 = vset.pattern.permute.xlu0 24
        %4130 = vperm.xlu0 %4129, %v601
        %v4131 = vpop.permute.xlu0 %4130
        %4132 = vset.pattern.permute.xlu0 24
        %4133 = vperm.xlu0 %4132, %v602
        %v4134 = vpop.permute.xlu0 %4133
        %4135 = vset.pattern.permute.xlu0 24
        %4136 = vperm.xlu0 %4135, %v603
        %v4137 = vpop.permute.xlu0 %4136
        %4138 = vset.pattern.permute.xlu0 24
        %4139 = vperm.xlu0 %4138, %v604
        %v4140 = vpop.permute.xlu0 %4139
        %4141 = vset.pattern.permute.xlu0 24
        %4142 = vperm.xlu0 %4141, %v605
        %v4143 = vpop.permute.xlu0 %4142
        %4144 = vset.pattern.permute.xlu0 24
        %4145 = vperm.xlu0 %4144, %v606
        %v4146 = vpop.permute.xlu0 %4145
        %4147 = vset.pattern.permute.xlu0 24
        %4148 = vperm.xlu0 %4147, %v607
        %v4149 = vpop.permute.xlu0 %4148
        %4150 = vset.pattern.permute.xlu0 24
        %4151 = vperm.xlu0 %4150, %v608
        %v4152 = vpop.permute.xlu0 %4151
        %4153 = vset.pattern.permute.xlu0 24
        %4154 = vperm.xlu0 %4153, %v609
        %v4155 = vpop.permute.xlu0 %4154
        %4156 = vset.pattern.permute.xlu0 24
        %4157 = vperm.xlu0 %4156, %v610
        %v4158 = vpop.permute.xlu0 %4157
        %4159 = vset.pattern.permute.xlu0 24
        %4160 = vperm.xlu0 %4159, %v611
        %v4161 = vpop.permute.xlu0 %4160
        %4162 = vset.pattern.permute.xlu0 24
        %4163 = vperm.xlu0 %4162, %v612
        %v4164 = vpop.permute.xlu0 %4163
        %4165 = vset.pattern.permute.xlu0 24
        %4166 = vperm.xlu0 %4165, %v613
        %v4167 = vpop.permute.xlu0 %4166
        %vm4168 = vcmp.eq.s32.totalorder %v4122, 1
        %vm4169 = vcmp.eq.s32.totalorder %v4125, 1
        %vm4170 = vcmp.eq.s32.totalorder %v4128, 1
        %vm4171 = vcmp.eq.s32.totalorder %v4131, 1
        %vm4172 = vcmp.eq.s32.totalorder %v4134, 1
        %vm4173 = vcmp.eq.s32.totalorder %v4137, 1
        %vm4174 = vcmp.eq.s32.totalorder %v4140, 1
        %vm4175 = vcmp.eq.s32.totalorder %v4143, 1
        %vm4176 = vcmp.eq.s32.totalorder %v4146, 1
        %vm4177 = vcmp.eq.s32.totalorder %v4149, 1
        %vm4178 = vcmp.eq.s32.totalorder %v4152, 1
        %vm4179 = vcmp.eq.s32.totalorder %v4155, 1
        %vm4180 = vcmp.eq.s32.totalorder %v4158, 1
        %vm4181 = vcmp.eq.s32.totalorder %v4161, 1
        %vm4182 = vcmp.eq.s32.totalorder %v4164, 1
        %vm4183 = vcmp.eq.s32.totalorder %v4167, 1
        %v4184 = vsel %vm4168, %v1634, -1e+30
        %v4185 = vsel %vm4169, %v1637, -1e+30
        %v4186 = vsel %vm4170, %v1642, -1e+30
        %v4187 = vsel %vm4171, %v1645, -1e+30
        %v4188 = vsel %vm4172, %v1650, -1e+30
        %v4189 = vsel %vm4173, %v1653, -1e+30
        %v4190 = vsel %vm4174, %v1658, -1e+30
        %v4191 = vsel %vm4175, %v1661, -1e+30
        %v4192 = vsel %vm4176, %v1666, -1e+30
        %v4193 = vsel %vm4177, %v1669, -1e+30
        %v4194 = vsel %vm4178, %v1674, -1e+30
        %v4195 = vsel %vm4179, %v1677, -1e+30
        %v4196 = vsel %vm4180, %v1682, -1e+30
        %v4197 = vsel %vm4181, %v1685, -1e+30
        %v4198 = vsel %vm4182, %v1690, -1e+30
        %v4199 = vsel %vm4183, %v1693, -1e+30
        %v4200 = vmax.f32 %v4184, %v4188
        %v4201 = vmax.f32 %v4185, %v4189
        %v4202 = vmax.f32 %v4186, %v4190
        %v4203 = vmax.f32 %v4187, %v4191
        %v4204 = vmax.f32 %v4200, %v4192
        %v4205 = vmax.f32 %v4201, %v4193
        %v4206 = vmax.f32 %v4202, %v4194
        %v4207 = vmax.f32 %v4203, %v4195
        %v4208 = vmax.f32 %v4204, %v4196
        %v4209 = vmax.f32 %v4205, %v4197
        %v4210 = vmax.f32 %v4206, %v4198
        %v4211 = vmax.f32 %v4207, %v4199
        %v4212 = vmax.f32 %v4208, %v4209
        %v4213 = vmax.f32 %v4210, %v4211
        %v4214 = vmax.f32 %v4212, %v4213
        %v4215 = vrot.slane %v4214, 4
        %v4216 = vmax.f32 %v4214, %v4215
        %v4217 = vrot.slane %v4216, 2
        %v4218 = vmax.f32 %v4216, %v4217
        %v4219 = vrot.slane %v4218, 1
        %v4220 = vmax.f32 %v4218, %v4219
        %4221 = vset.pattern.permute.xlu0 25
        %4222 = vperm.xlu0 %4221, %v598
        %v4223 = vpop.permute.xlu0 %4222
        %4224 = vset.pattern.permute.xlu0 25
        %4225 = vperm.xlu0 %4224, %v599
        %v4226 = vpop.permute.xlu0 %4225
        %4227 = vset.pattern.permute.xlu0 25
        %4228 = vperm.xlu0 %4227, %v600
        %v4229 = vpop.permute.xlu0 %4228
        %4230 = vset.pattern.permute.xlu0 25
        %4231 = vperm.xlu0 %4230, %v601
        %v4232 = vpop.permute.xlu0 %4231
        %4233 = vset.pattern.permute.xlu0 25
        %4234 = vperm.xlu0 %4233, %v602
        %v4235 = vpop.permute.xlu0 %4234
        %4236 = vset.pattern.permute.xlu0 25
        %4237 = vperm.xlu0 %4236, %v603
        %v4238 = vpop.permute.xlu0 %4237
        %4239 = vset.pattern.permute.xlu0 25
        %4240 = vperm.xlu0 %4239, %v604
        %v4241 = vpop.permute.xlu0 %4240
        %4242 = vset.pattern.permute.xlu0 25
        %4243 = vperm.xlu0 %4242, %v605
        %v4244 = vpop.permute.xlu0 %4243
        %4245 = vset.pattern.permute.xlu0 25
        %4246 = vperm.xlu0 %4245, %v606
        %v4247 = vpop.permute.xlu0 %4246
        %4248 = vset.pattern.permute.xlu0 25
        %4249 = vperm.xlu0 %4248, %v607
        %v4250 = vpop.permute.xlu0 %4249
        %4251 = vset.pattern.permute.xlu0 25
        %4252 = vperm.xlu0 %4251, %v608
        %v4253 = vpop.permute.xlu0 %4252
        %4254 = vset.pattern.permute.xlu0 25
        %4255 = vperm.xlu0 %4254, %v609
        %v4256 = vpop.permute.xlu0 %4255
        %4257 = vset.pattern.permute.xlu0 25
        %4258 = vperm.xlu0 %4257, %v610
        %v4259 = vpop.permute.xlu0 %4258
        %4260 = vset.pattern.permute.xlu0 25
        %4261 = vperm.xlu0 %4260, %v611
        %v4262 = vpop.permute.xlu0 %4261
        %4263 = vset.pattern.permute.xlu0 25
        %4264 = vperm.xlu0 %4263, %v612
        %v4265 = vpop.permute.xlu0 %4264
        %4266 = vset.pattern.permute.xlu0 25
        %4267 = vperm.xlu0 %4266, %v613
        %v4268 = vpop.permute.xlu0 %4267
        %vm4269 = vcmp.eq.s32.totalorder %v4223, 1
        %vm4270 = vcmp.eq.s32.totalorder %v4226, 1
        %vm4271 = vcmp.eq.s32.totalorder %v4229, 1
        %vm4272 = vcmp.eq.s32.totalorder %v4232, 1
        %vm4273 = vcmp.eq.s32.totalorder %v4235, 1
        %vm4274 = vcmp.eq.s32.totalorder %v4238, 1
        %vm4275 = vcmp.eq.s32.totalorder %v4241, 1
        %vm4276 = vcmp.eq.s32.totalorder %v4244, 1
        %vm4277 = vcmp.eq.s32.totalorder %v4247, 1
        %vm4278 = vcmp.eq.s32.totalorder %v4250, 1
        %vm4279 = vcmp.eq.s32.totalorder %v4253, 1
        %vm4280 = vcmp.eq.s32.totalorder %v4256, 1
        %vm4281 = vcmp.eq.s32.totalorder %v4259, 1
        %vm4282 = vcmp.eq.s32.totalorder %v4262, 1
        %vm4283 = vcmp.eq.s32.totalorder %v4265, 1
        %vm4284 = vcmp.eq.s32.totalorder %v4268, 1
        %v4285 = vsel %vm4269, %v1634, -1e+30
        %v4286 = vsel %vm4270, %v1637, -1e+30
        %v4287 = vsel %vm4271, %v1642, -1e+30
        %v4288 = vsel %vm4272, %v1645, -1e+30
        %v4289 = vsel %vm4273, %v1650, -1e+30
        %v4290 = vsel %vm4274, %v1653, -1e+30
        %v4291 = vsel %vm4275, %v1658, -1e+30
        %v4292 = vsel %vm4276, %v1661, -1e+30
        %v4293 = vsel %vm4277, %v1666, -1e+30
        %v4294 = vsel %vm4278, %v1669, -1e+30
        %v4295 = vsel %vm4279, %v1674, -1e+30
        %v4296 = vsel %vm4280, %v1677, -1e+30
        %v4297 = vsel %vm4281, %v1682, -1e+30
        %v4298 = vsel %vm4282, %v1685, -1e+30
        %v4299 = vsel %vm4283, %v1690, -1e+30
        %v4300 = vsel %vm4284, %v1693, -1e+30
        %v4301 = vmax.f32 %v4285, %v4289
        %v4302 = vmax.f32 %v4286, %v4290
        %v4303 = vmax.f32 %v4287, %v4291
        %v4304 = vmax.f32 %v4288, %v4292
        %v4305 = vmax.f32 %v4301, %v4293
        %v4306 = vmax.f32 %v4302, %v4294
        %v4307 = vmax.f32 %v4303, %v4295
        %v4308 = vmax.f32 %v4304, %v4296
        %v4309 = vmax.f32 %v4305, %v4297
        %v4310 = vmax.f32 %v4306, %v4298
        %v4311 = vmax.f32 %v4307, %v4299
        %v4312 = vmax.f32 %v4308, %v4300
        %v4313 = vmax.f32 %v4309, %v4310
        %v4314 = vmax.f32 %v4311, %v4312
        %v4315 = vmax.f32 %v4313, %v4314
        %v4316 = vrot.slane %v4315, 4
        %v4317 = vmax.f32 %v4315, %v4316
        %v4318 = vrot.slane %v4317, 2
        %v4319 = vmax.f32 %v4317, %v4318
        %v4320 = vrot.slane %v4319, 1
        %v4321 = vmax.f32 %v4319, %v4320
        %4322 = vset.pattern.permute.xlu0 26
        %4323 = vperm.xlu0 %4322, %v598
        %v4324 = vpop.permute.xlu0 %4323
        %4325 = vset.pattern.permute.xlu0 26
        %4326 = vperm.xlu0 %4325, %v599
        %v4327 = vpop.permute.xlu0 %4326
        %4328 = vset.pattern.permute.xlu0 26
        %4329 = vperm.xlu0 %4328, %v600
        %v4330 = vpop.permute.xlu0 %4329
        %4331 = vset.pattern.permute.xlu0 26
        %4332 = vperm.xlu0 %4331, %v601
        %v4333 = vpop.permute.xlu0 %4332
        %4334 = vset.pattern.permute.xlu0 26
        %4335 = vperm.xlu0 %4334, %v602
        %v4336 = vpop.permute.xlu0 %4335
        %4337 = vset.pattern.permute.xlu0 26
        %4338 = vperm.xlu0 %4337, %v603
        %v4339 = vpop.permute.xlu0 %4338
        %4340 = vset.pattern.permute.xlu0 26
        %4341 = vperm.xlu0 %4340, %v604
        %v4342 = vpop.permute.xlu0 %4341
        %4343 = vset.pattern.permute.xlu0 26
        %4344 = vperm.xlu0 %4343, %v605
        %v4345 = vpop.permute.xlu0 %4344
        %4346 = vset.pattern.permute.xlu0 26
        %4347 = vperm.xlu0 %4346, %v606
        %v4348 = vpop.permute.xlu0 %4347
        %4349 = vset.pattern.permute.xlu0 26
        %4350 = vperm.xlu0 %4349, %v607
        %v4351 = vpop.permute.xlu0 %4350
        %4352 = vset.pattern.permute.xlu0 26
        %4353 = vperm.xlu0 %4352, %v608
        %v4354 = vpop.permute.xlu0 %4353
        %4355 = vset.pattern.permute.xlu0 26
        %4356 = vperm.xlu0 %4355, %v609
        %v4357 = vpop.permute.xlu0 %4356
        %4358 = vset.pattern.permute.xlu0 26
        %4359 = vperm.xlu0 %4358, %v610
        %v4360 = vpop.permute.xlu0 %4359
        %4361 = vset.pattern.permute.xlu0 26
        %4362 = vperm.xlu0 %4361, %v611
        %v4363 = vpop.permute.xlu0 %4362
        %4364 = vset.pattern.permute.xlu0 26
        %4365 = vperm.xlu0 %4364, %v612
        %v4366 = vpop.permute.xlu0 %4365
        %4367 = vset.pattern.permute.xlu0 26
        %4368 = vperm.xlu0 %4367, %v613
        %v4369 = vpop.permute.xlu0 %4368
        %vm4370 = vcmp.eq.s32.totalorder %v4324, 1
        %vm4371 = vcmp.eq.s32.totalorder %v4327, 1
        %vm4372 = vcmp.eq.s32.totalorder %v4330, 1
        %vm4373 = vcmp.eq.s32.totalorder %v4333, 1
        %vm4374 = vcmp.eq.s32.totalorder %v4336, 1
        %vm4375 = vcmp.eq.s32.totalorder %v4339, 1
        %vm4376 = vcmp.eq.s32.totalorder %v4342, 1
        %vm4377 = vcmp.eq.s32.totalorder %v4345, 1
        %vm4378 = vcmp.eq.s32.totalorder %v4348, 1
        %vm4379 = vcmp.eq.s32.totalorder %v4351, 1
        %vm4380 = vcmp.eq.s32.totalorder %v4354, 1
        %vm4381 = vcmp.eq.s32.totalorder %v4357, 1
        %vm4382 = vcmp.eq.s32.totalorder %v4360, 1
        %vm4383 = vcmp.eq.s32.totalorder %v4363, 1
        %vm4384 = vcmp.eq.s32.totalorder %v4366, 1
        %vm4385 = vcmp.eq.s32.totalorder %v4369, 1
        %v4386 = vsel %vm4370, %v1634, -1e+30
        %v4387 = vsel %vm4371, %v1637, -1e+30
        %v4388 = vsel %vm4372, %v1642, -1e+30
        %v4389 = vsel %vm4373, %v1645, -1e+30
        %v4390 = vsel %vm4374, %v1650, -1e+30
        %v4391 = vsel %vm4375, %v1653, -1e+30
        %v4392 = vsel %vm4376, %v1658, -1e+30
        %v4393 = vsel %vm4377, %v1661, -1e+30
        %v4394 = vsel %vm4378, %v1666, -1e+30
        %v4395 = vsel %vm4379, %v1669, -1e+30
        %v4396 = vsel %vm4380, %v1674, -1e+30
        %v4397 = vsel %vm4381, %v1677, -1e+30
        %v4398 = vsel %vm4382, %v1682, -1e+30
        %v4399 = vsel %vm4383, %v1685, -1e+30
        %v4400 = vsel %vm4384, %v1690, -1e+30
        %v4401 = vsel %vm4385, %v1693, -1e+30
        %v4402 = vmax.f32 %v4386, %v4390
        %v4403 = vmax.f32 %v4387, %v4391
        %v4404 = vmax.f32 %v4388, %v4392
        %v4405 = vmax.f32 %v4389, %v4393
        %v4406 = vmax.f32 %v4402, %v4394
        %v4407 = vmax.f32 %v4403, %v4395
        %v4408 = vmax.f32 %v4404, %v4396
        %v4409 = vmax.f32 %v4405, %v4397
        %v4410 = vmax.f32 %v4406, %v4398
        %v4411 = vmax.f32 %v4407, %v4399
        %v4412 = vmax.f32 %v4408, %v4400
        %v4413 = vmax.f32 %v4409, %v4401
        %v4414 = vmax.f32 %v4410, %v4411
        %v4415 = vmax.f32 %v4412, %v4413
        %v4416 = vmax.f32 %v4414, %v4415
        %v4417 = vrot.slane %v4416, 4
        %v4418 = vmax.f32 %v4416, %v4417
        %v4419 = vrot.slane %v4418, 2
        %v4420 = vmax.f32 %v4418, %v4419
        %v4421 = vrot.slane %v4420, 1
        %v4422 = vmax.f32 %v4420, %v4421
        %4423 = vset.pattern.permute.xlu0 27
        %4424 = vperm.xlu0 %4423, %v598
        %v4425 = vpop.permute.xlu0 %4424
        %4426 = vset.pattern.permute.xlu0 27
        %4427 = vperm.xlu0 %4426, %v599
        %v4428 = vpop.permute.xlu0 %4427
        %4429 = vset.pattern.permute.xlu0 27
        %4430 = vperm.xlu0 %4429, %v600
        %v4431 = vpop.permute.xlu0 %4430
        %4432 = vset.pattern.permute.xlu0 27
        %4433 = vperm.xlu0 %4432, %v601
        %v4434 = vpop.permute.xlu0 %4433
        %4435 = vset.pattern.permute.xlu0 27
        %4436 = vperm.xlu0 %4435, %v602
        %v4437 = vpop.permute.xlu0 %4436
        %4438 = vset.pattern.permute.xlu0 27
        %4439 = vperm.xlu0 %4438, %v603
        %v4440 = vpop.permute.xlu0 %4439
        %4441 = vset.pattern.permute.xlu0 27
        %4442 = vperm.xlu0 %4441, %v604
        %v4443 = vpop.permute.xlu0 %4442
        %4444 = vset.pattern.permute.xlu0 27
        %4445 = vperm.xlu0 %4444, %v605
        %v4446 = vpop.permute.xlu0 %4445
        %4447 = vset.pattern.permute.xlu0 27
        %4448 = vperm.xlu0 %4447, %v606
        %v4449 = vpop.permute.xlu0 %4448
        %4450 = vset.pattern.permute.xlu0 27
        %4451 = vperm.xlu0 %4450, %v607
        %v4452 = vpop.permute.xlu0 %4451
        %4453 = vset.pattern.permute.xlu0 27
        %4454 = vperm.xlu0 %4453, %v608
        %v4455 = vpop.permute.xlu0 %4454
        %4456 = vset.pattern.permute.xlu0 27
        %4457 = vperm.xlu0 %4456, %v609
        %v4458 = vpop.permute.xlu0 %4457
        %4459 = vset.pattern.permute.xlu0 27
        %4460 = vperm.xlu0 %4459, %v610
        %v4461 = vpop.permute.xlu0 %4460
        %4462 = vset.pattern.permute.xlu0 27
        %4463 = vperm.xlu0 %4462, %v611
        %v4464 = vpop.permute.xlu0 %4463
        %4465 = vset.pattern.permute.xlu0 27
        %4466 = vperm.xlu0 %4465, %v612
        %v4467 = vpop.permute.xlu0 %4466
        %4468 = vset.pattern.permute.xlu0 27
        %4469 = vperm.xlu0 %4468, %v613
        %v4470 = vpop.permute.xlu0 %4469
        %vm4471 = vcmp.eq.s32.totalorder %v4425, 1
        %vm4472 = vcmp.eq.s32.totalorder %v4428, 1
        %vm4473 = vcmp.eq.s32.totalorder %v4431, 1
        %vm4474 = vcmp.eq.s32.totalorder %v4434, 1
        %vm4475 = vcmp.eq.s32.totalorder %v4437, 1
        %vm4476 = vcmp.eq.s32.totalorder %v4440, 1
        %vm4477 = vcmp.eq.s32.totalorder %v4443, 1
        %vm4478 = vcmp.eq.s32.totalorder %v4446, 1
        %vm4479 = vcmp.eq.s32.totalorder %v4449, 1
        %vm4480 = vcmp.eq.s32.totalorder %v4452, 1
        %vm4481 = vcmp.eq.s32.totalorder %v4455, 1
        %vm4482 = vcmp.eq.s32.totalorder %v4458, 1
        %vm4483 = vcmp.eq.s32.totalorder %v4461, 1
        %vm4484 = vcmp.eq.s32.totalorder %v4464, 1
        %vm4485 = vcmp.eq.s32.totalorder %v4467, 1
        %vm4486 = vcmp.eq.s32.totalorder %v4470, 1
        %v4487 = vsel %vm4471, %v1634, -1e+30
        %v4488 = vsel %vm4472, %v1637, -1e+30
        %v4489 = vsel %vm4473, %v1642, -1e+30
        %v4490 = vsel %vm4474, %v1645, -1e+30
        %v4491 = vsel %vm4475, %v1650, -1e+30
        %v4492 = vsel %vm4476, %v1653, -1e+30
        %v4493 = vsel %vm4477, %v1658, -1e+30
        %v4494 = vsel %vm4478, %v1661, -1e+30
        %v4495 = vsel %vm4479, %v1666, -1e+30
        %v4496 = vsel %vm4480, %v1669, -1e+30
        %v4497 = vsel %vm4481, %v1674, -1e+30
        %v4498 = vsel %vm4482, %v1677, -1e+30
        %v4499 = vsel %vm4483, %v1682, -1e+30
        %v4500 = vsel %vm4484, %v1685, -1e+30
        %v4501 = vsel %vm4485, %v1690, -1e+30
        %v4502 = vsel %vm4486, %v1693, -1e+30
        %v4503 = vmax.f32 %v4487, %v4491
        %v4504 = vmax.f32 %v4488, %v4492
        %v4505 = vmax.f32 %v4489, %v4493
        %v4506 = vmax.f32 %v4490, %v4494
        %v4507 = vmax.f32 %v4503, %v4495
        %v4508 = vmax.f32 %v4504, %v4496
        %v4509 = vmax.f32 %v4505, %v4497
        %v4510 = vmax.f32 %v4506, %v4498
        %v4511 = vmax.f32 %v4507, %v4499
        %v4512 = vmax.f32 %v4508, %v4500
        %v4513 = vmax.f32 %v4509, %v4501
        %v4514 = vmax.f32 %v4510, %v4502
        %v4515 = vmax.f32 %v4511, %v4512
        %v4516 = vmax.f32 %v4513, %v4514
        %v4517 = vmax.f32 %v4515, %v4516
        %v4518 = vrot.slane %v4517, 4
        %v4519 = vmax.f32 %v4517, %v4518
        %v4520 = vrot.slane %v4519, 2
        %v4521 = vmax.f32 %v4519, %v4520
        %v4522 = vrot.slane %v4521, 1
        %v4523 = vmax.f32 %v4521, %v4522
        %4524 = vset.pattern.permute.xlu0 28
        %4525 = vperm.xlu0 %4524, %v598
        %v4526 = vpop.permute.xlu0 %4525
        %4527 = vset.pattern.permute.xlu0 28
        %4528 = vperm.xlu0 %4527, %v599
        %v4529 = vpop.permute.xlu0 %4528
        %4530 = vset.pattern.permute.xlu0 28
        %4531 = vperm.xlu0 %4530, %v600
        %v4532 = vpop.permute.xlu0 %4531
        %4533 = vset.pattern.permute.xlu0 28
        %4534 = vperm.xlu0 %4533, %v601
        %v4535 = vpop.permute.xlu0 %4534
        %4536 = vset.pattern.permute.xlu0 28
        %4537 = vperm.xlu0 %4536, %v602
        %v4538 = vpop.permute.xlu0 %4537
        %4539 = vset.pattern.permute.xlu0 28
        %4540 = vperm.xlu0 %4539, %v603
        %v4541 = vpop.permute.xlu0 %4540
        %4542 = vset.pattern.permute.xlu0 28
        %4543 = vperm.xlu0 %4542, %v604
        %v4544 = vpop.permute.xlu0 %4543
        %4545 = vset.pattern.permute.xlu0 28
        %4546 = vperm.xlu0 %4545, %v605
        %v4547 = vpop.permute.xlu0 %4546
        %4548 = vset.pattern.permute.xlu0 28
        %4549 = vperm.xlu0 %4548, %v606
        %v4550 = vpop.permute.xlu0 %4549
        %4551 = vset.pattern.permute.xlu0 28
        %4552 = vperm.xlu0 %4551, %v607
        %v4553 = vpop.permute.xlu0 %4552
        %4554 = vset.pattern.permute.xlu0 28
        %4555 = vperm.xlu0 %4554, %v608
        %v4556 = vpop.permute.xlu0 %4555
        %4557 = vset.pattern.permute.xlu0 28
        %4558 = vperm.xlu0 %4557, %v609
        %v4559 = vpop.permute.xlu0 %4558
        %4560 = vset.pattern.permute.xlu0 28
        %4561 = vperm.xlu0 %4560, %v610
        %v4562 = vpop.permute.xlu0 %4561
        %4563 = vset.pattern.permute.xlu0 28
        %4564 = vperm.xlu0 %4563, %v611
        %v4565 = vpop.permute.xlu0 %4564
        %4566 = vset.pattern.permute.xlu0 28
        %4567 = vperm.xlu0 %4566, %v612
        %v4568 = vpop.permute.xlu0 %4567
        %4569 = vset.pattern.permute.xlu0 28
        %4570 = vperm.xlu0 %4569, %v613
        %v4571 = vpop.permute.xlu0 %4570
        %vm4572 = vcmp.eq.s32.totalorder %v4526, 1
        %vm4573 = vcmp.eq.s32.totalorder %v4529, 1
        %vm4574 = vcmp.eq.s32.totalorder %v4532, 1
        %vm4575 = vcmp.eq.s32.totalorder %v4535, 1
        %vm4576 = vcmp.eq.s32.totalorder %v4538, 1
        %vm4577 = vcmp.eq.s32.totalorder %v4541, 1
        %vm4578 = vcmp.eq.s32.totalorder %v4544, 1
        %vm4579 = vcmp.eq.s32.totalorder %v4547, 1
        %vm4580 = vcmp.eq.s32.totalorder %v4550, 1
        %vm4581 = vcmp.eq.s32.totalorder %v4553, 1
        %vm4582 = vcmp.eq.s32.totalorder %v4556, 1
        %vm4583 = vcmp.eq.s32.totalorder %v4559, 1
        %vm4584 = vcmp.eq.s32.totalorder %v4562, 1
        %vm4585 = vcmp.eq.s32.totalorder %v4565, 1
        %vm4586 = vcmp.eq.s32.totalorder %v4568, 1
        %vm4587 = vcmp.eq.s32.totalorder %v4571, 1
        %v4588 = vsel %vm4572, %v1634, -1e+30
        %v4589 = vsel %vm4573, %v1637, -1e+30
        %v4590 = vsel %vm4574, %v1642, -1e+30
        %v4591 = vsel %vm4575, %v1645, -1e+30
        %v4592 = vsel %vm4576, %v1650, -1e+30
        %v4593 = vsel %vm4577, %v1653, -1e+30
        %v4594 = vsel %vm4578, %v1658, -1e+30
        %v4595 = vsel %vm4579, %v1661, -1e+30
        %v4596 = vsel %vm4580, %v1666, -1e+30
        %v4597 = vsel %vm4581, %v1669, -1e+30
        %v4598 = vsel %vm4582, %v1674, -1e+30
        %v4599 = vsel %vm4583, %v1677, -1e+30
        %v4600 = vsel %vm4584, %v1682, -1e+30
        %v4601 = vsel %vm4585, %v1685, -1e+30
        %v4602 = vsel %vm4586, %v1690, -1e+30
        %v4603 = vsel %vm4587, %v1693, -1e+30
        %v4604 = vmax.f32 %v4588, %v4592
        %v4605 = vmax.f32 %v4589, %v4593
        %v4606 = vmax.f32 %v4590, %v4594
        %v4607 = vmax.f32 %v4591, %v4595
        %v4608 = vmax.f32 %v4604, %v4596
        %v4609 = vmax.f32 %v4605, %v4597
        %v4610 = vmax.f32 %v4606, %v4598
        %v4611 = vmax.f32 %v4607, %v4599
        %v4612 = vmax.f32 %v4608, %v4600
        %v4613 = vmax.f32 %v4609, %v4601
        %v4614 = vmax.f32 %v4610, %v4602
        %v4615 = vmax.f32 %v4611, %v4603
        %v4616 = vmax.f32 %v4612, %v4613
        %v4617 = vmax.f32 %v4614, %v4615
        %v4618 = vmax.f32 %v4616, %v4617
        %v4619 = vrot.slane %v4618, 4
        %v4620 = vmax.f32 %v4618, %v4619
        %v4621 = vrot.slane %v4620, 2
        %v4622 = vmax.f32 %v4620, %v4621
        %v4623 = vrot.slane %v4622, 1
        %v4624 = vmax.f32 %v4622, %v4623
        %4625 = vset.pattern.permute.xlu0 29
        %4626 = vperm.xlu0 %4625, %v598
        %v4627 = vpop.permute.xlu0 %4626
        %4628 = vset.pattern.permute.xlu0 29
        %4629 = vperm.xlu0 %4628, %v599
        %v4630 = vpop.permute.xlu0 %4629
        %4631 = vset.pattern.permute.xlu0 29
        %4632 = vperm.xlu0 %4631, %v600
        %v4633 = vpop.permute.xlu0 %4632
        %4634 = vset.pattern.permute.xlu0 29
        %4635 = vperm.xlu0 %4634, %v601
        %v4636 = vpop.permute.xlu0 %4635
        %4637 = vset.pattern.permute.xlu0 29
        %4638 = vperm.xlu0 %4637, %v602
        %v4639 = vpop.permute.xlu0 %4638
        %4640 = vset.pattern.permute.xlu0 29
        %4641 = vperm.xlu0 %4640, %v603
        %v4642 = vpop.permute.xlu0 %4641
        %4643 = vset.pattern.permute.xlu0 29
        %4644 = vperm.xlu0 %4643, %v604
        %v4645 = vpop.permute.xlu0 %4644
        %4646 = vset.pattern.permute.xlu0 29
        %4647 = vperm.xlu0 %4646, %v605
        %v4648 = vpop.permute.xlu0 %4647
        %4649 = vset.pattern.permute.xlu0 29
        %4650 = vperm.xlu0 %4649, %v606
        %v4651 = vpop.permute.xlu0 %4650
        %4652 = vset.pattern.permute.xlu0 29
        %4653 = vperm.xlu0 %4652, %v607
        %v4654 = vpop.permute.xlu0 %4653
        %4655 = vset.pattern.permute.xlu0 29
        %4656 = vperm.xlu0 %4655, %v608
        %v4657 = vpop.permute.xlu0 %4656
        %4658 = vset.pattern.permute.xlu0 29
        %4659 = vperm.xlu0 %4658, %v609
        %v4660 = vpop.permute.xlu0 %4659
        %4661 = vset.pattern.permute.xlu0 29
        %4662 = vperm.xlu0 %4661, %v610
        %v4663 = vpop.permute.xlu0 %4662
        %4664 = vset.pattern.permute.xlu0 29
        %4665 = vperm.xlu0 %4664, %v611
        %v4666 = vpop.permute.xlu0 %4665
        %4667 = vset.pattern.permute.xlu0 29
        %4668 = vperm.xlu0 %4667, %v612
        %v4669 = vpop.permute.xlu0 %4668
        %4670 = vset.pattern.permute.xlu0 29
        %4671 = vperm.xlu0 %4670, %v613
        %v4672 = vpop.permute.xlu0 %4671
        %vm4673 = vcmp.eq.s32.totalorder %v4627, 1
        %vm4674 = vcmp.eq.s32.totalorder %v4630, 1
        %vm4675 = vcmp.eq.s32.totalorder %v4633, 1
        %vm4676 = vcmp.eq.s32.totalorder %v4636, 1
        %vm4677 = vcmp.eq.s32.totalorder %v4639, 1
        %vm4678 = vcmp.eq.s32.totalorder %v4642, 1
        %vm4679 = vcmp.eq.s32.totalorder %v4645, 1
        %vm4680 = vcmp.eq.s32.totalorder %v4648, 1
        %vm4681 = vcmp.eq.s32.totalorder %v4651, 1
        %vm4682 = vcmp.eq.s32.totalorder %v4654, 1
        %vm4683 = vcmp.eq.s32.totalorder %v4657, 1
        %vm4684 = vcmp.eq.s32.totalorder %v4660, 1
        %vm4685 = vcmp.eq.s32.totalorder %v4663, 1
        %vm4686 = vcmp.eq.s32.totalorder %v4666, 1
        %vm4687 = vcmp.eq.s32.totalorder %v4669, 1
        %vm4688 = vcmp.eq.s32.totalorder %v4672, 1
        %v4689 = vsel %vm4673, %v1634, -1e+30
        %v4690 = vsel %vm4674, %v1637, -1e+30
        %v4691 = vsel %vm4675, %v1642, -1e+30
        %v4692 = vsel %vm4676, %v1645, -1e+30
        %v4693 = vsel %vm4677, %v1650, -1e+30
        %v4694 = vsel %vm4678, %v1653, -1e+30
        %v4695 = vsel %vm4679, %v1658, -1e+30
        %v4696 = vsel %vm4680, %v1661, -1e+30
        %v4697 = vsel %vm4681, %v1666, -1e+30
        %v4698 = vsel %vm4682, %v1669, -1e+30
        %v4699 = vsel %vm4683, %v1674, -1e+30
        %v4700 = vsel %vm4684, %v1677, -1e+30
        %v4701 = vsel %vm4685, %v1682, -1e+30
        %v4702 = vsel %vm4686, %v1685, -1e+30
        %v4703 = vsel %vm4687, %v1690, -1e+30
        %v4704 = vsel %vm4688, %v1693, -1e+30
        %v4705 = vmax.f32 %v4689, %v4693
        %v4706 = vmax.f32 %v4690, %v4694
        %v4707 = vmax.f32 %v4691, %v4695
        %v4708 = vmax.f32 %v4692, %v4696
        %v4709 = vmax.f32 %v4705, %v4697
        %v4710 = vmax.f32 %v4706, %v4698
        %v4711 = vmax.f32 %v4707, %v4699
        %v4712 = vmax.f32 %v4708, %v4700
        %v4713 = vmax.f32 %v4709, %v4701
        %v4714 = vmax.f32 %v4710, %v4702
        %v4715 = vmax.f32 %v4711, %v4703
        %v4716 = vmax.f32 %v4712, %v4704
        %v4717 = vmax.f32 %v4713, %v4714
        %v4718 = vmax.f32 %v4715, %v4716
        %v4719 = vmax.f32 %v4717, %v4718
        %v4720 = vrot.slane %v4719, 4
        %v4721 = vmax.f32 %v4719, %v4720
        %v4722 = vrot.slane %v4721, 2
        %v4723 = vmax.f32 %v4721, %v4722
        %v4724 = vrot.slane %v4723, 1
        %v4725 = vmax.f32 %v4723, %v4724
        %4726 = vset.pattern.permute.xlu0 30
        %4727 = vperm.xlu0 %4726, %v598
        %v4728 = vpop.permute.xlu0 %4727
        %4729 = vset.pattern.permute.xlu0 30
        %4730 = vperm.xlu0 %4729, %v599
        %v4731 = vpop.permute.xlu0 %4730
        %4732 = vset.pattern.permute.xlu0 30
        %4733 = vperm.xlu0 %4732, %v600
        %v4734 = vpop.permute.xlu0 %4733
        %4735 = vset.pattern.permute.xlu0 30
        %4736 = vperm.xlu0 %4735, %v601
        %v4737 = vpop.permute.xlu0 %4736
        %4738 = vset.pattern.permute.xlu0 30
        %4739 = vperm.xlu0 %4738, %v602
        %v4740 = vpop.permute.xlu0 %4739
        %4741 = vset.pattern.permute.xlu0 30
        %4742 = vperm.xlu0 %4741, %v603
        %v4743 = vpop.permute.xlu0 %4742
        %4744 = vset.pattern.permute.xlu0 30
        %4745 = vperm.xlu0 %4744, %v604
        %v4746 = vpop.permute.xlu0 %4745
        %4747 = vset.pattern.permute.xlu0 30
        %4748 = vperm.xlu0 %4747, %v605
        %v4749 = vpop.permute.xlu0 %4748
        %4750 = vset.pattern.permute.xlu0 30
        %4751 = vperm.xlu0 %4750, %v606
        %v4752 = vpop.permute.xlu0 %4751
        %4753 = vset.pattern.permute.xlu0 30
        %4754 = vperm.xlu0 %4753, %v607
        %v4755 = vpop.permute.xlu0 %4754
        %4756 = vset.pattern.permute.xlu0 30
        %4757 = vperm.xlu0 %4756, %v608
        %v4758 = vpop.permute.xlu0 %4757
        %4759 = vset.pattern.permute.xlu0 30
        %4760 = vperm.xlu0 %4759, %v609
        %v4761 = vpop.permute.xlu0 %4760
        %4762 = vset.pattern.permute.xlu0 30
        %4763 = vperm.xlu0 %4762, %v610
        %v4764 = vpop.permute.xlu0 %4763
        %4765 = vset.pattern.permute.xlu0 30
        %4766 = vperm.xlu0 %4765, %v611
        %v4767 = vpop.permute.xlu0 %4766
        %4768 = vset.pattern.permute.xlu0 30
        %4769 = vperm.xlu0 %4768, %v612
        %v4770 = vpop.permute.xlu0 %4769
        %4771 = vset.pattern.permute.xlu0 30
        %4772 = vperm.xlu0 %4771, %v613
        %v4773 = vpop.permute.xlu0 %4772
        %vm4774 = vcmp.eq.s32.totalorder %v4728, 1
        %vm4775 = vcmp.eq.s32.totalorder %v4731, 1
        %vm4776 = vcmp.eq.s32.totalorder %v4734, 1
        %vm4777 = vcmp.eq.s32.totalorder %v4737, 1
        %vm4778 = vcmp.eq.s32.totalorder %v4740, 1
        %vm4779 = vcmp.eq.s32.totalorder %v4743, 1
        %vm4780 = vcmp.eq.s32.totalorder %v4746, 1
        %vm4781 = vcmp.eq.s32.totalorder %v4749, 1
        %vm4782 = vcmp.eq.s32.totalorder %v4752, 1
        %vm4783 = vcmp.eq.s32.totalorder %v4755, 1
        %vm4784 = vcmp.eq.s32.totalorder %v4758, 1
        %vm4785 = vcmp.eq.s32.totalorder %v4761, 1
        %vm4786 = vcmp.eq.s32.totalorder %v4764, 1
        %vm4787 = vcmp.eq.s32.totalorder %v4767, 1
        %vm4788 = vcmp.eq.s32.totalorder %v4770, 1
        %vm4789 = vcmp.eq.s32.totalorder %v4773, 1
        %v4790 = vsel %vm4774, %v1634, -1e+30
        %v4791 = vsel %vm4775, %v1637, -1e+30
        %v4792 = vsel %vm4776, %v1642, -1e+30
        %v4793 = vsel %vm4777, %v1645, -1e+30
        %v4794 = vsel %vm4778, %v1650, -1e+30
        %v4795 = vsel %vm4779, %v1653, -1e+30
        %v4796 = vsel %vm4780, %v1658, -1e+30
        %v4797 = vsel %vm4781, %v1661, -1e+30
        %v4798 = vsel %vm4782, %v1666, -1e+30
        %v4799 = vsel %vm4783, %v1669, -1e+30
        %v4800 = vsel %vm4784, %v1674, -1e+30
        %v4801 = vsel %vm4785, %v1677, -1e+30
        %v4802 = vsel %vm4786, %v1682, -1e+30
        %v4803 = vsel %vm4787, %v1685, -1e+30
        %v4804 = vsel %vm4788, %v1690, -1e+30
        %v4805 = vsel %vm4789, %v1693, -1e+30
        %v4806 = vmax.f32 %v4790, %v4794
        %v4807 = vmax.f32 %v4791, %v4795
        %v4808 = vmax.f32 %v4792, %v4796
        %v4809 = vmax.f32 %v4793, %v4797
        %v4810 = vmax.f32 %v4806, %v4798
        %v4811 = vmax.f32 %v4807, %v4799
        %v4812 = vmax.f32 %v4808, %v4800
        %v4813 = vmax.f32 %v4809, %v4801
        %v4814 = vmax.f32 %v4810, %v4802
        %v4815 = vmax.f32 %v4811, %v4803
        %v4816 = vmax.f32 %v4812, %v4804
        %v4817 = vmax.f32 %v4813, %v4805
        %v4818 = vmax.f32 %v4814, %v4815
        %v4819 = vmax.f32 %v4816, %v4817
        %v4820 = vmax.f32 %v4818, %v4819
        %v4821 = vrot.slane %v4820, 4
        %v4822 = vmax.f32 %v4820, %v4821
        %v4823 = vrot.slane %v4822, 2
        %v4824 = vmax.f32 %v4822, %v4823
        %v4825 = vrot.slane %v4824, 1
        %v4826 = vmax.f32 %v4824, %v4825
        %4827 = vset.pattern.permute.xlu0 31
        %4828 = vperm.xlu0 %4827, %v598
        %v4829 = vpop.permute.xlu0 %4828
        %4830 = vset.pattern.permute.xlu0 31
        %4831 = vperm.xlu0 %4830, %v599
        %v4832 = vpop.permute.xlu0 %4831
        %4833 = vset.pattern.permute.xlu0 31
        %4834 = vperm.xlu0 %4833, %v600
        %v4835 = vpop.permute.xlu0 %4834
        %4836 = vset.pattern.permute.xlu0 31
        %4837 = vperm.xlu0 %4836, %v601
        %v4838 = vpop.permute.xlu0 %4837
        %4839 = vset.pattern.permute.xlu0 31
        %4840 = vperm.xlu0 %4839, %v602
        %v4841 = vpop.permute.xlu0 %4840
        %4842 = vset.pattern.permute.xlu0 31
        %4843 = vperm.xlu0 %4842, %v603
        %v4844 = vpop.permute.xlu0 %4843
        %4845 = vset.pattern.permute.xlu0 31
        %4846 = vperm.xlu0 %4845, %v604
        %v4847 = vpop.permute.xlu0 %4846
        %4848 = vset.pattern.permute.xlu0 31
        %4849 = vperm.xlu0 %4848, %v605
        %v4850 = vpop.permute.xlu0 %4849
        %4851 = vset.pattern.permute.xlu0 31
        %4852 = vperm.xlu0 %4851, %v606
        %v4853 = vpop.permute.xlu0 %4852
        %4854 = vset.pattern.permute.xlu0 31
        %4855 = vperm.xlu0 %4854, %v607
        %v4856 = vpop.permute.xlu0 %4855
        %4857 = vset.pattern.permute.xlu0 31
        %4858 = vperm.xlu0 %4857, %v608
        %v4859 = vpop.permute.xlu0 %4858
        %4860 = vset.pattern.permute.xlu0 31
        %4861 = vperm.xlu0 %4860, %v609
        %v4862 = vpop.permute.xlu0 %4861
        %4863 = vset.pattern.permute.xlu0 31
        %4864 = vperm.xlu0 %4863, %v610
        %v4865 = vpop.permute.xlu0 %4864
        %4866 = vset.pattern.permute.xlu0 31
        %4867 = vperm.xlu0 %4866, %v611
        %v4868 = vpop.permute.xlu0 %4867
        %4869 = vset.pattern.permute.xlu0 31
        %4870 = vperm.xlu0 %4869, %v612
        %v4871 = vpop.permute.xlu0 %4870
        %4872 = vset.pattern.permute.xlu0 31
        %4873 = vperm.xlu0 %4872, %v613
        %v4874 = vpop.permute.xlu0 %4873
        %vm4875 = vcmp.eq.s32.totalorder %v4829, 1
        %vm4876 = vcmp.eq.s32.totalorder %v4832, 1
        %vm4877 = vcmp.eq.s32.totalorder %v4835, 1
        %vm4878 = vcmp.eq.s32.totalorder %v4838, 1
        %vm4879 = vcmp.eq.s32.totalorder %v4841, 1
        %vm4880 = vcmp.eq.s32.totalorder %v4844, 1
        %vm4881 = vcmp.eq.s32.totalorder %v4847, 1
        %vm4882 = vcmp.eq.s32.totalorder %v4850, 1
        %vm4883 = vcmp.eq.s32.totalorder %v4853, 1
        %vm4884 = vcmp.eq.s32.totalorder %v4856, 1
        %vm4885 = vcmp.eq.s32.totalorder %v4859, 1
        %vm4886 = vcmp.eq.s32.totalorder %v4862, 1
        %vm4887 = vcmp.eq.s32.totalorder %v4865, 1
        %vm4888 = vcmp.eq.s32.totalorder %v4868, 1
        %vm4889 = vcmp.eq.s32.totalorder %v4871, 1
        %vm4890 = vcmp.eq.s32.totalorder %v4874, 1
        %v4891 = vsel %vm4875, %v1634, -1e+30
        %v4892 = vsel %vm4876, %v1637, -1e+30
        %v4893 = vsel %vm4877, %v1642, -1e+30
        %v4894 = vsel %vm4878, %v1645, -1e+30
        %v4895 = vsel %vm4879, %v1650, -1e+30
        %v4896 = vsel %vm4880, %v1653, -1e+30
        %v4897 = vsel %vm4881, %v1658, -1e+30
        %v4898 = vsel %vm4882, %v1661, -1e+30
        %v4899 = vsel %vm4883, %v1666, -1e+30
        %v4900 = vsel %vm4884, %v1669, -1e+30
        %v4901 = vsel %vm4885, %v1674, -1e+30
        %v4902 = vsel %vm4886, %v1677, -1e+30
        %v4903 = vsel %vm4887, %v1682, -1e+30
        %v4904 = vsel %vm4888, %v1685, -1e+30
        %v4905 = vsel %vm4889, %v1690, -1e+30
        %v4906 = vsel %vm4890, %v1693, -1e+30
        %v4907 = vmax.f32 %v4891, %v4895
        %v4908 = vmax.f32 %v4892, %v4896
        %v4909 = vmax.f32 %v4893, %v4897
        %v4910 = vmax.f32 %v4894, %v4898
        %v4911 = vmax.f32 %v4907, %v4899
        %v4912 = vmax.f32 %v4908, %v4900
        %v4913 = vmax.f32 %v4909, %v4901
        %v4914 = vmax.f32 %v4910, %v4902
        %v4915 = vmax.f32 %v4911, %v4903
        %v4916 = vmax.f32 %v4912, %v4904
        %v4917 = vmax.f32 %v4913, %v4905
        %v4918 = vmax.f32 %v4914, %v4906
        %v4919 = vmax.f32 %v4915, %v4916
        %v4920 = vmax.f32 %v4917, %v4918
        %v4921 = vmax.f32 %v4919, %v4920
        %v4922 = vrot.slane %v4921, 4
        %v4923 = vmax.f32 %v4921, %v4922
        %v4924 = vrot.slane %v4923, 2
        %v4925 = vmax.f32 %v4923, %v4924
        %v4926 = vrot.slane %v4925, 1
        %v4927 = vmax.f32 %v4925, %v4926
        %vm4928 = vcmask 1040384
        %v4929 = vsel %vm4928, %v1796, %v1897
        %vm4930 = vcmask 1041408
        %v4931 = vsel %vm4930, %v4929, %v1998
        %vm4932 = vcmask 1042432
        %v4933 = vsel %vm4932, %v4931, %v2099
        %vm4934 = vcmask 1043456
        %v4935 = vsel %vm4934, %v4933, %v2200
        %vm4936 = vcmask 1044480
        %v4937 = vsel %vm4936, %v4935, %v2301
        %vm4938 = vcmask 1045504
        %v4939 = vsel %vm4938, %v4937, %v2402
        %vm4940 = vcmask 1046528
        %v4941 = vsel %vm4940, %v4939, %v2503
        %v4942 = vsel %vm4928, %v2604, %v2705
        %v4943 = vsel %vm4930, %v4942, %v2806
        %v4944 = vsel %vm4932, %v4943, %v2907
        %v4945 = vsel %vm4934, %v4944, %v3008
        %v4946 = vsel %vm4936, %v4945, %v3109
        %v4947 = vsel %vm4938, %v4946, %v3210
        %v4948 = vsel %vm4940, %v4947, %v3311
        %v4949 = vsel %vm4928, %v3412, %v3513
        %v4950 = vsel %vm4930, %v4949, %v3614
        %v4951 = vsel %vm4932, %v4950, %v3715
        %v4952 = vsel %vm4934, %v4951, %v3816
        %v4953 = vsel %vm4936, %v4952, %v3917
        %v4954 = vsel %vm4938, %v4953, %v4018
        %v4955 = vsel %vm4940, %v4954, %v4119
        %v4956 = vsel %vm4928, %v4220, %v4321
        %v4957 = vsel %vm4930, %v4956, %v4422
        %v4958 = vsel %vm4932, %v4957, %v4523
        %v4959 = vsel %vm4934, %v4958, %v4624
        %v4960 = vsel %vm4936, %v4959, %v4725
        %v4961 = vsel %vm4938, %v4960, %v4826
        %v4962 = vsel %vm4940, %v4961, %v4927
        %v4963 = vld [vmem:[#allocation2] sm:$0xff]
        %v4964 = vld [vmem:[#allocation2 + $0x8] sm:$0xff]
        %v4965 = vld [vmem:[#allocation2 + $0x10] sm:$0xff]
        %v4966 = vld [vmem:[#allocation2 + $0x18] sm:$0xff]
        %v4967 = vmax.f32 %v4963, %v4941
        %v4968 = vmax.f32 %v4964, %v4948
        %v4969 = vmax.f32 %v4965, %v4955
        %v4970 = vmax.f32 %v4966, %v4962
        %4971 = vst [vmem:[#allocation2] sm:$0xff] %v4967
        %4972 = vst [vmem:[#allocation2 + $0x8] sm:$0xff] %v4968
        %4973 = vst [vmem:[#allocation2 + $0x10] sm:$0xff] %v4969
        %4974 = vst [vmem:[#allocation2 + $0x18] sm:$0xff] %v4970
      $region72: #{mpgnn_forward.2} parent=63 // pred_fallthru
        _
      // Predicated region
      $region73: #{mpgnn_forward.2} parent=63 // pred_check
        %p4975 = pneg %p493
      $region74: #{mpgnn_forward.2} parent=63 // pred_check_branch
        %4977 = sbr.rel (%p4975) target = $region76
      $region75: #{mpgnn_forward.2} parent=63 // pred_region
        %v4978 = vld [vmem:[#allocation2] sm:$0xff]
        %v4979 = vld [vmem:[#allocation2 + $0x8] sm:$0xff]
        %v4980 = vld [vmem:[#allocation2 + $0x10] sm:$0xff]
        %v4981 = vld [vmem:[#allocation2 + $0x18] sm:$0xff]
        %v4982 = vld [vmem:[%s484] sm:$0xff]
        %v4983 = vld [vmem:[%s484 + $0x8] sm:$0xff]
        %v4984 = vld [vmem:[%s484 + $0x10] sm:$0xff]
        %v4985 = vld [vmem:[%s484 + $0x18] sm:$0xff]
        %vm4986 = vcmp.gt.f32.partialorder %v4982, 0.0
        %vm4987 = vcmp.gt.f32.partialorder %v4983, 0.0
        %vm4988 = vcmp.gt.f32.partialorder %v4984, 0.0
        %vm4989 = vcmp.gt.f32.partialorder %v4985, 0.0
        %v4990 = vsel %vm4986, 1, 0
        %v4991 = vsel %vm4987, 1, 0
        %v4992 = vsel %vm4988, 1, 0
        %v4993 = vsel %vm4989, 1, 0
        %4994 = vset.pattern.permute.xlu0 0
        %4995 = vperm.xlu0 %4994, %v4990
        %v4996 = vpop.permute.xlu0 %4995
        %4997 = vset.pattern.permute.xlu0 0
        %4998 = vperm.xlu0 %4997, %v4991
        %v4999 = vpop.permute.xlu0 %4998
        %5000 = vset.pattern.permute.xlu0 0
        %5001 = vperm.xlu0 %5000, %v4992
        %v5002 = vpop.permute.xlu0 %5001
        %5003 = vset.pattern.permute.xlu0 0
        %5004 = vperm.xlu0 %5003, %v4993
        %v5005 = vpop.permute.xlu0 %5004
        %vm5006 = vcmp.eq.s32.totalorder %v4996, 1
        %vm5007 = vcmp.eq.s32.totalorder %v4999, 1
        %vm5008 = vcmp.eq.s32.totalorder %v5002, 1
        %vm5009 = vcmp.eq.s32.totalorder %v5005, 1
        %v5010 = vsel %vm5006, %v4978, 0.0
        %v5011 = vsel %vm5007, %v4979, 0.0
        %v5012 = vsel %vm5008, %v4980, 0.0
        %v5013 = vsel %vm5009, %v4981, 0.0
        %v5014 = vld [vmem:[%s12] sm:$0x1]
        %v5015 = vadd.f32 %v5014, 1e-05
        %v5016 = vrsqrt.pop %v5015
        %v5017 = vld [vmem:[%s11] sm:$0x1]
        %v5019 = vlaneseq
        %v5020 = vshrl.u32 %v5019, 7
        %v5021 = vsub.s32 0, %v5020
        %v5022 = vrot.slane %v5017, %v5021
        %v5024 = vsub.f32 %v5010, %v5022
        %v5025 = vsub.f32 %v5011, %v5022
        %v5026 = vsub.f32 %v5012, %v5022
        %v5027 = vsub.f32 %v5013, %v5022
        %v5029 = vlaneseq
        %v5030 = vshrl.u32 %v5029, 7
        %v5031 = vsub.s32 0, %v5030
        %v5032 = vrot.slane %v5016, %v5031
        %v5034 = vmul.f32 %v5024, %v5032
        %v5035 = vmul.f32 %v5025, %v5032
        %v5036 = vmul.f32 %v5026, %v5032
        %v5037 = vmul.f32 %v5027, %v5032
        %v5038 = vld [vmem:[%s9] sm:$0x1]
        %v5040 = vlaneseq
        %v5041 = vshrl.u32 %v5040, 7
        %v5042 = vsub.s32 0, %v5041
        %v5043 = vrot.slane %v5038, %v5042
        %v5045 = vmul.f32 %v5034, %v5043
        %v5046 = vmul.f32 %v5035, %v5043
        %v5047 = vmul.f32 %v5036, %v5043
        %v5048 = vmul.f32 %v5037, %v5043
        %v5049 = vld [vmem:[%s10] sm:$0x1]
        %v5051 = vlaneseq
        %v5052 = vshrl.u32 %v5051, 7
        %v5053 = vsub.s32 0, %v5052
        %v5054 = vrot.slane %v5049, %v5053
        %v5056 = vadd.f32 %v5045, %v5054
        %v5057 = vadd.f32 %v5046, %v5054
        %v5058 = vadd.f32 %v5047, %v5054
        %v5059 = vadd.f32 %v5048, %v5054
        %vm5060 = vcmp.gt.f32.partialorder %v5056, 0.0
        %vm5061 = vcmp.gt.f32.partialorder %v5057, 0.0
        %vm5062 = vcmp.gt.f32.partialorder %v5058, 0.0
        %vm5063 = vcmp.gt.f32.partialorder %v5059, 0.0
        %v5064 = vmul.f32 %v5056, 0.01
        %v5065 = vmul.f32 %v5057, 0.01
        %v5066 = vmul.f32 %v5058, 0.01
        %v5067 = vmul.f32 %v5059, 0.01
        %v5068 = vsel %vm5060, %v5056, %v5064
        %v5069 = vsel %vm5061, %v5057, %v5065
        %v5070 = vsel %vm5062, %v5058, %v5066
        %v5071 = vsel %vm5063, %v5059, %v5067
        %5072 = vst [vmem:[%s490] sm:$0xff] %v5068
        %5073 = vst [vmem:[%s490 + $0x8] sm:$0xff] %v5069
        %5074 = vst [vmem:[%s490 + $0x10] sm:$0xff] %v5070
        %5075 = vst [vmem:[%s490 + $0x18] sm:$0xff] %v5071
      $region76: #{mpgnn_forward.2} parent=63 // pred_fallthru
        _
      %s5076 = smul.u32 4, %s38
      %p5077 = scmp.lt.s32.totalorder %s5076, 7
      %s5078 = scalar_select %p5077, %s5076, 7
      %s5079 = smul.addr %s5078, 8
      %s5080 = scalar_lea.vmem %s13, %s5079
      // Predicated region
      $region77: #{mpgnn_forward.2} parent=63 // pred_check
        %p5081 = pneg %p321
      $region78: #{mpgnn_forward.2} parent=63 // pred_check_branch
        %5083 = sbr.rel (%p5081) target = $region80
      $region79: #{mpgnn_forward.2} parent=63 // pred_region
        %s5084 = smul.u32 4, %s38
      $region80: #{mpgnn_forward.2} parent=63 // pred_fallthru
        _
    $region64: #{mpgnn_forward.2} parent=5 // pred_fallthru
      _
    %p5085 = scmp.le.s32.totalorder 2, %s29
    // Predicated region
    $region81: #{mpgnn_forward.2} parent=5 // pred_check
      %p5086 = pneg %p5085
    $region82: #{mpgnn_forward.2} parent=5 // pred_check_branch
      %5088 = sbr.rel (%p5086) target = $region84
    $region83: #{mpgnn_forward.2} parent=5 // pred_region
      %s5089 = ssub.s32 %s29, 2
      // Predicated region
      $region85: #{mpgnn_forward.2} parent=83 // pred_check
        %p5090 = pneg %p327
      $region86: #{mpgnn_forward.2} parent=83 // pred_check_branch
        %5092 = sbr.rel (%p5090) target = $region88
      $region87: #{mpgnn_forward.2} parent=83 // pred_region
        %s5093 = smul.u32 4, %s40
        %p5094 = scmp.lt.s32.totalorder %s5093, 7
        %s5095 = scalar_select %p5094, %s5093, 7
        %s5096 = smul.addr %s5095, 8
        %s5097 = scalar_lea.vmem %s13, %s5096
      $region88: #{mpgnn_forward.2} parent=83 // pred_fallthru
        _
    $region84: #{mpgnn_forward.2} parent=5 // pred_fallthru
      _
  $region6: #{mpgnn_forward.2} parent=0 // loop_footer
    %s33 = sadd.s32 1, %s29
  $region7: #{mpgnn_forward.2} parent=0 // loop_footer_branch
    %28 = sbr.rel target = $region3
  $region8: #{mpgnn_forward.2} parent=0 // loop_exit
    _

</llo_original>
